<compile_context>
chip_gen: v7x
topology: tpu7x:2x2x1
jax: 0.10.0
libtpu: 0.0.40
codegen_flags: <defaults>
</compile_context>

<pallas_src>
import functools

import numpy as np
import jax
import jax.numpy as jnp
from jax.experimental import pallas as pl
from jax.experimental.pallas import tpu as pltpu


# ------------------------------ Pallas kernel ------------------------------ #
def fused_head_kernel(x_ref, wh_ref, bh_ref, wl_ref, bl_ref, mask_ref,
                      o_ref, act_ref, *, W, C, n_hidden, L, PAD):
    """Whole classification head for one batch element.

    x_ref:    (C, Lext)            zero-extended padded-flat input, bf16
    wh_ref:   (n_hidden, 9, C, C)  hidden-layer per-tap weights, BN folded, bf16
    bh_ref:   (n_hidden, C, 1)     hidden-layer biases, f32
    wl_ref:   (9, ACls, C)         last-layer per-tap weights, bf16
    bl_ref:   (ACls, 1)            last-layer bias incl. focal prior, f32
    mask_ref: (1, L)               1.0 on interior positions, 0.0 elsewhere
    o_ref:    (ACls, L)            last-layer logits, padded-flat layout, f32
    act_ref:  (C, Lext) VMEM bf16  resident activation (padded-flat + lane halo)
    """
    Wp = W + 2

    # Scratch is uninitialized persistent VMEM: zero the lane halo every grid
    # step (taps read into it; garbage there could inject NaN/Inf through the
    # masked pad ring into the interior taps of subsequent layers).
    act_ref[:, :PAD] = jnp.zeros((C, PAD), act_ref.dtype)
    act_ref[:, PAD + L:] = jnp.zeros((C, PAD), act_ref.dtype)

    # Hoisted (1, L) -> (C, L) interior-mask broadcast, reused by every layer.
    mask_b = jnp.broadcast_to(mask_ref[...], (C, L))

    def conv3x3(src_ref, w_of_tap):
        """3x3 SAME conv as 9 tap-wise MXU matmuls accumulated in f32."""
        acc = None
        for dy in range(3):
            for dx in range(3):
                s = PAD + (dy - 1) * Wp + (dx - 1)        # static lane offset
                tap = src_ref[:, s:s + L]                 # (Cin, L) bf16
                part = jax.lax.dot_general(
                    w_of_tap(dy * 3 + dx), tap,
                    dimension_numbers=(((1,), (0,)), ((), ())),
                    preferred_element_type=jnp.float32)
                acc = part if acc is None else acc + part
        return acc                                        # (Cout, L) f32

    # Hidden ConvBN + ReLU layers. Layer 0 reads its taps straight from the
    # input block (no staging copy); afterwards the activation never leaves
    # VMEM.  The interior mask realizes SAME zero-padding for the next layer.
    src = x_ref
    for l in range(n_hidden):
        y = conv3x3(src, lambda t, l=l: wh_ref[l, t])
        y = jnp.maximum(y + bh_ref[l], 0.0) * mask_b          # f32 elementwise
        act_ref[:, PAD:PAD + L] = y.astype(act_ref.dtype)     # single bf16 cast
        src = act_ref

    # Final ConvBN (activation=False; focal prior folded into the bias).
    y = conv3x3(act_ref, lambda t: wl_ref[t])
    o_ref[...] = (y + bl_ref[...]).astype(o_ref.dtype)


# ------------------------------- wrapper ----------------------------------- #
def classification_head(x_nchw, wh, bh, wl, bl, *, anchors, num_classes):
    """Forward pass matching the PyTorch module. x_nchw: (B, C, H, W)."""
    B, C, H, W = x_nchw.shape
    Hp, Wp = H + 2, W + 2
    L_real = Hp * Wp
    LANE = 128
    L = ((L_real + LANE - 1) // LANE) * LANE   # lane-padded flat spatial length
    PAD = LANE                                 # 128-aligned lane halo (>= Wp+1)
    assert PAD >= Wp + 1, "halo must cover one padded row + 1"
    Lext = PAD + L + PAD
    ACls = anchors * num_classes
    n_hidden = wh.shape[0]

    # One-time input prep (tiny): spatial zero pad, flatten HxW, pad to the
    # kernel's 128-aligned padded-flat layout, cast once to bf16 (MXU input).
    x_pad = jnp.pad(x_nchw, ((0, 0), (0, 0), (1, 1), (1, 1)))
    x_ext = jnp.pad(x_pad.reshape(B, C, L_real),
                    ((0, 0), (0, 0), (PAD, Lext - PAD - L_real))
                    ).astype(jnp.bfloat16)

    # Interior mask (compile-time constant) in padded-flat coordinates; zero
    # on the pad ring and on the L_real..L lane tail.
    rr, cc = np.meshgrid(np.arange(Hp), np.arange(Wp), indexing="ij")
    interior = ((rr >= 1) & (rr <= H) & (cc >= 1) & (cc <= W)).reshape(-1)
    mask_np = np.zeros((1, L), np.float32)
    mask_np[0, :L_real] = interior.astype(np.float32)
    mask = jnp.asarray(mask_np)

    kernel = functools.partial(fused_head_kernel, W=W, C=C,
                               n_hidden=n_hidden, L=L, PAD=PAD)

    # TODO(synk): at production FPN sizes (C~256, H,W>=64) add a spatial grid
    # axis (row tiles with a 1-row halo), set vmem_limit_bytes to the tile
    # footprint, single-buffer the grid-invariant weight operands, and
    # optionally use fp8 weights on v7x -- required to fit v7x's 64 MiB VMEM
    # and keep both TensorCores busy when B is 1 or odd.
    out_flat = pl.pallas_call(
        kernel,
        out_shape=jax.ShapeDtypeStruct((B, ACls, L), jnp.float32),
        grid=(B,),
        in_specs=[
            pl.BlockSpec((None, C, Lext), lambda b: (b, 0, 0)),
            pl.BlockSpec((n_hidden, 9, C, C), lambda b: (0, 0, 0, 0)),
            pl.BlockSpec((n_hidden, C, 1), lambda b: (0, 0, 0)),
            pl.BlockSpec((9, ACls, C), lambda b: (0, 0, 0)),
            pl.BlockSpec((ACls, 1), lambda b: (0, 0)),
            pl.BlockSpec((1, L), lambda b: (0, 0)),
        ],
        out_specs=pl.BlockSpec((None, ACls, L), lambda b: (b, 0, 0)),
        scratch_shapes=[pltpu.VMEM((C, Lext), jnp.bfloat16)],
        compiler_params=pltpu.CompilerParams(
            dimension_semantics=("parallel",)),
    )(x_ext, wh, bh, wl, bl, mask)

    # Slice the valid HxW window out of the padded-flat logits, then reproduce
    # the PyTorch view(B,A,Cls,H,W) -> permute(0,1,3,4,2) -> view(B,-1,Cls).
    # TODO(synk): for large num_classes, emit the last layer per-anchor with
    # classes on the lane axis to fuse this transpose into the kernel.
    y = out_flat[:, :, :L_real].reshape(B, ACls, Hp, Wp)[:, :, 1:H + 1, 1:W + 1]
    y = y.reshape(B, anchors, num_classes, H, W)
    y = jnp.transpose(y, (0, 1, 3, 4, 2))                      # (B,A,H,W,Cls)
    return y.reshape(B, anchors * H * W, num_classes)


# --------------------------- parameter creation ----------------------------- #
def make_convbn_params(key, cin, cout, *, pi=None):
    """Deterministic synthetic Conv2d(3x3, no bias) + BatchNorm(eval) params."""
    kw, kg, kb, km, kv = jax.random.split(key, 5)
    w = 0.05 * jax.random.normal(kw, (3, 3, cin, cout), jnp.float32)   # HWIO
    gamma = 1.0 + 0.1 * jax.random.normal(kg, (cout,), jnp.float32)
    beta = 0.1 * jax.random.normal(kb, (cout,), jnp.float32)
    mean = 0.1 * jax.random.normal(km, (cout,), jnp.float32)
    var = 1.0 + 0.1 * jax.random.uniform(kv, (cout,), jnp.float32)
    eps = 1e-5
    scale = gamma / jnp.sqrt(var + eps)
    bias = beta - mean * scale
    if pi is not None:
        bias = bias - jnp.log((1.0 - pi) / pi)   # focal-loss prior on the logits
    return w, scale, bias


def fold_params_for_kernel(raw_params):
    """Fold BN scale into conv weights; lay weights out per-tap: (9, Cout, Cin)."""
    hidden, last = raw_params[:-1], raw_params[-1]

    def to_taps(w, scale):
        cin, cout = w.shape[2], w.shape[3]
        w_s = w * scale[None, None, None, :]                  # (3,3,Cin,Cout)
        # -> (9, Cout, Cin); tap index t = dy*3 + dx matches the kernel loop.
        return w_s.transpose(0, 1, 3, 2).reshape(9, cout, cin)

    wh = jnp.stack([to_taps(w, s) for (w, s, _) in hidden], 0).astype(jnp.bfloat16)
    bh = jnp.stack([b for (_, _, b) in hidden], 0)[:, :, None]        # (n, C, 1)
    wl = to_taps(last[0], last[1]).astype(jnp.bfloat16)               # (9, ACls, C)
    bl = last[2][:, None]                                             # (ACls, 1)
    return wh, bh, wl, bl


# ------------------------------ XLA reference ------------------------------- #
def reference_head(x, raw_params, *, anchors, num_classes):
    y = x
    n = len(raw_params)
    for i, (w, scale, bias) in enumerate(raw_params):
        y = jax.lax.conv_general_dilated(
            y, w, window_strides=(1, 1), padding="SAME",
            dimension_numbers=("NCHW", "HWIO", "NCHW"),
            precision=jax.lax.Precision.HIGHEST)
        y = y * scale[None, :, None, None] + bias[None, :, None, None]
        if i < n - 1:
            y = jnp.maximum(y, 0.0)
    B, _, H, W = y.shape
    y = y.reshape(B, anchors, num_classes, H, W)
    y = jnp.transpose(y, (0, 1, 3, 4, 2))
    return y.reshape(B, anchors * H * W, num_classes)


if __name__ == "__main__":
    B, C, H, W = 2, 8, 16, 16
    ANCHORS, NUM_CLASSES = 3, 4

    root = jax.random.PRNGKey(0)
    k_in, *k_layers = jax.random.split(root, 7)

    x = jax.random.normal(k_in, (B, C, H, W), jnp.float32)

    raw_params = [make_convbn_params(k_layers[i], C, C) for i in range(4)]
    raw_params.append(
        make_convbn_params(k_layers[4], C, ANCHORS * NUM_CLASSES, pi=0.01))

    wh, bh, wl, bl = fold_params_for_kernel(raw_params)

    head = jax.jit(functools.partial(classification_head,
                                     anchors=ANCHORS, num_classes=NUM_CLASSES))
    out = jax.block_until_ready(head(x, wh, bh, wl, bl))

    assert out.shape == (B, ANCHORS * H * W, NUM_CLASSES), out.shape
    assert out.dtype == jnp.float32

    # Cross-check against a pure-XLA f32 reference; the kernel uses bf16 MXU
    # inputs with f32 accumulation, hence the loose tolerance.
    ref = jax.block_until_ready(
        reference_head(x, raw_params, anchors=ANCHORS, num_classes=NUM_CLASSES))
    np.testing.assert_allclose(np.asarray(out), np.asarray(ref),
                               atol=3e-2, rtol=3e-2)

    print("KERNEL_OK")
</pallas_src>

<mosaic_0001>
module attributes {stable_mosaic.version = 11 : i64} {
  func.func @fused_head_kernel(%arg0: i32, %arg1: memref<1x8x640xbf16, #tpu.memory_space<vmem>>, %arg2: memref<4x9x8x8xbf16, #tpu.memory_space<vmem>>, %arg3: memref<4x8x1xf32, #tpu.memory_space<vmem>>, %arg4: memref<9x12x8xbf16, #tpu.memory_space<vmem>>, %arg5: memref<12x1xf32, #tpu.memory_space<vmem>>, %arg6: memref<1x384xf32, #tpu.memory_space<vmem>>, %arg7: memref<1x12x384xf32, #tpu.memory_space<vmem>>, %arg8: memref<8x640xbf16, #tpu.memory_space<vmem>>) attributes {dimension_semantics = [#tpu.dimension_semantics<parallel>], iteration_bounds = array<i64: 2>, scalar_prefetch = 0 : i64, scratch_operands = 1 : i64, tpu.core_type = #tpu.core_type<tc>, window_params = [{transform_indices = @transform_0, window_bounds = array<i64: 1, 8, 640>}, {pipeline_mode = #tpu.pipeline_mode<synchronous>, transform_indices = @transform_1, window_bounds = array<i64: 4, 9, 8, 8>}, {pipeline_mode = #tpu.pipeline_mode<synchronous>, transform_indices = @transform_2, window_bounds = array<i64: 4, 8, 1>}, {pipeline_mode = #tpu.pipeline_mode<synchronous>, transform_indices = @transform_3, window_bounds = array<i64: 9, 12, 8>}, {pipeline_mode = #tpu.pipeline_mode<synchronous>, transform_indices = @transform_4, window_bounds = array<i64: 12, 1>}, {pipeline_mode = #tpu.pipeline_mode<synchronous>, transform_indices = @transform_5, window_bounds = array<i64: 1, 384>}, {transform_indices = @transform_6, window_bounds = array<i64: 1, 12, 384>}]} {
    %cst = arith.constant 0.000000e+00 : bf16
    %0 = vector.broadcast %cst : bf16 to vector<8x128xbf16>
    %c0 = arith.constant 0 : index
    %c0_0 = arith.constant 0 : index
    %1 = vector.load %arg8[%c0, %c0_0] : memref<8x640xbf16, #tpu.memory_space<vmem>>, vector<8x128xbf16>
    tpu.vector_store %arg8[%c0, %c0_0], %0 {strides = array<i32>} : memref<8x640xbf16, #tpu.memory_space<vmem>>, vector<8x128xbf16>,
    %cst_1 = arith.constant 0.000000e+00 : bf16
    %2 = vector.broadcast %cst_1 : bf16 to vector<8x128xbf16>
    %c0_2 = arith.constant 0 : index
    %c512 = arith.constant 512 : index
    %3 = vector.load %arg8[%c0_2, %c512] : memref<8x640xbf16, #tpu.memory_space<vmem>>, vector<8x128xbf16>
    tpu.vector_store %arg8[%c0_2, %c512], %2 {strides = array<i32>} : memref<8x640xbf16, #tpu.memory_space<vmem>>, vector<8x128xbf16>,
    %c0_3 = arith.constant 0 : index
    %c0_4 = arith.constant 0 : index
    %4 = vector.load %arg6[%c0_3, %c0_4] : memref<1x384xf32, #tpu.memory_space<vmem>>, vector<1x384xf32>
    %5 = vector.shape_cast %4 : vector<1x384xf32> to vector<1x384xf32>
    %6 = vector.broadcast %5 : vector<1x384xf32> to vector<8x384xf32>
    %c0_5 = arith.constant 0 : index
    %c0_6 = arith.constant 0 : index
    %c109 = arith.constant 109 : index
    %7 = vector.load %arg1[%c0_5, %c0_6, %c109] : memref<1x8x640xbf16, #tpu.memory_space<vmem>>, vector<1x8x384xbf16>
    %8 = vector.shape_cast %7 : vector<1x8x384xbf16> to vector<8x384xbf16>
    %c0_7 = arith.constant 0 : index
    %c0_8 = arith.constant 0 : index
    %c0_9 = arith.constant 0 : index
    %c0_10 = arith.constant 0 : index
    %9 = vector.load %arg2[%c0_7, %c0_8, %c0_9, %c0_10] : memref<4x9x8x8xbf16, #tpu.memory_space<vmem>>, vector<1x1x8x8xbf16>
    %10 = vector.shape_cast %9 : vector<1x1x8x8xbf16> to vector<8x8xbf16>
    %cst_11 = arith.constant dense<0.000000e+00> : vector<8x384xf32>
    %11 = tpu.matmul %10, %8, %cst_11 {dimension_numbers = #tpu.dot_dimension_numbers<[1], [0], [0], [1], [0, 0, 1, 1], [], []>} : vector<8x8xbf16>, vector<8x384xbf16>, vector<8x384xf32> -> vector<8x384xf32>
    %c0_12 = arith.constant 0 : index
    %c0_13 = arith.constant 0 : index
    %c110 = arith.constant 110 : index
    %12 = vector.load %arg1[%c0_12, %c0_13, %c110] : memref<1x8x640xbf16, #tpu.memory_space<vmem>>, vector<1x8x384xbf16>
    %13 = vector.shape_cast %12 : vector<1x8x384xbf16> to vector<8x384xbf16>
    %c0_14 = arith.constant 0 : index
    %c1 = arith.constant 1 : index
    %c0_15 = arith.constant 0 : index
    %c0_16 = arith.constant 0 : index
    %14 = vector.load %arg2[%c0_14, %c1, %c0_15, %c0_16] : memref<4x9x8x8xbf16, #tpu.memory_space<vmem>>, vector<1x1x8x8xbf16>
    %15 = vector.shape_cast %14 : vector<1x1x8x8xbf16> to vector<8x8xbf16>
    %cst_17 = arith.constant dense<0.000000e+00> : vector<8x384xf32>
    %16 = tpu.matmul %15, %13, %cst_17 {dimension_numbers = #tpu.dot_dimension_numbers<[1], [0], [0], [1], [0, 0, 1, 1], [], []>} : vector<8x8xbf16>, vector<8x384xbf16>, vector<8x384xf32> -> vector<8x384xf32>
    %17 = arith.addf %11, %16 : vector<8x384xf32>
    %c0_18 = arith.constant 0 : index
    %c0_19 = arith.constant 0 : index
    %c111 = arith.constant 111 : index
    %18 = vector.load %arg1[%c0_18, %c0_19, %c111] : memref<1x8x640xbf16, #tpu.memory_space<vmem>>, vector<1x8x384xbf16>
    %19 = vector.shape_cast %18 : vector<1x8x384xbf16> to vector<8x384xbf16>
    %c0_20 = arith.constant 0 : index
    %c2 = arith.constant 2 : index
    %c0_21 = arith.constant 0 : index
    %c0_22 = arith.constant 0 : index
    %20 = vector.load %arg2[%c0_20, %c2, %c0_21, %c0_22] : memref<4x9x8x8xbf16, #tpu.memory_space<vmem>>, vector<1x1x8x8xbf16>
    %21 = vector.shape_cast %20 : vector<1x1x8x8xbf16> to vector<8x8xbf16>
    %cst_23 = arith.constant dense<0.000000e+00> : vector<8x384xf32>
    %22 = tpu.matmul %21, %19, %cst_23 {dimension_numbers = #tpu.dot_dimension_numbers<[1], [0], [0], [1], [0, 0, 1, 1], [], []>} : vector<8x8xbf16>, vector<8x384xbf16>, vector<8x384xf32> -> vector<8x384xf32>
    %23 = arith.addf %17, %22 : vector<8x384xf32>
    %c0_24 = arith.constant 0 : index
    %c0_25 = arith.constant 0 : index
    %c127 = arith.constant 127 : index
    %24 = vector.load %arg1[%c0_24, %c0_25, %c127] : memref<1x8x640xbf16, #tpu.memory_space<vmem>>, vector<1x8x384xbf16>
    %25 = vector.shape_cast %24 : vector<1x8x384xbf16> to vector<8x384xbf16>
    %c0_26 = arith.constant 0 : index
    %c3 = arith.constant 3 : index
    %c0_27 = arith.constant 0 : index
    %c0_28 = arith.constant 0 : index
    %26 = vector.load %arg2[%c0_26, %c3, %c0_27, %c0_28] : memref<4x9x8x8xbf16, #tpu.memory_space<vmem>>, vector<1x1x8x8xbf16>
    %27 = vector.shape_cast %26 : vector<1x1x8x8xbf16> to vector<8x8xbf16>
    %cst_29 = arith.constant dense<0.000000e+00> : vector<8x384xf32>
    %28 = tpu.matmul %27, %25, %cst_29 {dimension_numbers = #tpu.dot_dimension_numbers<[1], [0], [0], [1], [0, 0, 1, 1], [], []>} : vector<8x8xbf16>, vector<8x384xbf16>, vector<8x384xf32> -> vector<8x384xf32>
    %29 = arith.addf %23, %28 : vector<8x384xf32>
    %c0_30 = arith.constant 0 : index
    %c0_31 = arith.constant 0 : index
    %c128 = arith.constant 128 : index
    %30 = vector.load %arg1[%c0_30, %c0_31, %c128] : memref<1x8x640xbf16, #tpu.memory_space<vmem>>, vector<1x8x384xbf16>
    %31 = vector.shape_cast %30 : vector<1x8x384xbf16> to vector<8x384xbf16>
    %c0_32 = arith.constant 0 : index
    %c4 = arith.constant 4 : index
    %c0_33 = arith.constant 0 : index
    %c0_34 = arith.constant 0 : index
    %32 = vector.load %arg2[%c0_32, %c4, %c0_33, %c0_34] : memref<4x9x8x8xbf16, #tpu.memory_space<vmem>>, vector<1x1x8x8xbf16>
    %33 = vector.shape_cast %32 : vector<1x1x8x8xbf16> to vector<8x8xbf16>
    %cst_35 = arith.constant dense<0.000000e+00> : vector<8x384xf32>
    %34 = tpu.matmul %33, %31, %cst_35 {dimension_numbers = #tpu.dot_dimension_numbers<[1], [0], [0], [1], [0, 0, 1, 1], [], []>} : vector<8x8xbf16>, vector<8x384xbf16>, vector<8x384xf32> -> vector<8x384xf32>
    %35 = arith.addf %29, %34 : vector<8x384xf32>
    %c0_36 = arith.constant 0 : index
    %c0_37 = arith.constant 0 : index
    %c129 = arith.constant 129 : index
    %36 = vector.load %arg1[%c0_36, %c0_37, %c129] : memref<1x8x640xbf16, #tpu.memory_space<vmem>>, vector<1x8x384xbf16>
    %37 = vector.shape_cast %36 : vector<1x8x384xbf16> to vector<8x384xbf16>
    %c0_38 = arith.constant 0 : index
    %c5 = arith.constant 5 : index
    %c0_39 = arith.constant 0 : index
    %c0_40 = arith.constant 0 : index
    %38 = vector.load %arg2[%c0_38, %c5, %c0_39, %c0_40] : memref<4x9x8x8xbf16, #tpu.memory_space<vmem>>, vector<1x1x8x8xbf16>
    %39 = vector.shape_cast %38 : vector<1x1x8x8xbf16> to vector<8x8xbf16>
    %cst_41 = arith.constant dense<0.000000e+00> : vector<8x384xf32>
    %40 = tpu.matmul %39, %37, %cst_41 {dimension_numbers = #tpu.dot_dimension_numbers<[1], [0], [0], [1], [0, 0, 1, 1], [], []>} : vector<8x8xbf16>, vector<8x384xbf16>, vector<8x384xf32> -> vector<8x384xf32>
    %41 = arith.addf %35, %40 : vector<8x384xf32>
    %c0_42 = arith.constant 0 : index
    %c0_43 = arith.constant 0 : index
    %c145 = arith.constant 145 : index
    %42 = vector.load %arg1[%c0_42, %c0_43, %c145] : memref<1x8x640xbf16, #tpu.memory_space<vmem>>, vector<1x8x384xbf16>
    %43 = vector.shape_cast %42 : vector<1x8x384xbf16> to vector<8x384xbf16>
    %c0_44 = arith.constant 0 : index
    %c6 = arith.constant 6 : index
    %c0_45 = arith.constant 0 : index
    %c0_46 = arith.constant 0 : index
    %44 = vector.load %arg2[%c0_44, %c6, %c0_45, %c0_46] : memref<4x9x8x8xbf16, #tpu.memory_space<vmem>>, vector<1x1x8x8xbf16>
    %45 = vector.shape_cast %44 : vector<1x1x8x8xbf16> to vector<8x8xbf16>
    %cst_47 = arith.constant dense<0.000000e+00> : vector<8x384xf32>
    %46 = tpu.matmul %45, %43, %cst_47 {dimension_numbers = #tpu.dot_dimension_numbers<[1], [0], [0], [1], [0, 0, 1, 1], [], []>} : vector<8x8xbf16>, vector<8x384xbf16>, vector<8x384xf32> -> vector<8x384xf32>
    %47 = arith.addf %41, %46 : vector<8x384xf32>
    %c0_48 = arith.constant 0 : index
    %c0_49 = arith.constant 0 : index
    %c146 = arith.constant 146 : index
    %48 = vector.load %arg1[%c0_48, %c0_49, %c146] : memref<1x8x640xbf16, #tpu.memory_space<vmem>>, vector<1x8x384xbf16>
    %49 = vector.shape_cast %48 : vector<1x8x384xbf16> to vector<8x384xbf16>
    %c0_50 = arith.constant 0 : index
    %c7 = arith.constant 7 : index
    %c0_51 = arith.constant 0 : index
    %c0_52 = arith.constant 0 : index
    %50 = vector.load %arg2[%c0_50, %c7, %c0_51, %c0_52] : memref<4x9x8x8xbf16, #tpu.memory_space<vmem>>, vector<1x1x8x8xbf16>
    %51 = vector.shape_cast %50 : vector<1x1x8x8xbf16> to vector<8x8xbf16>
    %cst_53 = arith.constant dense<0.000000e+00> : vector<8x384xf32>
    %52 = tpu.matmul %51, %49, %cst_53 {dimension_numbers = #tpu.dot_dimension_numbers<[1], [0], [0], [1], [0, 0, 1, 1], [], []>} : vector<8x8xbf16>, vector<8x384xbf16>, vector<8x384xf32> -> vector<8x384xf32>
    %53 = arith.addf %47, %52 : vector<8x384xf32>
    %c0_54 = arith.constant 0 : index
    %c0_55 = arith.constant 0 : index
    %c147 = arith.constant 147 : index
    %54 = vector.load %arg1[%c0_54, %c0_55, %c147] : memref<1x8x640xbf16, #tpu.memory_space<vmem>>, vector<1x8x384xbf16>
    %55 = vector.shape_cast %54 : vector<1x8x384xbf16> to vector<8x384xbf16>
    %c0_56 = arith.constant 0 : index
    %c8 = arith.constant 8 : index
    %c0_57 = arith.constant 0 : index
    %c0_58 = arith.constant 0 : index
    %56 = vector.load %arg2[%c0_56, %c8, %c0_57, %c0_58] : memref<4x9x8x8xbf16, #tpu.memory_space<vmem>>, vector<1x1x8x8xbf16>
    %57 = vector.shape_cast %56 : vector<1x1x8x8xbf16> to vector<8x8xbf16>
    %cst_59 = arith.constant dense<0.000000e+00> : vector<8x384xf32>
    %58 = tpu.matmul %57, %55, %cst_59 {dimension_numbers = #tpu.dot_dimension_numbers<[1], [0], [0], [1], [0, 0, 1, 1], [], []>} : vector<8x8xbf16>, vector<8x384xbf16>, vector<8x384xf32> -> vector<8x384xf32>
    %59 = arith.addf %53, %58 : vector<8x384xf32>
    %c0_60 = arith.constant 0 : index
    %c0_61 = arith.constant 0 : index
    %c0_62 = arith.constant 0 : index
    %60 = vector.load %arg3[%c0_60, %c0_61, %c0_62] : memref<4x8x1xf32, #tpu.memory_space<vmem>>, vector<1x8x1xf32>
    %61 = vector.shape_cast %60 : vector<1x8x1xf32> to vector<8x1xf32>
    %62 = vector.broadcast %61 : vector<8x1xf32> to vector<8x384xf32>
    %63 = arith.addf %59, %62 : vector<8x384xf32>
    %cst_63 = arith.constant 0.000000e+00 : f32
    %64 = vector.broadcast %cst_63 : f32 to vector<8x384xf32>
    %65 = arith.maximumf %63, %64 : vector<8x384xf32>
    %66 = arith.mulf %65, %6 : vector<8x384xf32>
    %67 = arith.truncf %66 : vector<8x384xf32> to vector<8x384xbf16>
    %c0_64 = arith.constant 0 : index
    %c128_65 = arith.constant 128 : index
    %68 = vector.load %arg8[%c0_64, %c128_65] : memref<8x640xbf16, #tpu.memory_space<vmem>>, vector<8x384xbf16>
    tpu.vector_store %arg8[%c0_64, %c128_65], %67 {strides = array<i32>} : memref<8x640xbf16, #tpu.memory_space<vmem>>, vector<8x384xbf16>,
    %c0_66 = arith.constant 0 : index
    %c109_67 = arith.constant 109 : index
    %69 = vector.load %arg8[%c0_66, %c109_67] : memref<8x640xbf16, #tpu.memory_space<vmem>>, vector<8x384xbf16>
    %c1_68 = arith.constant 1 : index
    %c0_69 = arith.constant 0 : index
    %c0_70 = arith.constant 0 : index
    %c0_71 = arith.constant 0 : index
    %70 = vector.load %arg2[%c1_68, %c0_69, %c0_70, %c0_71] : memref<4x9x8x8xbf16, #tpu.memory_space<vmem>>, vector<1x1x8x8xbf16>
    %71 = vector.shape_cast %70 : vector<1x1x8x8xbf16> to vector<8x8xbf16>
    %cst_72 = arith.constant dense<0.000000e+00> : vector<8x384xf32>
    %72 = tpu.matmul %71, %69, %cst_72 {dimension_numbers = #tpu.dot_dimension_numbers<[1], [0], [0], [1], [0, 0, 1, 1], [], []>} : vector<8x8xbf16>, vector<8x384xbf16>, vector<8x384xf32> -> vector<8x384xf32>
    %c0_73 = arith.constant 0 : index
    %c110_74 = arith.constant 110 : index
    %73 = vector.load %arg8[%c0_73, %c110_74] : memref<8x640xbf16, #tpu.memory_space<vmem>>, vector<8x384xbf16>
    %c1_75 = arith.constant 1 : index
    %c1_76 = arith.constant 1 : index
    %c0_77 = arith.constant 0 : index
    %c0_78 = arith.constant 0 : index
    %74 = vector.load %arg2[%c1_75, %c1_76, %c0_77, %c0_78] : memref<4x9x8x8xbf16, #tpu.memory_space<vmem>>, vector<1x1x8x8xbf16>
    %75 = vector.shape_cast %74 : vector<1x1x8x8xbf16> to vector<8x8xbf16>
    %cst_79 = arith.constant dense<0.000000e+00> : vector<8x384xf32>
    %76 = tpu.matmul %75, %73, %cst_79 {dimension_numbers = #tpu.dot_dimension_numbers<[1], [0], [0], [1], [0, 0, 1, 1], [], []>} : vector<8x8xbf16>, vector<8x384xbf16>, vector<8x384xf32> -> vector<8x384xf32>
    %77 = arith.addf %72, %76 : vector<8x384xf32>
    %c0_80 = arith.constant 0 : index
    %c111_81 = arith.constant 111 : index
    %78 = vector.load %arg8[%c0_80, %c111_81] : memref<8x640xbf16, #tpu.memory_space<vmem>>, vector<8x384xbf16>
    %c1_82 = arith.constant 1 : index
    %c2_83 = arith.constant 2 : index
    %c0_84 = arith.constant 0 : index
    %c0_85 = arith.constant 0 : index
    %79 = vector.load %arg2[%c1_82, %c2_83, %c0_84, %c0_85] : memref<4x9x8x8xbf16, #tpu.memory_space<vmem>>, vector<1x1x8x8xbf16>
    %80 = vector.shape_cast %79 : vector<1x1x8x8xbf16> to vector<8x8xbf16>
    %cst_86 = arith.constant dense<0.000000e+00> : vector<8x384xf32>
    %81 = tpu.matmul %80, %78, %cst_86 {dimension_numbers = #tpu.dot_dimension_numbers<[1], [0], [0], [1], [0, 0, 1, 1], [], []>} : vector<8x8xbf16>, vector<8x384xbf16>, vector<8x384xf32> -> vector<8x384xf32>
    %82 = arith.addf %77, %81 : vector<8x384xf32>
    %c0_87 = arith.constant 0 : index
    %c127_88 = arith.constant 127 : index
    %83 = vector.load %arg8[%c0_87, %c127_88] : memref<8x640xbf16, #tpu.memory_space<vmem>>, vector<8x384xbf16>
    %c1_89 = arith.constant 1 : index
    %c3_90 = arith.constant 3 : index
    %c0_91 = arith.constant 0 : index
    %c0_92 = arith.constant 0 : index
    %84 = vector.load %arg2[%c1_89, %c3_90, %c0_91, %c0_92] : memref<4x9x8x8xbf16, #tpu.memory_space<vmem>>, vector<1x1x8x8xbf16>
    %85 = vector.shape_cast %84 : vector<1x1x8x8xbf16> to vector<8x8xbf16>
    %cst_93 = arith.constant dense<0.000000e+00> : vector<8x384xf32>
    %86 = tpu.matmul %85, %83, %cst_93 {dimension_numbers = #tpu.dot_dimension_numbers<[1], [0], [0], [1], [0, 0, 1, 1], [], []>} : vector<8x8xbf16>, vector<8x384xbf16>, vector<8x384xf32> -> vector<8x384xf32>
    %87 = arith.addf %82, %86 : vector<8x384xf32>
    %c0_94 = arith.constant 0 : index
    %c128_95 = arith.constant 128 : index
    %88 = vector.load %arg8[%c0_94, %c128_95] : memref<8x640xbf16, #tpu.memory_space<vmem>>, vector<8x384xbf16>
    %c1_96 = arith.constant 1 : index
    %c4_97 = arith.constant 4 : index
    %c0_98 = arith.constant 0 : index
    %c0_99 = arith.constant 0 : index
    %89 = vector.load %arg2[%c1_96, %c4_97, %c0_98, %c0_99] : memref<4x9x8x8xbf16, #tpu.memory_space<vmem>>, vector<1x1x8x8xbf16>
    %90 = vector.shape_cast %89 : vector<1x1x8x8xbf16> to vector<8x8xbf16>
    %cst_100 = arith.constant dense<0.000000e+00> : vector<8x384xf32>
    %91 = tpu.matmul %90, %88, %cst_100 {dimension_numbers = #tpu.dot_dimension_numbers<[1], [0], [0], [1], [0, 0, 1, 1], [], []>} : vector<8x8xbf16>, vector<8x384xbf16>, vector<8x384xf32> -> vector<8x384xf32>
    %92 = arith.addf %87, %91 : vector<8x384xf32>
    %c0_101 = arith.constant 0 : index
    %c129_102 = arith.constant 129 : index
    %93 = vector.load %arg8[%c0_101, %c129_102] : memref<8x640xbf16, #tpu.memory_space<vmem>>, vector<8x384xbf16>
    %c1_103 = arith.constant 1 : index
    %c5_104 = arith.constant 5 : index
    %c0_105 = arith.constant 0 : index
    %c0_106 = arith.constant 0 : index
    %94 = vector.load %arg2[%c1_103, %c5_104, %c0_105, %c0_106] : memref<4x9x8x8xbf16, #tpu.memory_space<vmem>>, vector<1x1x8x8xbf16>
    %95 = vector.shape_cast %94 : vector<1x1x8x8xbf16> to vector<8x8xbf16>
    %cst_107 = arith.constant dense<0.000000e+00> : vector<8x384xf32>
    %96 = tpu.matmul %95, %93, %cst_107 {dimension_numbers = #tpu.dot_dimension_numbers<[1], [0], [0], [1], [0, 0, 1, 1], [], []>} : vector<8x8xbf16>, vector<8x384xbf16>, vector<8x384xf32> -> vector<8x384xf32>
    %97 = arith.addf %92, %96 : vector<8x384xf32>
    %c0_108 = arith.constant 0 : index
    %c145_109 = arith.constant 145 : index
    %98 = vector.load %arg8[%c0_108, %c145_109] : memref<8x640xbf16, #tpu.memory_space<vmem>>, vector<8x384xbf16>
    %c1_110 = arith.constant 1 : index
    %c6_111 = arith.constant 6 : index
    %c0_112 = arith.constant 0 : index
    %c0_113 = arith.constant 0 : index
    %99 = vector.load %arg2[%c1_110, %c6_111, %c0_112, %c0_113] : memref<4x9x8x8xbf16, #tpu.memory_space<vmem>>, vector<1x1x8x8xbf16>
    %100 = vector.shape_cast %99 : vector<1x1x8x8xbf16> to vector<8x8xbf16>
    %cst_114 = arith.constant dense<0.000000e+00> : vector<8x384xf32>
    %101 = tpu.matmul %100, %98, %cst_114 {dimension_numbers = #tpu.dot_dimension_numbers<[1], [0], [0], [1], [0, 0, 1, 1], [], []>} : vector<8x8xbf16>, vector<8x384xbf16>, vector<8x384xf32> -> vector<8x384xf32>
    %102 = arith.addf %97, %101 : vector<8x384xf32>
    %c0_115 = arith.constant 0 : index
    %c146_116 = arith.constant 146 : index
    %103 = vector.load %arg8[%c0_115, %c146_116] : memref<8x640xbf16, #tpu.memory_space<vmem>>, vector<8x384xbf16>
    %c1_117 = arith.constant 1 : index
    %c7_118 = arith.constant 7 : index
    %c0_119 = arith.constant 0 : index
    %c0_120 = arith.constant 0 : index
    %104 = vector.load %arg2[%c1_117, %c7_118, %c0_119, %c0_120] : memref<4x9x8x8xbf16, #tpu.memory_space<vmem>>, vector<1x1x8x8xbf16>
    %105 = vector.shape_cast %104 : vector<1x1x8x8xbf16> to vector<8x8xbf16>
    %cst_121 = arith.constant dense<0.000000e+00> : vector<8x384xf32>
    %106 = tpu.matmul %105, %103, %cst_121 {dimension_numbers = #tpu.dot_dimension_numbers<[1], [0], [0], [1], [0, 0, 1, 1], [], []>} : vector<8x8xbf16>, vector<8x384xbf16>, vector<8x384xf32> -> vector<8x384xf32>
    %107 = arith.addf %102, %106 : vector<8x384xf32>
    %c0_122 = arith.constant 0 : index
    %c147_123 = arith.constant 147 : index
    %108 = vector.load %arg8[%c0_122, %c147_123] : memref<8x640xbf16, #tpu.memory_space<vmem>>, vector<8x384xbf16>
    %c1_124 = arith.constant 1 : index
    %c8_125 = arith.constant 8 : index
    %c0_126 = arith.constant 0 : index
    %c0_127 = arith.constant 0 : index
    %109 = vector.load %arg2[%c1_124, %c8_125, %c0_126, %c0_127] : memref<4x9x8x8xbf16, #tpu.memory_space<vmem>>, vector<1x1x8x8xbf16>
    %110 = vector.shape_cast %109 : vector<1x1x8x8xbf16> to vector<8x8xbf16>
    %cst_128 = arith.constant dense<0.000000e+00> : vector<8x384xf32>
    %111 = tpu.matmul %110, %108, %cst_128 {dimension_numbers = #tpu.dot_dimension_numbers<[1], [0], [0], [1], [0, 0, 1, 1], [], []>} : vector<8x8xbf16>, vector<8x384xbf16>, vector<8x384xf32> -> vector<8x384xf32>
    %112 = arith.addf %107, %111 : vector<8x384xf32>
    %c1_129 = arith.constant 1 : index
    %c0_130 = arith.constant 0 : index
    %c0_131 = arith.constant 0 : index
    %113 = vector.load %arg3[%c1_129, %c0_130, %c0_131] : memref<4x8x1xf32, #tpu.memory_space<vmem>>, vector<1x8x1xf32>
    %114 = vector.shape_cast %113 : vector<1x8x1xf32> to vector<8x1xf32>
    %115 = vector.broadcast %114 : vector<8x1xf32> to vector<8x384xf32>
    %116 = arith.addf %112, %115 : vector<8x384xf32>
    %cst_132 = arith.constant 0.000000e+00 : f32
    %117 = vector.broadcast %cst_132 : f32 to vector<8x384xf32>
    %118 = arith.maximumf %116, %117 : vector<8x384xf32>
    %119 = arith.mulf %118, %6 : vector<8x384xf32>
    %120 = arith.truncf %119 : vector<8x384xf32> to vector<8x384xbf16>
    %c0_133 = arith.constant 0 : index
    %c128_134 = arith.constant 128 : index
    %121 = vector.load %arg8[%c0_133, %c128_134] : memref<8x640xbf16, #tpu.memory_space<vmem>>, vector<8x384xbf16>
    tpu.vector_store %arg8[%c0_133, %c128_134], %120 {strides = array<i32>} : memref<8x640xbf16, #tpu.memory_space<vmem>>, vector<8x384xbf16>,
    %c0_135 = arith.constant 0 : index
    %c109_136 = arith.constant 109 : index
    %122 = vector.load %arg8[%c0_135, %c109_136] : memref<8x640xbf16, #tpu.memory_space<vmem>>, vector<8x384xbf16>
    %c2_137 = arith.constant 2 : index
    %c0_138 = arith.constant 0 : index
    %c0_139 = arith.constant 0 : index
    %c0_140 = arith.constant 0 : index
    %123 = vector.load %arg2[%c2_137, %c0_138, %c0_139, %c0_140] : memref<4x9x8x8xbf16, #tpu.memory_space<vmem>>, vector<1x1x8x8xbf16>
    %124 = vector.shape_cast %123 : vector<1x1x8x8xbf16> to vector<8x8xbf16>
    %cst_141 = arith.constant dense<0.000000e+00> : vector<8x384xf32>
    %125 = tpu.matmul %124, %122, %cst_141 {dimension_numbers = #tpu.dot_dimension_numbers<[1], [0], [0], [1], [0, 0, 1, 1], [], []>} : vector<8x8xbf16>, vector<8x384xbf16>, vector<8x384xf32> -> vector<8x384xf32>
    %c0_142 = arith.constant 0 : index
    %c110_143 = arith.constant 110 : index
    %126 = vector.load %arg8[%c0_142, %c110_143] : memref<8x640xbf16, #tpu.memory_space<vmem>>, vector<8x384xbf16>
    %c2_144 = arith.constant 2 : index
    %c1_145 = arith.constant 1 : index
    %c0_146 = arith.constant 0 : index
    %c0_147 = arith.constant 0 : index
    %127 = vector.load %arg2[%c2_144, %c1_145, %c0_146, %c0_147] : memref<4x9x8x8xbf16, #tpu.memory_space<vmem>>, vector<1x1x8x8xbf16>
    %128 = vector.shape_cast %127 : vector<1x1x8x8xbf16> to vector<8x8xbf16>
    %cst_148 = arith.constant dense<0.000000e+00> : vector<8x384xf32>
    %129 = tpu.matmul %128, %126, %cst_148 {dimension_numbers = #tpu.dot_dimension_numbers<[1], [0], [0], [1], [0, 0, 1, 1], [], []>} : vector<8x8xbf16>, vector<8x384xbf16>, vector<8x384xf32> -> vector<8x384xf32>
    %130 = arith.addf %125, %129 : vector<8x384xf32>
    %c0_149 = arith.constant 0 : index
    %c111_150 = arith.constant 111 : index
    %131 = vector.load %arg8[%c0_149, %c111_150] : memref<8x640xbf16, #tpu.memory_space<vmem>>, vector<8x384xbf16>
    %c2_151 = arith.constant 2 : index
    %c2_152 = arith.constant 2 : index
    %c0_153 = arith.constant 0 : index
    %c0_154 = arith.constant 0 : index
    %132 = vector.load %arg2[%c2_151, %c2_152, %c0_153, %c0_154] : memref<4x9x8x8xbf16, #tpu.memory_space<vmem>>, vector<1x1x8x8xbf16>
    %133 = vector.shape_cast %132 : vector<1x1x8x8xbf16> to vector<8x8xbf16>
    %cst_155 = arith.constant dense<0.000000e+00> : vector<8x384xf32>
    %134 = tpu.matmul %133, %131, %cst_155 {dimension_numbers = #tpu.dot_dimension_numbers<[1], [0], [0], [1], [0, 0, 1, 1], [], []>} : vector<8x8xbf16>, vector<8x384xbf16>, vector<8x384xf32> -> vector<8x384xf32>
    %135 = arith.addf %130, %134 : vector<8x384xf32>
    %c0_156 = arith.constant 0 : index
    %c127_157 = arith.constant 127 : index
    %136 = vector.load %arg8[%c0_156, %c127_157] : memref<8x640xbf16, #tpu.memory_space<vmem>>, vector<8x384xbf16>
    %c2_158 = arith.constant 2 : index
    %c3_159 = arith.constant 3 : index
    %c0_160 = arith.constant 0 : index
    %c0_161 = arith.constant 0 : index
    %137 = vector.load %arg2[%c2_158, %c3_159, %c0_160, %c0_161] : memref<4x9x8x8xbf16, #tpu.memory_space<vmem>>, vector<1x1x8x8xbf16>
    %138 = vector.shape_cast %137 : vector<1x1x8x8xbf16> to vector<8x8xbf16>
    %cst_162 = arith.constant dense<0.000000e+00> : vector<8x384xf32>
    %139 = tpu.matmul %138, %136, %cst_162 {dimension_numbers = #tpu.dot_dimension_numbers<[1], [0], [0], [1], [0, 0, 1, 1], [], []>} : vector<8x8xbf16>, vector<8x384xbf16>, vector<8x384xf32> -> vector<8x384xf32>
    %140 = arith.addf %135, %139 : vector<8x384xf32>
    %c0_163 = arith.constant 0 : index
    %c128_164 = arith.constant 128 : index
    %141 = vector.load %arg8[%c0_163, %c128_164] : memref<8x640xbf16, #tpu.memory_space<vmem>>, vector<8x384xbf16>
    %c2_165 = arith.constant 2 : index
    %c4_166 = arith.constant 4 : index
    %c0_167 = arith.constant 0 : index
    %c0_168 = arith.constant 0 : index
    %142 = vector.load %arg2[%c2_165, %c4_166, %c0_167, %c0_168] : memref<4x9x8x8xbf16, #tpu.memory_space<vmem>>, vector<1x1x8x8xbf16>
    %143 = vector.shape_cast %142 : vector<1x1x8x8xbf16> to vector<8x8xbf16>
    %cst_169 = arith.constant dense<0.000000e+00> : vector<8x384xf32>
    %144 = tpu.matmul %143, %141, %cst_169 {dimension_numbers = #tpu.dot_dimension_numbers<[1], [0], [0], [1], [0, 0, 1, 1], [], []>} : vector<8x8xbf16>, vector<8x384xbf16>, vector<8x384xf32> -> vector<8x384xf32>
    %145 = arith.addf %140, %144 : vector<8x384xf32>
    %c0_170 = arith.constant 0 : index
    %c129_171 = arith.constant 129 : index
    %146 = vector.load %arg8[%c0_170, %c129_171] : memref<8x640xbf16, #tpu.memory_space<vmem>>, vector<8x384xbf16>
    %c2_172 = arith.constant 2 : index
    %c5_173 = arith.constant 5 : index
    %c0_174 = arith.constant 0 : index
    %c0_175 = arith.constant 0 : index
    %147 = vector.load %arg2[%c2_172, %c5_173, %c0_174, %c0_175] : memref<4x9x8x8xbf16, #tpu.memory_space<vmem>>, vector<1x1x8x8xbf16>
    %148 = vector.shape_cast %147 : vector<1x1x8x8xbf16> to vector<8x8xbf16>
    %cst_176 = arith.constant dense<0.000000e+00> : vector<8x384xf32>
    %149 = tpu.matmul %148, %146, %cst_176 {dimension_numbers = #tpu.dot_dimension_numbers<[1], [0], [0], [1], [0, 0, 1, 1], [], []>} : vector<8x8xbf16>, vector<8x384xbf16>, vector<8x384xf32> -> vector<8x384xf32>
    %150 = arith.addf %145, %149 : vector<8x384xf32>
    %c0_177 = arith.constant 0 : index
    %c145_178 = arith.constant 145 : index
    %151 = vector.load %arg8[%c0_177, %c145_178] : memref<8x640xbf16, #tpu.memory_space<vmem>>, vector<8x384xbf16>
    %c2_179 = arith.constant 2 : index
    %c6_180 = arith.constant 6 : index
    %c0_181 = arith.constant 0 : index
    %c0_182 = arith.constant 0 : index
    %152 = vector.load %arg2[%c2_179, %c6_180, %c0_181, %c0_182] : memref<4x9x8x8xbf16, #tpu.memory_space<vmem>>, vector<1x1x8x8xbf16>
    %153 = vector.shape_cast %152 : vector<1x1x8x8xbf16> to vector<8x8xbf16>
    %cst_183 = arith.constant dense<0.000000e+00> : vector<8x384xf32>
    %154 = tpu.matmul %153, %151, %cst_183 {dimension_numbers = #tpu.dot_dimension_numbers<[1], [0], [0], [1], [0, 0, 1, 1], [], []>} : vector<8x8xbf16>, vector<8x384xbf16>, vector<8x384xf32> -> vector<8x384xf32>
    %155 = arith.addf %150, %154 : vector<8x384xf32>
    %c0_184 = arith.constant 0 : index
    %c146_185 = arith.constant 146 : index
    %156 = vector.load %arg8[%c0_184, %c146_185] : memref<8x640xbf16, #tpu.memory_space<vmem>>, vector<8x384xbf16>
    %c2_186 = arith.constant 2 : index
    %c7_187 = arith.constant 7 : index
    %c0_188 = arith.constant 0 : index
    %c0_189 = arith.constant 0 : index
    %157 = vector.load %arg2[%c2_186, %c7_187, %c0_188, %c0_189] : memref<4x9x8x8xbf16, #tpu.memory_space<vmem>>, vector<1x1x8x8xbf16>
    %158 = vector.shape_cast %157 : vector<1x1x8x8xbf16> to vector<8x8xbf16>
    %cst_190 = arith.constant dense<0.000000e+00> : vector<8x384xf32>
    %159 = tpu.matmul %158, %156, %cst_190 {dimension_numbers = #tpu.dot_dimension_numbers<[1], [0], [0], [1], [0, 0, 1, 1], [], []>} : vector<8x8xbf16>, vector<8x384xbf16>, vector<8x384xf32> -> vector<8x384xf32>
    %160 = arith.addf %155, %159 : vector<8x384xf32>
    %c0_191 = arith.constant 0 : index
    %c147_192 = arith.constant 147 : index
    %161 = vector.load %arg8[%c0_191, %c147_192] : memref<8x640xbf16, #tpu.memory_space<vmem>>, vector<8x384xbf16>
    %c2_193 = arith.constant 2 : index
    %c8_194 = arith.constant 8 : index
    %c0_195 = arith.constant 0 : index
    %c0_196 = arith.constant 0 : index
    %162 = vector.load %arg2[%c2_193, %c8_194, %c0_195, %c0_196] : memref<4x9x8x8xbf16, #tpu.memory_space<vmem>>, vector<1x1x8x8xbf16>
    %163 = vector.shape_cast %162 : vector<1x1x8x8xbf16> to vector<8x8xbf16>
    %cst_197 = arith.constant dense<0.000000e+00> : vector<8x384xf32>
    %164 = tpu.matmul %163, %161, %cst_197 {dimension_numbers = #tpu.dot_dimension_numbers<[1], [0], [0], [1], [0, 0, 1, 1], [], []>} : vector<8x8xbf16>, vector<8x384xbf16>, vector<8x384xf32> -> vector<8x384xf32>
    %165 = arith.addf %160, %164 : vector<8x384xf32>
    %c2_198 = arith.constant 2 : index
    %c0_199 = arith.constant 0 : index
    %c0_200 = arith.constant 0 : index
    %166 = vector.load %arg3[%c2_198, %c0_199, %c0_200] : memref<4x8x1xf32, #tpu.memory_space<vmem>>, vector<1x8x1xf32>
    %167 = vector.shape_cast %166 : vector<1x8x1xf32> to vector<8x1xf32>
    %168 = vector.broadcast %167 : vector<8x1xf32> to vector<8x384xf32>
    %169 = arith.addf %165, %168 : vector<8x384xf32>
    %cst_201 = arith.constant 0.000000e+00 : f32
    %170 = vector.broadcast %cst_201 : f32 to vector<8x384xf32>
    %171 = arith.maximumf %169, %170 : vector<8x384xf32>
    %172 = arith.mulf %171, %6 : vector<8x384xf32>
    %173 = arith.truncf %172 : vector<8x384xf32> to vector<8x384xbf16>
    %c0_202 = arith.constant 0 : index
    %c128_203 = arith.constant 128 : index
    %174 = vector.load %arg8[%c0_202, %c128_203] : memref<8x640xbf16, #tpu.memory_space<vmem>>, vector<8x384xbf16>
    tpu.vector_store %arg8[%c0_202, %c128_203], %173 {strides = array<i32>} : memref<8x640xbf16, #tpu.memory_space<vmem>>, vector<8x384xbf16>,
    %c0_204 = arith.constant 0 : index
    %c109_205 = arith.constant 109 : index
    %175 = vector.load %arg8[%c0_204, %c109_205] : memref<8x640xbf16, #tpu.memory_space<vmem>>, vector<8x384xbf16>
    %c3_206 = arith.constant 3 : index
    %c0_207 = arith.constant 0 : index
    %c0_208 = arith.constant 0 : index
    %c0_209 = arith.constant 0 : index
    %176 = vector.load %arg2[%c3_206, %c0_207, %c0_208, %c0_209] : memref<4x9x8x8xbf16, #tpu.memory_space<vmem>>, vector<1x1x8x8xbf16>
    %177 = vector.shape_cast %176 : vector<1x1x8x8xbf16> to vector<8x8xbf16>
    %cst_210 = arith.constant dense<0.000000e+00> : vector<8x384xf32>
    %178 = tpu.matmul %177, %175, %cst_210 {dimension_numbers = #tpu.dot_dimension_numbers<[1], [0], [0], [1], [0, 0, 1, 1], [], []>} : vector<8x8xbf16>, vector<8x384xbf16>, vector<8x384xf32> -> vector<8x384xf32>
    %c0_211 = arith.constant 0 : index
    %c110_212 = arith.constant 110 : index
    %179 = vector.load %arg8[%c0_211, %c110_212] : memref<8x640xbf16, #tpu.memory_space<vmem>>, vector<8x384xbf16>
    %c3_213 = arith.constant 3 : index
    %c1_214 = arith.constant 1 : index
    %c0_215 = arith.constant 0 : index
    %c0_216 = arith.constant 0 : index
    %180 = vector.load %arg2[%c3_213, %c1_214, %c0_215, %c0_216] : memref<4x9x8x8xbf16, #tpu.memory_space<vmem>>, vector<1x1x8x8xbf16>
    %181 = vector.shape_cast %180 : vector<1x1x8x8xbf16> to vector<8x8xbf16>
    %cst_217 = arith.constant dense<0.000000e+00> : vector<8x384xf32>
    %182 = tpu.matmul %181, %179, %cst_217 {dimension_numbers = #tpu.dot_dimension_numbers<[1], [0], [0], [1], [0, 0, 1, 1], [], []>} : vector<8x8xbf16>, vector<8x384xbf16>, vector<8x384xf32> -> vector<8x384xf32>
    %183 = arith.addf %178, %182 : vector<8x384xf32>
    %c0_218 = arith.constant 0 : index
    %c111_219 = arith.constant 111 : index
    %184 = vector.load %arg8[%c0_218, %c111_219] : memref<8x640xbf16, #tpu.memory_space<vmem>>, vector<8x384xbf16>
    %c3_220 = arith.constant 3 : index
    %c2_221 = arith.constant 2 : index
    %c0_222 = arith.constant 0 : index
    %c0_223 = arith.constant 0 : index
    %185 = vector.load %arg2[%c3_220, %c2_221, %c0_222, %c0_223] : memref<4x9x8x8xbf16, #tpu.memory_space<vmem>>, vector<1x1x8x8xbf16>
    %186 = vector.shape_cast %185 : vector<1x1x8x8xbf16> to vector<8x8xbf16>
    %cst_224 = arith.constant dense<0.000000e+00> : vector<8x384xf32>
    %187 = tpu.matmul %186, %184, %cst_224 {dimension_numbers = #tpu.dot_dimension_numbers<[1], [0], [0], [1], [0, 0, 1, 1], [], []>} : vector<8x8xbf16>, vector<8x384xbf16>, vector<8x384xf32> -> vector<8x384xf32>
    %188 = arith.addf %183, %187 : vector<8x384xf32>
    %c0_225 = arith.constant 0 : index
    %c127_226 = arith.constant 127 : index
    %189 = vector.load %arg8[%c0_225, %c127_226] : memref<8x640xbf16, #tpu.memory_space<vmem>>, vector<8x384xbf16>
    %c3_227 = arith.constant 3 : index
    %c3_228 = arith.constant 3 : index
    %c0_229 = arith.constant 0 : index
    %c0_230 = arith.constant 0 : index
    %190 = vector.load %arg2[%c3_227, %c3_228, %c0_229, %c0_230] : memref<4x9x8x8xbf16, #tpu.memory_space<vmem>>, vector<1x1x8x8xbf16>
    %191 = vector.shape_cast %190 : vector<1x1x8x8xbf16> to vector<8x8xbf16>
    %cst_231 = arith.constant dense<0.000000e+00> : vector<8x384xf32>
    %192 = tpu.matmul %191, %189, %cst_231 {dimension_numbers = #tpu.dot_dimension_numbers<[1], [0], [0], [1], [0, 0, 1, 1], [], []>} : vector<8x8xbf16>, vector<8x384xbf16>, vector<8x384xf32> -> vector<8x384xf32>
    %193 = arith.addf %188, %192 : vector<8x384xf32>
    %c0_232 = arith.constant 0 : index
    %c128_233 = arith.constant 128 : index
    %194 = vector.load %arg8[%c0_232, %c128_233] : memref<8x640xbf16, #tpu.memory_space<vmem>>, vector<8x384xbf16>
    %c3_234 = arith.constant 3 : index
    %c4_235 = arith.constant 4 : index
    %c0_236 = arith.constant 0 : index
    %c0_237 = arith.constant 0 : index
    %195 = vector.load %arg2[%c3_234, %c4_235, %c0_236, %c0_237] : memref<4x9x8x8xbf16, #tpu.memory_space<vmem>>, vector<1x1x8x8xbf16>
    %196 = vector.shape_cast %195 : vector<1x1x8x8xbf16> to vector<8x8xbf16>
    %cst_238 = arith.constant dense<0.000000e+00> : vector<8x384xf32>
    %197 = tpu.matmul %196, %194, %cst_238 {dimension_numbers = #tpu.dot_dimension_numbers<[1], [0], [0], [1], [0, 0, 1, 1], [], []>} : vector<8x8xbf16>, vector<8x384xbf16>, vector<8x384xf32> -> vector<8x384xf32>
    %198 = arith.addf %193, %197 : vector<8x384xf32>
    %c0_239 = arith.constant 0 : index
    %c129_240 = arith.constant 129 : index
    %199 = vector.load %arg8[%c0_239, %c129_240] : memref<8x640xbf16, #tpu.memory_space<vmem>>, vector<8x384xbf16>
    %c3_241 = arith.constant 3 : index
    %c5_242 = arith.constant 5 : index
    %c0_243 = arith.constant 0 : index
    %c0_244 = arith.constant 0 : index
    %200 = vector.load %arg2[%c3_241, %c5_242, %c0_243, %c0_244] : memref<4x9x8x8xbf16, #tpu.memory_space<vmem>>, vector<1x1x8x8xbf16>
    %201 = vector.shape_cast %200 : vector<1x1x8x8xbf16> to vector<8x8xbf16>
    %cst_245 = arith.constant dense<0.000000e+00> : vector<8x384xf32>
    %202 = tpu.matmul %201, %199, %cst_245 {dimension_numbers = #tpu.dot_dimension_numbers<[1], [0], [0], [1], [0, 0, 1, 1], [], []>} : vector<8x8xbf16>, vector<8x384xbf16>, vector<8x384xf32> -> vector<8x384xf32>
    %203 = arith.addf %198, %202 : vector<8x384xf32>
    %c0_246 = arith.constant 0 : index
    %c145_247 = arith.constant 145 : index
    %204 = vector.load %arg8[%c0_246, %c145_247] : memref<8x640xbf16, #tpu.memory_space<vmem>>, vector<8x384xbf16>
    %c3_248 = arith.constant 3 : index
    %c6_249 = arith.constant 6 : index
    %c0_250 = arith.constant 0 : index
    %c0_251 = arith.constant 0 : index
    %205 = vector.load %arg2[%c3_248, %c6_249, %c0_250, %c0_251] : memref<4x9x8x8xbf16, #tpu.memory_space<vmem>>, vector<1x1x8x8xbf16>
    %206 = vector.shape_cast %205 : vector<1x1x8x8xbf16> to vector<8x8xbf16>
    %cst_252 = arith.constant dense<0.000000e+00> : vector<8x384xf32>
    %207 = tpu.matmul %206, %204, %cst_252 {dimension_numbers = #tpu.dot_dimension_numbers<[1], [0], [0], [1], [0, 0, 1, 1], [], []>} : vector<8x8xbf16>, vector<8x384xbf16>, vector<8x384xf32> -> vector<8x384xf32>
    %208 = arith.addf %203, %207 : vector<8x384xf32>
    %c0_253 = arith.constant 0 : index
    %c146_254 = arith.constant 146 : index
    %209 = vector.load %arg8[%c0_253, %c146_254] : memref<8x640xbf16, #tpu.memory_space<vmem>>, vector<8x384xbf16>
    %c3_255 = arith.constant 3 : index
    %c7_256 = arith.constant 7 : index
    %c0_257 = arith.constant 0 : index
    %c0_258 = arith.constant 0 : index
    %210 = vector.load %arg2[%c3_255, %c7_256, %c0_257, %c0_258] : memref<4x9x8x8xbf16, #tpu.memory_space<vmem>>, vector<1x1x8x8xbf16>
    %211 = vector.shape_cast %210 : vector<1x1x8x8xbf16> to vector<8x8xbf16>
    %cst_259 = arith.constant dense<0.000000e+00> : vector<8x384xf32>
    %212 = tpu.matmul %211, %209, %cst_259 {dimension_numbers = #tpu.dot_dimension_numbers<[1], [0], [0], [1], [0, 0, 1, 1], [], []>} : vector<8x8xbf16>, vector<8x384xbf16>, vector<8x384xf32> -> vector<8x384xf32>
    %213 = arith.addf %208, %212 : vector<8x384xf32>
    %c0_260 = arith.constant 0 : index
    %c147_261 = arith.constant 147 : index
    %214 = vector.load %arg8[%c0_260, %c147_261] : memref<8x640xbf16, #tpu.memory_space<vmem>>, vector<8x384xbf16>
    %c3_262 = arith.constant 3 : index
    %c8_263 = arith.constant 8 : index
    %c0_264 = arith.constant 0 : index
    %c0_265 = arith.constant 0 : index
    %215 = vector.load %arg2[%c3_262, %c8_263, %c0_264, %c0_265] : memref<4x9x8x8xbf16, #tpu.memory_space<vmem>>, vector<1x1x8x8xbf16>
    %216 = vector.shape_cast %215 : vector<1x1x8x8xbf16> to vector<8x8xbf16>
    %cst_266 = arith.constant dense<0.000000e+00> : vector<8x384xf32>
    %217 = tpu.matmul %216, %214, %cst_266 {dimension_numbers = #tpu.dot_dimension_numbers<[1], [0], [0], [1], [0, 0, 1, 1], [], []>} : vector<8x8xbf16>, vector<8x384xbf16>, vector<8x384xf32> -> vector<8x384xf32>
    %218 = arith.addf %213, %217 : vector<8x384xf32>
    %c3_267 = arith.constant 3 : index
    %c0_268 = arith.constant 0 : index
    %c0_269 = arith.constant 0 : index
    %219 = vector.load %arg3[%c3_267, %c0_268, %c0_269] : memref<4x8x1xf32, #tpu.memory_space<vmem>>, vector<1x8x1xf32>
    %220 = vector.shape_cast %219 : vector<1x8x1xf32> to vector<8x1xf32>
    %221 = vector.broadcast %220 : vector<8x1xf32> to vector<8x384xf32>
    %222 = arith.addf %218, %221 : vector<8x384xf32>
    %cst_270 = arith.constant 0.000000e+00 : f32
    %223 = vector.broadcast %cst_270 : f32 to vector<8x384xf32>
    %224 = arith.maximumf %222, %223 : vector<8x384xf32>
    %225 = arith.mulf %224, %6 : vector<8x384xf32>
    %226 = arith.truncf %225 : vector<8x384xf32> to vector<8x384xbf16>
    %c0_271 = arith.constant 0 : index
    %c128_272 = arith.constant 128 : index
    %227 = vector.load %arg8[%c0_271, %c128_272] : memref<8x640xbf16, #tpu.memory_space<vmem>>, vector<8x384xbf16>
    tpu.vector_store %arg8[%c0_271, %c128_272], %226 {strides = array<i32>} : memref<8x640xbf16, #tpu.memory_space<vmem>>, vector<8x384xbf16>,
    %c0_273 = arith.constant 0 : index
    %c109_274 = arith.constant 109 : index
    %228 = vector.load %arg8[%c0_273, %c109_274] : memref<8x640xbf16, #tpu.memory_space<vmem>>, vector<8x384xbf16>
    %c0_275 = arith.constant 0 : index
    %c0_276 = arith.constant 0 : index
    %c0_277 = arith.constant 0 : index
    %229 = vector.load %arg4[%c0_275, %c0_276, %c0_277] : memref<9x12x8xbf16, #tpu.memory_space<vmem>>, vector<1x12x8xbf16>
    %230 = vector.shape_cast %229 : vector<1x12x8xbf16> to vector<12x8xbf16>
    %cst_278 = arith.constant dense<0.000000e+00> : vector<12x384xf32>
    %231 = tpu.matmul %230, %228, %cst_278 {dimension_numbers = #tpu.dot_dimension_numbers<[1], [0], [0], [1], [0, 0, 1, 1], [], []>} : vector<12x8xbf16>, vector<8x384xbf16>, vector<12x384xf32> -> vector<12x384xf32>
    %c0_279 = arith.constant 0 : index
    %c110_280 = arith.constant 110 : index
    %232 = vector.load %arg8[%c0_279, %c110_280] : memref<8x640xbf16, #tpu.memory_space<vmem>>, vector<8x384xbf16>
    %c1_281 = arith.constant 1 : index
    %c0_282 = arith.constant 0 : index
    %c0_283 = arith.constant 0 : index
    %233 = vector.load %arg4[%c1_281, %c0_282, %c0_283] : memref<9x12x8xbf16, #tpu.memory_space<vmem>>, vector<1x12x8xbf16>
    %234 = vector.shape_cast %233 : vector<1x12x8xbf16> to vector<12x8xbf16>
    %cst_284 = arith.constant dense<0.000000e+00> : vector<12x384xf32>
    %235 = tpu.matmul %234, %232, %cst_284 {dimension_numbers = #tpu.dot_dimension_numbers<[1], [0], [0], [1], [0, 0, 1, 1], [], []>} : vector<12x8xbf16>, vector<8x384xbf16>, vector<12x384xf32> -> vector<12x384xf32>
    %236 = arith.addf %231, %235 : vector<12x384xf32>
    %c0_285 = arith.constant 0 : index
    %c111_286 = arith.constant 111 : index
    %237 = vector.load %arg8[%c0_285, %c111_286] : memref<8x640xbf16, #tpu.memory_space<vmem>>, vector<8x384xbf16>
    %c2_287 = arith.constant 2 : index
    %c0_288 = arith.constant 0 : index
    %c0_289 = arith.constant 0 : index
    %238 = vector.load %arg4[%c2_287, %c0_288, %c0_289] : memref<9x12x8xbf16, #tpu.memory_space<vmem>>, vector<1x12x8xbf16>
    %239 = vector.shape_cast %238 : vector<1x12x8xbf16> to vector<12x8xbf16>
    %cst_290 = arith.constant dense<0.000000e+00> : vector<12x384xf32>
    %240 = tpu.matmul %239, %237, %cst_290 {dimension_numbers = #tpu.dot_dimension_numbers<[1], [0], [0], [1], [0, 0, 1, 1], [], []>} : vector<12x8xbf16>, vector<8x384xbf16>, vector<12x384xf32> -> vector<12x384xf32>
    %241 = arith.addf %236, %240 : vector<12x384xf32>
    %c0_291 = arith.constant 0 : index
    %c127_292 = arith.constant 127 : index
    %242 = vector.load %arg8[%c0_291, %c127_292] : memref<8x640xbf16, #tpu.memory_space<vmem>>, vector<8x384xbf16>
    %c3_293 = arith.constant 3 : index
    %c0_294 = arith.constant 0 : index
    %c0_295 = arith.constant 0 : index
    %243 = vector.load %arg4[%c3_293, %c0_294, %c0_295] : memref<9x12x8xbf16, #tpu.memory_space<vmem>>, vector<1x12x8xbf16>
    %244 = vector.shape_cast %243 : vector<1x12x8xbf16> to vector<12x8xbf16>
    %cst_296 = arith.constant dense<0.000000e+00> : vector<12x384xf32>
    %245 = tpu.matmul %244, %242, %cst_296 {dimension_numbers = #tpu.dot_dimension_numbers<[1], [0], [0], [1], [0, 0, 1, 1], [], []>} : vector<12x8xbf16>, vector<8x384xbf16>, vector<12x384xf32> -> vector<12x384xf32>
    %246 = arith.addf %241, %245 : vector<12x384xf32>
    %c0_297 = arith.constant 0 : index
    %c128_298 = arith.constant 128 : index
    %247 = vector.load %arg8[%c0_297, %c128_298] : memref<8x640xbf16, #tpu.memory_space<vmem>>, vector<8x384xbf16>
    %c4_299 = arith.constant 4 : index
    %c0_300 = arith.constant 0 : index
    %c0_301 = arith.constant 0 : index
    %248 = vector.load %arg4[%c4_299, %c0_300, %c0_301] : memref<9x12x8xbf16, #tpu.memory_space<vmem>>, vector<1x12x8xbf16>
    %249 = vector.shape_cast %248 : vector<1x12x8xbf16> to vector<12x8xbf16>
    %cst_302 = arith.constant dense<0.000000e+00> : vector<12x384xf32>
    %250 = tpu.matmul %249, %247, %cst_302 {dimension_numbers = #tpu.dot_dimension_numbers<[1], [0], [0], [1], [0, 0, 1, 1], [], []>} : vector<12x8xbf16>, vector<8x384xbf16>, vector<12x384xf32> -> vector<12x384xf32>
    %251 = arith.addf %246, %250 : vector<12x384xf32>
    %c0_303 = arith.constant 0 : index
    %c129_304 = arith.constant 129 : index
    %252 = vector.load %arg8[%c0_303, %c129_304] : memref<8x640xbf16, #tpu.memory_space<vmem>>, vector<8x384xbf16>
    %c5_305 = arith.constant 5 : index
    %c0_306 = arith.constant 0 : index
    %c0_307 = arith.constant 0 : index
    %253 = vector.load %arg4[%c5_305, %c0_306, %c0_307] : memref<9x12x8xbf16, #tpu.memory_space<vmem>>, vector<1x12x8xbf16>
    %254 = vector.shape_cast %253 : vector<1x12x8xbf16> to vector<12x8xbf16>
    %cst_308 = arith.constant dense<0.000000e+00> : vector<12x384xf32>
    %255 = tpu.matmul %254, %252, %cst_308 {dimension_numbers = #tpu.dot_dimension_numbers<[1], [0], [0], [1], [0, 0, 1, 1], [], []>} : vector<12x8xbf16>, vector<8x384xbf16>, vector<12x384xf32> -> vector<12x384xf32>
    %256 = arith.addf %251, %255 : vector<12x384xf32>
    %c0_309 = arith.constant 0 : index
    %c145_310 = arith.constant 145 : index
    %257 = vector.load %arg8[%c0_309, %c145_310] : memref<8x640xbf16, #tpu.memory_space<vmem>>, vector<8x384xbf16>
    %c6_311 = arith.constant 6 : index
    %c0_312 = arith.constant 0 : index
    %c0_313 = arith.constant 0 : index
    %258 = vector.load %arg4[%c6_311, %c0_312, %c0_313] : memref<9x12x8xbf16, #tpu.memory_space<vmem>>, vector<1x12x8xbf16>
    %259 = vector.shape_cast %258 : vector<1x12x8xbf16> to vector<12x8xbf16>
    %cst_314 = arith.constant dense<0.000000e+00> : vector<12x384xf32>
    %260 = tpu.matmul %259, %257, %cst_314 {dimension_numbers = #tpu.dot_dimension_numbers<[1], [0], [0], [1], [0, 0, 1, 1], [], []>} : vector<12x8xbf16>, vector<8x384xbf16>, vector<12x384xf32> -> vector<12x384xf32>
    %261 = arith.addf %256, %260 : vector<12x384xf32>
    %c0_315 = arith.constant 0 : index
    %c146_316 = arith.constant 146 : index
    %262 = vector.load %arg8[%c0_315, %c146_316] : memref<8x640xbf16, #tpu.memory_space<vmem>>, vector<8x384xbf16>
    %c7_317 = arith.constant 7 : index
    %c0_318 = arith.constant 0 : index
    %c0_319 = arith.constant 0 : index
    %263 = vector.load %arg4[%c7_317, %c0_318, %c0_319] : memref<9x12x8xbf16, #tpu.memory_space<vmem>>, vector<1x12x8xbf16>
    %264 = vector.shape_cast %263 : vector<1x12x8xbf16> to vector<12x8xbf16>
    %cst_320 = arith.constant dense<0.000000e+00> : vector<12x384xf32>
    %265 = tpu.matmul %264, %262, %cst_320 {dimension_numbers = #tpu.dot_dimension_numbers<[1], [0], [0], [1], [0, 0, 1, 1], [], []>} : vector<12x8xbf16>, vector<8x384xbf16>, vector<12x384xf32> -> vector<12x384xf32>
    %266 = arith.addf %261, %265 : vector<12x384xf32>
    %c0_321 = arith.constant 0 : index
    %c147_322 = arith.constant 147 : index
    %267 = vector.load %arg8[%c0_321, %c147_322] : memref<8x640xbf16, #tpu.memory_space<vmem>>, vector<8x384xbf16>
    %c8_323 = arith.constant 8 : index
    %c0_324 = arith.constant 0 : index
    %c0_325 = arith.constant 0 : index
    %268 = vector.load %arg4[%c8_323, %c0_324, %c0_325] : memref<9x12x8xbf16, #tpu.memory_space<vmem>>, vector<1x12x8xbf16>
    %269 = vector.shape_cast %268 : vector<1x12x8xbf16> to vector<12x8xbf16>
    %cst_326 = arith.constant dense<0.000000e+00> : vector<12x384xf32>
    %270 = tpu.matmul %269, %267, %cst_326 {dimension_numbers = #tpu.dot_dimension_numbers<[1], [0], [0], [1], [0, 0, 1, 1], [], []>} : vector<12x8xbf16>, vector<8x384xbf16>, vector<12x384xf32> -> vector<12x384xf32>
    %271 = arith.addf %266, %270 : vector<12x384xf32>
    %c0_327 = arith.constant 0 : index
    %c0_328 = arith.constant 0 : index
    %272 = vector.load %arg5[%c0_327, %c0_328] : memref<12x1xf32, #tpu.memory_space<vmem>>, vector<12x1xf32>
    %273 = vector.broadcast %272 : vector<12x1xf32> to vector<12x384xf32>
    %274 = arith.addf %271, %273 : vector<12x384xf32>
    %c0_329 = arith.constant 0 : index
    %c0_330 = arith.constant 0 : index
    %c0_331 = arith.constant 0 : index
    %275 = vector.load %arg7[%c0_329, %c0_330, %c0_331] : memref<1x12x384xf32, #tpu.memory_space<vmem>>, vector<1x12x384xf32>
    %276 = vector.shape_cast %275 : vector<1x12x384xf32> to vector<12x384xf32>
    %277 = vector.shape_cast %274 : vector<12x384xf32> to vector<1x12x384xf32>
    tpu.vector_store %arg7[%c0_329, %c0_330, %c0_331], %277 {strides = array<i32>} : memref<1x12x384xf32, #tpu.memory_space<vmem>>, vector<1x12x384xf32>,
    return
  }
  func.func @transform_0(%arg0: i32) -> (i32, i32, i32) {
    %c0_i32 = arith.constant 0 : i32
    %c0_i32_0 = arith.constant 0 : i32
    %c0_i32_1 = arith.constant 0 : i32
    return %arg0, %c0_i32, %c0_i32_0 : i32, i32, i32
  }
  func.func @transform_1(%arg0: i32) -> (i32, i32, i32, i32) {
    %c0_i32 = arith.constant 0 : i32
    %c0_i32_0 = arith.constant 0 : i32
    %c0_i32_1 = arith.constant 0 : i32
    %c0_i32_2 = arith.constant 0 : i32
    %c0_i32_3 = arith.constant 0 : i32
    return %c0_i32, %c0_i32_0, %c0_i32_1, %c0_i32_2 : i32, i32, i32, i32
  }
  func.func @transform_2(%arg0: i32) -> (i32, i32, i32) {
    %c0_i32 = arith.constant 0 : i32
    %c0_i32_0 = arith.constant 0 : i32
    %c0_i32_1 = arith.constant 0 : i32
    %c0_i32_2 = arith.constant 0 : i32
    return %c0_i32, %c0_i32_0, %c0_i32_1 : i32, i32, i32
  }
  func.func @transform_3(%arg0: i32) -> (i32, i32, i32) {
    %c0_i32 = arith.constant 0 : i32
    %c0_i32_0 = arith.constant 0 : i32
    %c0_i32_1 = arith.constant 0 : i32
    %c0_i32_2 = arith.constant 0 : i32
    return %c0_i32, %c0_i32_0, %c0_i32_1 : i32, i32, i32
  }
  func.func @transform_4(%arg0: i32) -> (i32, i32) {
    %c0_i32 = arith.constant 0 : i32
    %c0_i32_0 = arith.constant 0 : i32
    %c0_i32_1 = arith.constant 0 : i32
    return %c0_i32, %c0_i32_0 : i32, i32
  }
  func.func @transform_5(%arg0: i32) -> (i32, i32) {
    %c0_i32 = arith.constant 0 : i32
    %c0_i32_0 = arith.constant 0 : i32
    %c0_i32_1 = arith.constant 0 : i32
    return %c0_i32, %c0_i32_0 : i32, i32
  }
  func.func @transform_6(%arg0: i32) -> (i32, i32, i32) {
    %c0_i32 = arith.constant 0 : i32
    %c0_i32_0 = arith.constant 0 : i32
    %c0_i32_1 = arith.constant 0 : i32
    return %arg0, %c0_i32, %c0_i32_0 : i32, i32, i32
  }
}

</mosaic_0001>

<llo_original>
// kernel: classification_head.1
$region0: #{classification_head.1}
  #allocation0 [shape = 'u32[]', space=smem, size = 0x4, offset = 0x4, fixed_abs, tag = 'smem constant byte address 0x4 - core index']
  #allocation1 [shape = 'u32[144,128]{1,0:T(1,128)}', space=vmem, size = 0x12000, scoped, tag = 'internal scratch']
  #allocation2 [shape = 'bf16[8,640]{1,0:T(8,128)(2,1)}', space=vmem, size = 0x2800, scoped, tag = 'scratch operand']
  %s0 = inlined_call_operand.vmem [shape: bf16[2,8,640], index: 0, kind: input, shape index: {}]
  %s1 = inlined_call_operand.vmem [shape: bf16[4,9,8,8], index: 1, kind: input, shape index: {}]
  %s2 = inlined_call_operand.vmem [shape: f32[4,8,1], index: 2, kind: input, shape index: {}]
  %s3 = inlined_call_operand.vmem [shape: bf16[9,12,8], index: 3, kind: input, shape index: {}]
  %s4 = inlined_call_operand.vmem [shape: f32[12,1], index: 4, kind: input, shape index: {}]
  %s5 = inlined_call_operand.vmem [shape: f32[1,384], index: 5, kind: input, shape index: {}]
  %s6 = inlined_call_operand.vmem [shape: f32[2,12,384], index: 6, kind: output, shape index: {}]
  %s7 = sld [smem:[#allocation0]]
  $region57: #{classification_head.1} parent=0
    _
  %s9 = ssub.s32 1, %s7
  %s10 = scalar_select 0, %s9, %s7
  loop: start=0, step=1, limit=4
  $region2: #{classification_head.1} parent=0 // loop_pre_header
    _
  $region3: #{classification_head.1} parent=0 // loop_header
    %s12 = sphi 0, %s16
    %p13 = scmp.ge.s32.totalorder %s12, 4
    %s22 = sphi 0, %s24
    %s25 = sphi 0, %s22
    %s26 = sphi 0, %s25
    %s42 = sphi 0, %s26
    %s46 = sphi 0, %s46
    %s48 = sphi 0, %s46
    %s49 = sphi 0, %s48
    %s63 = sphi 0, %s49
    %s67 = sphi 0, %s67
    %s69 = sphi 0, %s67
    %s70 = sphi 0, %s69
    %s84 = sphi 0, %s70
    %s88 = sphi 0, %s88
    %s90 = sphi 0, %s88
    %s91 = sphi 0, %s90
    %s105 = sphi 0, %s91
    %s109 = sphi 0, %s109
    %s111 = sphi 0, %s109
    %s112 = sphi 0, %s111
    %s126 = sphi 0, %s112
    %s130 = sphi 0, %s130
    %s132 = sphi 0, %s130
    %s133 = sphi 0, %s132
    %s147 = sphi 0, %s133
    %s153 = sphi 0, %s155
    %s156 = sphi 0, %s153
    %s157 = sphi 0, %s156
    %s173 = sphi 0, %s157
  $region4: #{classification_head.1} parent=0 // loop_header_branch
    %15 = sbr.rel (%p13) target = $region8
  $region5: #{classification_head.1} parent=0 // loop_body
    %s17 = ssub.s32 %s12, 1
    %s18 = ssub.s32 %s12, 2
    %s19 = sadd.s32 %s12, 1
    %s20 = ssub.s32 %s12, %s19
    %p21 = scmp.eq.s32.totalorder %s20, 0
    %s23 = sadd.s32 %s22, 1
    %s24 = scalar_select %p21, %s22, %s23
    %p27 = pneg %p21
    %p28 = scmp.eq.s32.totalorder %s12, 1
    %p29 = por %p27, %p28
    %p30 = scmp.ne.s32.totalorder %s22, %s25
    %p31 = scmp.eq.s32.totalorder %s12, 0
    %p32 = por %p30, %p31
    %p33 = scmp.ne.s32.totalorder %s22, %s25
    %p34 = scmp.eq.s32.totalorder %s17, 1
    %p35 = por %p33, %p34
    %p36 = scmp.ne.s32.totalorder %s25, %s26
    %p37 = scmp.eq.s32.totalorder %s17, 0
    %p38 = por %p36, %p37
    %p39 = scmp.ne.s32.totalorder %s25, %s26
    %p40 = scmp.eq.s32.totalorder %s18, 1
    %p41 = por %p39, %p40
    %p43 = scmp.ne.s32.totalorder %s26, %s42
    %p44 = scmp.eq.s32.totalorder %s18, 0
    %p45 = por %p43, %p44
    %s47 = sadd.s32 %s46, 1
    %p50 = scmp.eq.s32.totalorder %s12, 1
    %p51 = scmp.ne.s32.totalorder %s46, %s48
    %p52 = scmp.eq.s32.totalorder %s12, 0
    %p53 = por %p51, %p52
    %p54 = scmp.ne.s32.totalorder %s46, %s48
    %p55 = scmp.eq.s32.totalorder %s17, 1
    %p56 = por %p54, %p55
    %p57 = scmp.ne.s32.totalorder %s48, %s49
    %p58 = scmp.eq.s32.totalorder %s17, 0
    %p59 = por %p57, %p58
    %p60 = scmp.ne.s32.totalorder %s48, %s49
    %p61 = scmp.eq.s32.totalorder %s18, 1
    %p62 = por %p60, %p61
    %p64 = scmp.ne.s32.totalorder %s49, %s63
    %p65 = scmp.eq.s32.totalorder %s18, 0
    %p66 = por %p64, %p65
    %s68 = sadd.s32 %s67, 1
    %p71 = scmp.eq.s32.totalorder %s12, 1
    %p72 = scmp.ne.s32.totalorder %s67, %s69
    %p73 = scmp.eq.s32.totalorder %s12, 0
    %p74 = por %p72, %p73
    %p75 = scmp.ne.s32.totalorder %s67, %s69
    %p76 = scmp.eq.s32.totalorder %s17, 1
    %p77 = por %p75, %p76
    %p78 = scmp.ne.s32.totalorder %s69, %s70
    %p79 = scmp.eq.s32.totalorder %s17, 0
    %p80 = por %p78, %p79
    %p81 = scmp.ne.s32.totalorder %s69, %s70
    %p82 = scmp.eq.s32.totalorder %s18, 1
    %p83 = por %p81, %p82
    %p85 = scmp.ne.s32.totalorder %s70, %s84
    %p86 = scmp.eq.s32.totalorder %s18, 0
    %p87 = por %p85, %p86
    %s89 = sadd.s32 %s88, 1
    %p92 = scmp.eq.s32.totalorder %s12, 1
    %p93 = scmp.ne.s32.totalorder %s88, %s90
    %p94 = scmp.eq.s32.totalorder %s12, 0
    %p95 = por %p93, %p94
    %p96 = scmp.ne.s32.totalorder %s88, %s90
    %p97 = scmp.eq.s32.totalorder %s17, 1
    %p98 = por %p96, %p97
    %p99 = scmp.ne.s32.totalorder %s90, %s91
    %p100 = scmp.eq.s32.totalorder %s17, 0
    %p101 = por %p99, %p100
    %p102 = scmp.ne.s32.totalorder %s90, %s91
    %p103 = scmp.eq.s32.totalorder %s18, 1
    %p104 = por %p102, %p103
    %p106 = scmp.ne.s32.totalorder %s91, %s105
    %p107 = scmp.eq.s32.totalorder %s18, 0
    %p108 = por %p106, %p107
    %s110 = sadd.s32 %s109, 1
    %p113 = scmp.eq.s32.totalorder %s12, 1
    %p114 = scmp.ne.s32.totalorder %s109, %s111
    %p115 = scmp.eq.s32.totalorder %s12, 0
    %p116 = por %p114, %p115
    %p117 = scmp.ne.s32.totalorder %s109, %s111
    %p118 = scmp.eq.s32.totalorder %s17, 1
    %p119 = por %p117, %p118
    %p120 = scmp.ne.s32.totalorder %s111, %s112
    %p121 = scmp.eq.s32.totalorder %s17, 0
    %p122 = por %p120, %p121
    %p123 = scmp.ne.s32.totalorder %s111, %s112
    %p124 = scmp.eq.s32.totalorder %s18, 1
    %p125 = por %p123, %p124
    %p127 = scmp.ne.s32.totalorder %s112, %s126
    %p128 = scmp.eq.s32.totalorder %s18, 0
    %p129 = por %p127, %p128
    %s131 = sadd.s32 %s130, 1
    %p134 = scmp.eq.s32.totalorder %s12, 1
    %p135 = scmp.ne.s32.totalorder %s130, %s132
    %p136 = scmp.eq.s32.totalorder %s12, 0
    %p137 = por %p135, %p136
    %p138 = scmp.ne.s32.totalorder %s130, %s132
    %p139 = scmp.eq.s32.totalorder %s17, 1
    %p140 = por %p138, %p139
    %p141 = scmp.ne.s32.totalorder %s132, %s133
    %p142 = scmp.eq.s32.totalorder %s17, 0
    %p143 = por %p141, %p142
    %p144 = scmp.ne.s32.totalorder %s132, %s133
    %p145 = scmp.eq.s32.totalorder %s18, 1
    %p146 = por %p144, %p145
    %p148 = scmp.ne.s32.totalorder %s133, %s147
    %p149 = scmp.eq.s32.totalorder %s18, 0
    %p150 = por %p148, %p149
    %s151 = ssub.s32 %s12, %s19
    %p152 = scmp.eq.s32.totalorder %s151, 0
    %s154 = sadd.s32 %s153, 1
    %s155 = scalar_select %p152, %s153, %s154
    %p158 = pneg %p152
    %p159 = scmp.eq.s32.totalorder %s12, 1
    %p160 = por %p158, %p159
    %p161 = scmp.ne.s32.totalorder %s153, %s156
    %p162 = scmp.eq.s32.totalorder %s12, 0
    %p163 = por %p161, %p162
    %p164 = scmp.ne.s32.totalorder %s153, %s156
    %p165 = scmp.eq.s32.totalorder %s17, 1
    %p166 = por %p164, %p165
    %p167 = scmp.ne.s32.totalorder %s156, %s157
    %p168 = scmp.eq.s32.totalorder %s17, 0
    %p169 = por %p167, %p168
    %p170 = scmp.ne.s32.totalorder %s156, %s157
    %p171 = scmp.eq.s32.totalorder %s18, 1
    %p172 = por %p170, %p171
    %p174 = scmp.ne.s32.totalorder %s157, %s173
    %p175 = scmp.eq.s32.totalorder %s18, 0
    %p176 = por %p174, %p175
    %p177 = scmp.le.s32.totalorder 1, %s12
    %p178 = scmp.lt.s32.totalorder %s12, 3
    %p179 = pnand %p177, %p178
    %p180 = pneg %p179
    // Predicated region
    $region9: #{classification_head.1} parent=5 // pred_check
      _
    $region10: #{classification_head.1} parent=5 // pred_check_branch
      %182 = sbr.rel (%p179) target = $region12
    $region11: #{classification_head.1} parent=5 // pred_region
      %s183 = ssub.s32 %s12, 1
      // Predicated region
      $region13: #{classification_head.1} parent=11 // pred_check
        %p184 = pneg %p59
      $region14: #{classification_head.1} parent=11 // pred_check_branch
        %186 = sbr.rel (%p184) target = $region16
      $region15: #{classification_head.1} parent=11 // pred_region
        _
      $region16: #{classification_head.1} parent=11 // pred_fallthru
        _
      // Predicated region
      $region17: #{classification_head.1} parent=11 // pred_check
        %p187 = pneg %p80
      $region18: #{classification_head.1} parent=11 // pred_check_branch
        %189 = sbr.rel (%p187) target = $region20
      $region19: #{classification_head.1} parent=11 // pred_region
        _
      $region20: #{classification_head.1} parent=11 // pred_fallthru
        _
      // Predicated region
      $region21: #{classification_head.1} parent=11 // pred_check
        %p190 = pneg %p101
      $region22: #{classification_head.1} parent=11 // pred_check_branch
        %192 = sbr.rel (%p190) target = $region24
      $region23: #{classification_head.1} parent=11 // pred_region
        _
      $region24: #{classification_head.1} parent=11 // pred_fallthru
        _
      // Predicated region
      $region25: #{classification_head.1} parent=11 // pred_check
        %p193 = pneg %p122
      $region26: #{classification_head.1} parent=11 // pred_check_branch
        %195 = sbr.rel (%p193) target = $region28
      $region27: #{classification_head.1} parent=11 // pred_region
        _
      $region28: #{classification_head.1} parent=11 // pred_fallthru
        _
      // Predicated region
      $region29: #{classification_head.1} parent=11 // pred_check
        %p196 = pneg %p143
      $region30: #{classification_head.1} parent=11 // pred_check_branch
        %198 = sbr.rel (%p196) target = $region32
      $region31: #{classification_head.1} parent=11 // pred_region
        _
      $region32: #{classification_head.1} parent=11 // pred_fallthru
        _
    $region12: #{classification_head.1} parent=5 // pred_fallthru
      _
    %p199 = scmp.lt.s32.totalorder %s12, 2
    // Predicated region
    $region33: #{classification_head.1} parent=5 // pred_check
      %p200 = pneg %p199
    $region34: #{classification_head.1} parent=5 // pred_check_branch
      %202 = sbr.rel (%p200) target = $region36
    $region35: #{classification_head.1} parent=5 // pred_region
      // Predicated region
      $region37: #{classification_head.1} parent=35 // pred_check
        %p203 = pneg %p32
      $region38: #{classification_head.1} parent=35 // pred_check_branch
        %205 = sbr.rel (%p203) target = $region40
      $region39: #{classification_head.1} parent=35 // pred_region
        %p206 = scmp.lt.s32.totalorder %s12, 1
        %s207 = scalar_select %p206, %s12, 1
        %s208 = smul.addr %s207, 5
        %s209 = smul.addr %s208, 4
        %s210 = scalar_lea.vmem %s0, %s209
      $region40: #{classification_head.1} parent=35 // pred_fallthru
        _
    $region36: #{classification_head.1} parent=5 // pred_fallthru
      _
    %p211 = scmp.le.s32.totalorder 1, %s12
    %p212 = scmp.lt.s32.totalorder %s12, 3
    %p213 = pnand %p211, %p212
    %p214 = pneg %p213
    // Predicated region
    $region41: #{classification_head.1} parent=5 // pred_check
      _
    $region42: #{classification_head.1} parent=5 // pred_check_branch
      %216 = sbr.rel (%p213) target = $region44
    $region43: #{classification_head.1} parent=5 // pred_region
      %s217 = ssub.s32 %s12, 1
      %p218 = scmp.lt.s32.totalorder %s17, 1
      %s219 = scalar_select %p218, %s17, 1
      %s220 = smul.addr %s219, 5
      %s221 = smul.addr %s220, 4
      %s222 = scalar_lea.vmem %s0, %s221
      %p223 = pneg %p38
      %p224 = pneg %p35
      %p225 = pneg %p59
      %p226 = pneg %p56
      %p227 = pneg %p80
      %p228 = pneg %p77
      %p229 = pneg %p101
      %p230 = pneg %p98
      %p231 = pneg %p122
      %p232 = pneg %p119
      %p233 = pneg %p143
      %p234 = pneg %p140
      %p235 = pneg %p169
      %p236 = pneg %p166
      %p237 = scmp.lt.s32.totalorder %s17, 1
      %s238 = scalar_select %p237, %s17, 1
      %s239 = smul.addr %s238, 6
      %s240 = smul.addr %s239, 8
      %s241 = scalar_lea.vmem %s6, %s240
      %p242 = scmp.lt.s32.totalorder %s17, 1
      %s243 = scalar_select %p242, %s17, 1
      %s244 = smul.addr %s243, 5
      %s245 = smul.addr %s244, 4
      %s246 = scalar_lea.vmem %s0, %s245
      %p247 = scmp.lt.s32.totalorder %s17, 1
      %s248 = scalar_select %p247, %s17, 1
      %s249 = smul.addr %s248, 6
      %s250 = smul.addr %s249, 8
      %s251 = scalar_lea.vmem %s6, %s250
      %253 = vst [vmem:[#allocation2] sm:$0xf] 0
      %254 = vst [vmem:[#allocation2 + $0x10] sm:$0xf] 0
      %v255 = vld [vmem:[%s5] sm:$0x7]
      %v257 = vlaneseq
      %v258 = vshrl.u32 %v257, 7
      %v259 = vsub.s32 0, %v258
      %v260 = vrot.slane %v255, %v259
      %v261 = vlaneseq
      %v262 = vshrl.u32 %v261, 7
      %v263 = vsub.s32 1, %v262
      %v264 = vrot.slane %v255, %v263
      %v265 = vlaneseq
      %v266 = vshrl.u32 %v265, 7
      %v267 = vsub.s32 2, %v266
      %v268 = vrot.slane %v255, %v267
      %v272 = vld [vmem:[%s246] sm:$0xff]
      %v273 = vld [vmem:[%s246 + $0x8] sm:$0xff]
      %v274 = vld [vmem:[%s1] sm:$0xf]
      %s275 = scalar_lea.vmem %s1, 4
      %v276 = vld [vmem:[%s275] sm:$0xf]
      %v279 = vunpack.c.l.b16 %v272
      %v280 = vunpack.c.h.b16 %v272
      %v281 = vunpack.c.l.b16 %v273
      %v282 = vunpack.c.h.b16 %v273
      %v283 = vpack.c.b16 %v279, %v279
      %v284 = vpack.c.b16 %v280, %v280
      %v285 = vpack.c.b16 %v281, %v281
      %v286 = vpack.c.b16 %v282, %v282
      %287 = vrot.lane.b32.xlu0 %v283, 18
      %v288 = vpop.permute.xlu0 %287
      %289 = vrot.lane.b32.xlu0 %v284, 18
      %v290 = vpop.permute.xlu0 %289
      %291 = vrot.lane.b32.xlu0 %v285, 18
      %v292 = vpop.permute.xlu0 %291
      %293 = vrot.lane.b32.xlu0 %v286, 18
      %v294 = vpop.permute.xlu0 %293
      %vm295 = vcmask 146432
      %v296 = vsel %vm295, %v288, %v290
      %v297 = vsel %vm295, %v290, %v292
      %v298 = vsel %vm295, %v292, %v294
      %vm299 = vcmask 64512
      %v301 = vsel %vm299, %v276, 0
      %vm303 = vcmask 1043456
      %v305 = vsel %vm303, %v296, 0
      %v308 = vsel %vm303, %v297, 0
      %v311 = vsel %vm303, %v298, 0
      %313 = vmatprep.subr.bf16.mxu0 %v308
      %314 = vmatpush1.bf16.msra.mxu0 %v305
      %315 = vmatprep.subr.bf16.mxu0 0
      %316 = vmatpush1.bf16.msra.mxu0 0
      %317 = vmatprep.subr.bf16.mxu0 0
      %318 = vmatpush1.bf16.msra.mxu0 0
      %319 = vmatprep.subr.bf16.mxu0 0
      %320 = vmatpush1.bf16.msra.mxu0 0
      %321 = vmatprep.subr.bf16.mxu0 0
      %322 = vmatpush1.bf16.msra.mxu0 0
      %323 = vmatprep.subr.bf16.mxu0 0
      %324 = vmatpush1.bf16.msra.mxu0 0
      %325 = vmatprep.subr.bf16.mxu0 0
      %326 = vmatpush1.bf16.msra.mxu0 0
      %327 = vmatprep.subr.bf16.mxu0 0
      %328 = vmatpush1.bf16.msra.mxu0 0
      %329 = vmatprep.subr.bf16.mxu0 0
      %330 = vmatpush1.bf16.msra.mxu0 0
      %331 = vmatprep.subr.bf16.mxu0 0
      %332 = vmatpush1.bf16.msra.mxu0 0
      %333 = vmatprep.subr.bf16.mxu0 0
      %334 = vmatpush1.bf16.msra.mxu0 0
      %335 = vmatprep.subr.bf16.mxu0 0
      %336 = vmatpush1.bf16.msra.mxu0 0
      %337 = vmatprep.subr.bf16.mxu0 0
      %338 = vmatpush1.bf16.msra.mxu0 0
      %339 = vmatprep.subr.bf16.mxu0 0
      %340 = vmatpush1.bf16.msra.mxu0 0
      %341 = vmatprep.subr.bf16.mxu0 0
      %342 = vmatpush1.bf16.msra.mxu0 0
      %343 = vmatprep.subr.bf16.mxu0 0
      %344 = vmatpush1.bf16.msra.mxu0 0
      %345 = vmatprep.mubr.bf16.mxu0 0
      %346 = vmatmul.mubr.bf16.gmra.mrb[0].mxu0 %v301
      %v347 = vpop.f32.mrb[0].mxu0
      %v348 = vadd.f32 0.0, %v347
      %v349 = vpop.f32.mrb[0].mxu0
      %v350 = vadd.f32 0.0, %v349
      %v351 = vpop.f32.mrb[0].mxu0
      %v352 = vpop.f32.mrb[0].mxu0
      %353 = vdwg.mxu0
      %354 = vmatprep.subr.bf16.mxu0 0
      %355 = vmatpush1.bf16.msra.mxu0 %v311
      %356 = vmatprep.subr.bf16.mxu0 0
      %357 = vmatpush1.bf16.msra.mxu0 0
      %358 = vmatprep.subr.bf16.mxu0 0
      %359 = vmatpush1.bf16.msra.mxu0 0
      %360 = vmatprep.subr.bf16.mxu0 0
      %361 = vmatpush1.bf16.msra.mxu0 0
      %362 = vmatprep.subr.bf16.mxu0 0
      %363 = vmatpush1.bf16.msra.mxu0 0
      %364 = vmatprep.subr.bf16.mxu0 0
      %365 = vmatpush1.bf16.msra.mxu0 0
      %366 = vmatprep.subr.bf16.mxu0 0
      %367 = vmatpush1.bf16.msra.mxu0 0
      %368 = vmatprep.subr.bf16.mxu0 0
      %369 = vmatpush1.bf16.msra.mxu0 0
      %370 = vmatprep.subr.bf16.mxu0 0
      %371 = vmatpush1.bf16.msra.mxu0 0
      %372 = vmatprep.subr.bf16.mxu0 0
      %373 = vmatpush1.bf16.msra.mxu0 0
      %374 = vmatprep.subr.bf16.mxu0 0
      %375 = vmatpush1.bf16.msra.mxu0 0
      %376 = vmatprep.subr.bf16.mxu0 0
      %377 = vmatpush1.bf16.msra.mxu0 0
      %378 = vmatprep.subr.bf16.mxu0 0
      %379 = vmatpush1.bf16.msra.mxu0 0
      %380 = vmatprep.subr.bf16.mxu0 0
      %381 = vmatpush1.bf16.msra.mxu0 0
      %382 = vmatprep.subr.bf16.mxu0 0
      %383 = vmatpush1.bf16.msra.mxu0 0
      %384 = vmatprep.subr.bf16.mxu0 0
      %385 = vmatpush1.bf16.msra.mxu0 0
      %386 = vmatprep.mubr.bf16.mxu0 0
      %387 = vmatmul.mubr.bf16.gmra.mrb[0].mxu0 %v301
      %v388 = vpop.f32.mrb[0].mxu0
      %v389 = vadd.f32 0.0, %v388
      %v390 = vpop.f32.mrb[0].mxu0
      %v391 = vpop.f32.mrb[0].mxu0
      %v392 = vpop.f32.mrb[0].mxu0
      %393 = vdwg.mxu0
      %394 = vrot.lane.b32.xlu0 %v283, 19
      %v395 = vpop.permute.xlu0 %394
      %396 = vrot.lane.b32.xlu0 %v284, 19
      %v397 = vpop.permute.xlu0 %396
      %398 = vrot.lane.b32.xlu0 %v285, 19
      %v399 = vpop.permute.xlu0 %398
      %400 = vrot.lane.b32.xlu0 %v286, 19
      %v401 = vpop.permute.xlu0 %400
      %vm402 = vcmask 154624
      %v403 = vsel %vm402, %v395, %v397
      %v404 = vsel %vm402, %v397, %v399
      %v405 = vsel %vm402, %v399, %v401
      %v407 = vsel %vm299, %v274, 0
      %v410 = vsel %vm303, %v403, 0
      %v413 = vsel %vm303, %v404, 0
      %v416 = vsel %vm303, %v405, 0
      %418 = vmatprep.subr.bf16.mxu0 %v413
      %419 = vmatpush1.bf16.msra.mxu0 %v410
      %420 = vmatprep.subr.bf16.mxu0 0
      %421 = vmatpush1.bf16.msra.mxu0 0
      %422 = vmatprep.subr.bf16.mxu0 0
      %423 = vmatpush1.bf16.msra.mxu0 0
      %424 = vmatprep.subr.bf16.mxu0 0
      %425 = vmatpush1.bf16.msra.mxu0 0
      %426 = vmatprep.subr.bf16.mxu0 0
      %427 = vmatpush1.bf16.msra.mxu0 0
      %428 = vmatprep.subr.bf16.mxu0 0
      %429 = vmatpush1.bf16.msra.mxu0 0
      %430 = vmatprep.subr.bf16.mxu0 0
      %431 = vmatpush1.bf16.msra.mxu0 0
      %432 = vmatprep.subr.bf16.mxu0 0
      %433 = vmatpush1.bf16.msra.mxu0 0
      %434 = vmatprep.subr.bf16.mxu0 0
      %435 = vmatpush1.bf16.msra.mxu0 0
      %436 = vmatprep.subr.bf16.mxu0 0
      %437 = vmatpush1.bf16.msra.mxu0 0
      %438 = vmatprep.subr.bf16.mxu0 0
      %439 = vmatpush1.bf16.msra.mxu0 0
      %440 = vmatprep.subr.bf16.mxu0 0
      %441 = vmatpush1.bf16.msra.mxu0 0
      %442 = vmatprep.subr.bf16.mxu0 0
      %443 = vmatpush1.bf16.msra.mxu0 0
      %444 = vmatprep.subr.bf16.mxu0 0
      %445 = vmatpush1.bf16.msra.mxu0 0
      %446 = vmatprep.subr.bf16.mxu0 0
      %447 = vmatpush1.bf16.msra.mxu0 0
      %448 = vmatprep.subr.bf16.mxu0 0
      %449 = vmatpush1.bf16.msra.mxu0 0
      %450 = vmatprep.mubr.bf16.mxu0 0
      %451 = vmatmul.mubr.bf16.gmra.mrb[0].mxu0 %v407
      %v452 = vpop.f32.mrb[0].mxu0
      %v453 = vadd.f32 %v348, %v452
      %v454 = vpop.f32.mrb[0].mxu0
      %v455 = vadd.f32 %v350, %v454
      %v456 = vpop.f32.mrb[0].mxu0
      %v457 = vpop.f32.mrb[0].mxu0
      %458 = vdwg.mxu0
      %459 = vmatprep.subr.bf16.mxu0 0
      %460 = vmatpush1.bf16.msra.mxu0 %v416
      %461 = vmatprep.subr.bf16.mxu0 0
      %462 = vmatpush1.bf16.msra.mxu0 0
      %463 = vmatprep.subr.bf16.mxu0 0
      %464 = vmatpush1.bf16.msra.mxu0 0
      %465 = vmatprep.subr.bf16.mxu0 0
      %466 = vmatpush1.bf16.msra.mxu0 0
      %467 = vmatprep.subr.bf16.mxu0 0
      %468 = vmatpush1.bf16.msra.mxu0 0
      %469 = vmatprep.subr.bf16.mxu0 0
      %470 = vmatpush1.bf16.msra.mxu0 0
      %471 = vmatprep.subr.bf16.mxu0 0
      %472 = vmatpush1.bf16.msra.mxu0 0
      %473 = vmatprep.subr.bf16.mxu0 0
      %474 = vmatpush1.bf16.msra.mxu0 0
      %475 = vmatprep.subr.bf16.mxu0 0
      %476 = vmatpush1.bf16.msra.mxu0 0
      %477 = vmatprep.subr.bf16.mxu0 0
      %478 = vmatpush1.bf16.msra.mxu0 0
      %479 = vmatprep.subr.bf16.mxu0 0
      %480 = vmatpush1.bf16.msra.mxu0 0
      %481 = vmatprep.subr.bf16.mxu0 0
      %482 = vmatpush1.bf16.msra.mxu0 0
      %483 = vmatprep.subr.bf16.mxu0 0
      %484 = vmatpush1.bf16.msra.mxu0 0
      %485 = vmatprep.subr.bf16.mxu0 0
      %486 = vmatpush1.bf16.msra.mxu0 0
      %487 = vmatprep.subr.bf16.mxu0 0
      %488 = vmatpush1.bf16.msra.mxu0 0
      %489 = vmatprep.subr.bf16.mxu0 0
      %490 = vmatpush1.bf16.msra.mxu0 0
      %491 = vmatprep.mubr.bf16.mxu0 0
      %492 = vmatmul.mubr.bf16.gmra.mrb[0].mxu0 %v407
      %v493 = vpop.f32.mrb[0].mxu0
      %v494 = vadd.f32 %v389, %v493
      %v495 = vpop.f32.mrb[0].mxu0
      %v496 = vpop.f32.mrb[0].mxu0
      %v497 = vpop.f32.mrb[0].mxu0
      %498 = vdwg.mxu0
      %s499 = scalar_lea.vmem %s1, 8
      %v500 = vld [vmem:[%s499] sm:$0xf]
      %501 = vrot.lane.b32.xlu0 %v283, 17
      %v502 = vpop.permute.xlu0 %501
      %503 = vrot.lane.b32.xlu0 %v284, 17
      %v504 = vpop.permute.xlu0 %503
      %505 = vrot.lane.b32.xlu0 %v285, 17
      %v506 = vpop.permute.xlu0 %505
      %507 = vrot.lane.b32.xlu0 %v286, 17
      %v508 = vpop.permute.xlu0 %507
      %vm509 = vcmask 138240
      %v510 = vsel %vm509, %v502, %v504
      %v511 = vsel %vm509, %v504, %v506
      %v512 = vsel %vm509, %v506, %v508
      %v514 = vsel %vm299, %v500, 0
      %v517 = vsel %vm303, %v510, 0
      %v520 = vsel %vm303, %v511, 0
      %v523 = vsel %vm303, %v512, 0
      %525 = vmatprep.subr.bf16.mxu0 %v520
      %526 = vmatpush1.bf16.msra.mxu0 %v517
      %527 = vmatprep.subr.bf16.mxu0 0
      %528 = vmatpush1.bf16.msra.mxu0 0
      %529 = vmatprep.subr.bf16.mxu0 0
      %530 = vmatpush1.bf16.msra.mxu0 0
      %531 = vmatprep.subr.bf16.mxu0 0
      %532 = vmatpush1.bf16.msra.mxu0 0
      %533 = vmatprep.subr.bf16.mxu0 0
      %534 = vmatpush1.bf16.msra.mxu0 0
      %535 = vmatprep.subr.bf16.mxu0 0
      %536 = vmatpush1.bf16.msra.mxu0 0
      %537 = vmatprep.subr.bf16.mxu0 0
      %538 = vmatpush1.bf16.msra.mxu0 0
      %539 = vmatprep.subr.bf16.mxu0 0
      %540 = vmatpush1.bf16.msra.mxu0 0
      %541 = vmatprep.subr.bf16.mxu0 0
      %542 = vmatpush1.bf16.msra.mxu0 0
      %543 = vmatprep.subr.bf16.mxu0 0
      %544 = vmatpush1.bf16.msra.mxu0 0
      %545 = vmatprep.subr.bf16.mxu0 0
      %546 = vmatpush1.bf16.msra.mxu0 0
      %547 = vmatprep.subr.bf16.mxu0 0
      %548 = vmatpush1.bf16.msra.mxu0 0
      %549 = vmatprep.subr.bf16.mxu0 0
      %550 = vmatpush1.bf16.msra.mxu0 0
      %551 = vmatprep.subr.bf16.mxu0 0
      %552 = vmatpush1.bf16.msra.mxu0 0
      %553 = vmatprep.subr.bf16.mxu0 0
      %554 = vmatpush1.bf16.msra.mxu0 0
      %555 = vmatprep.subr.bf16.mxu0 0
      %556 = vmatpush1.bf16.msra.mxu0 0
      %557 = vmatprep.mubr.bf16.mxu0 0
      %558 = vmatmul.mubr.bf16.gmra.mrb[0].mxu0 %v514
      %v559 = vpop.f32.mrb[0].mxu0
      %v560 = vadd.f32 0.0, %v559
      %v561 = vpop.f32.mrb[0].mxu0
      %v562 = vadd.f32 0.0, %v561
      %v563 = vpop.f32.mrb[0].mxu0
      %v564 = vpop.f32.mrb[0].mxu0
      %565 = vdwg.mxu0
      %566 = vmatprep.subr.bf16.mxu0 0
      %567 = vmatpush1.bf16.msra.mxu0 %v523
      %568 = vmatprep.subr.bf16.mxu0 0
      %569 = vmatpush1.bf16.msra.mxu0 0
      %570 = vmatprep.subr.bf16.mxu0 0
      %571 = vmatpush1.bf16.msra.mxu0 0
      %572 = vmatprep.subr.bf16.mxu0 0
      %573 = vmatpush1.bf16.msra.mxu0 0
      %574 = vmatprep.subr.bf16.mxu0 0
      %575 = vmatpush1.bf16.msra.mxu0 0
      %576 = vmatprep.subr.bf16.mxu0 0
      %577 = vmatpush1.bf16.msra.mxu0 0
      %578 = vmatprep.subr.bf16.mxu0 0
      %579 = vmatpush1.bf16.msra.mxu0 0
      %580 = vmatprep.subr.bf16.mxu0 0
      %581 = vmatpush1.bf16.msra.mxu0 0
      %582 = vmatprep.subr.bf16.mxu0 0
      %583 = vmatpush1.bf16.msra.mxu0 0
      %584 = vmatprep.subr.bf16.mxu0 0
      %585 = vmatpush1.bf16.msra.mxu0 0
      %586 = vmatprep.subr.bf16.mxu0 0
      %587 = vmatpush1.bf16.msra.mxu0 0
      %588 = vmatprep.subr.bf16.mxu0 0
      %589 = vmatpush1.bf16.msra.mxu0 0
      %590 = vmatprep.subr.bf16.mxu0 0
      %591 = vmatpush1.bf16.msra.mxu0 0
      %592 = vmatprep.subr.bf16.mxu0 0
      %593 = vmatpush1.bf16.msra.mxu0 0
      %594 = vmatprep.subr.bf16.mxu0 0
      %595 = vmatpush1.bf16.msra.mxu0 0
      %596 = vmatprep.subr.bf16.mxu0 0
      %597 = vmatpush1.bf16.msra.mxu0 0
      %598 = vmatprep.mubr.bf16.mxu0 0
      %599 = vmatmul.mubr.bf16.gmra.mrb[0].mxu0 %v514
      %v600 = vpop.f32.mrb[0].mxu0
      %v601 = vadd.f32 0.0, %v600
      %v602 = vpop.f32.mrb[0].mxu0
      %v603 = vpop.f32.mrb[0].mxu0
      %v604 = vpop.f32.mrb[0].mxu0
      %605 = vdwg.mxu0
      %v606 = vadd.f32 %v453, %v560
      %v607 = vadd.f32 %v455, %v562
      %v608 = vadd.f32 %v494, %v601
      %s609 = scalar_lea.vmem %s1, 12
      %v610 = vld [vmem:[%s609] sm:$0xf]
      %611 = vrot.lane.b32.xlu0 %v283, 1
      %v612 = vpop.permute.xlu0 %611
      %613 = vrot.lane.b32.xlu0 %v284, 1
      %v614 = vpop.permute.xlu0 %613
      %615 = vrot.lane.b32.xlu0 %v285, 1
      %v616 = vpop.permute.xlu0 %615
      %617 = vrot.lane.b32.xlu0 %v286, 1
      %v618 = vpop.permute.xlu0 %617
      %vm619 = vcmask 7168
      %v620 = vsel %vm619, %v612, %v614
      %v621 = vsel %vm619, %v614, %v616
      %v622 = vsel %vm619, %v616, %v618
      %v624 = vsel %vm299, %v610, 0
      %v627 = vsel %vm303, %v620, 0
      %v630 = vsel %vm303, %v621, 0
      %v633 = vsel %vm303, %v622, 0
      %635 = vmatprep.subr.bf16.mxu0 %v630
      %636 = vmatpush1.bf16.msra.mxu0 %v627
      %637 = vmatprep.subr.bf16.mxu0 0
      %638 = vmatpush1.bf16.msra.mxu0 0
      %639 = vmatprep.subr.bf16.mxu0 0
      %640 = vmatpush1.bf16.msra.mxu0 0
      %641 = vmatprep.subr.bf16.mxu0 0
      %642 = vmatpush1.bf16.msra.mxu0 0
      %643 = vmatprep.subr.bf16.mxu0 0
      %644 = vmatpush1.bf16.msra.mxu0 0
      %645 = vmatprep.subr.bf16.mxu0 0
      %646 = vmatpush1.bf16.msra.mxu0 0
      %647 = vmatprep.subr.bf16.mxu0 0
      %648 = vmatpush1.bf16.msra.mxu0 0
      %649 = vmatprep.subr.bf16.mxu0 0
      %650 = vmatpush1.bf16.msra.mxu0 0
      %651 = vmatprep.subr.bf16.mxu0 0
      %652 = vmatpush1.bf16.msra.mxu0 0
      %653 = vmatprep.subr.bf16.mxu0 0
      %654 = vmatpush1.bf16.msra.mxu0 0
      %655 = vmatprep.subr.bf16.mxu0 0
      %656 = vmatpush1.bf16.msra.mxu0 0
      %657 = vmatprep.subr.bf16.mxu0 0
      %658 = vmatpush1.bf16.msra.mxu0 0
      %659 = vmatprep.subr.bf16.mxu0 0
      %660 = vmatpush1.bf16.msra.mxu0 0
      %661 = vmatprep.subr.bf16.mxu0 0
      %662 = vmatpush1.bf16.msra.mxu0 0
      %663 = vmatprep.subr.bf16.mxu0 0
      %664 = vmatpush1.bf16.msra.mxu0 0
      %665 = vmatprep.subr.bf16.mxu0 0
      %666 = vmatpush1.bf16.msra.mxu0 0
      %667 = vmatprep.mubr.bf16.mxu0 0
      %668 = vmatmul.mubr.bf16.gmra.mrb[0].mxu0 %v624
      %v669 = vpop.f32.mrb[0].mxu0
      %v670 = vadd.f32 0.0, %v669
      %v671 = vpop.f32.mrb[0].mxu0
      %v672 = vadd.f32 0.0, %v671
      %v673 = vpop.f32.mrb[0].mxu0
      %v674 = vpop.f32.mrb[0].mxu0
      %675 = vdwg.mxu0
      %676 = vmatprep.subr.bf16.mxu0 0
      %677 = vmatpush1.bf16.msra.mxu0 %v633
      %678 = vmatprep.subr.bf16.mxu0 0
      %679 = vmatpush1.bf16.msra.mxu0 0
      %680 = vmatprep.subr.bf16.mxu0 0
      %681 = vmatpush1.bf16.msra.mxu0 0
      %682 = vmatprep.subr.bf16.mxu0 0
      %683 = vmatpush1.bf16.msra.mxu0 0
      %684 = vmatprep.subr.bf16.mxu0 0
      %685 = vmatpush1.bf16.msra.mxu0 0
      %686 = vmatprep.subr.bf16.mxu0 0
      %687 = vmatpush1.bf16.msra.mxu0 0
      %688 = vmatprep.subr.bf16.mxu0 0
      %689 = vmatpush1.bf16.msra.mxu0 0
      %690 = vmatprep.subr.bf16.mxu0 0
      %691 = vmatpush1.bf16.msra.mxu0 0
      %692 = vmatprep.subr.bf16.mxu0 0
      %693 = vmatpush1.bf16.msra.mxu0 0
      %694 = vmatprep.subr.bf16.mxu0 0
      %695 = vmatpush1.bf16.msra.mxu0 0
      %696 = vmatprep.subr.bf16.mxu0 0
      %697 = vmatpush1.bf16.msra.mxu0 0
      %698 = vmatprep.subr.bf16.mxu0 0
      %699 = vmatpush1.bf16.msra.mxu0 0
      %700 = vmatprep.subr.bf16.mxu0 0
      %701 = vmatpush1.bf16.msra.mxu0 0
      %702 = vmatprep.subr.bf16.mxu0 0
      %703 = vmatpush1.bf16.msra.mxu0 0
      %704 = vmatprep.subr.bf16.mxu0 0
      %705 = vmatpush1.bf16.msra.mxu0 0
      %706 = vmatprep.subr.bf16.mxu0 0
      %707 = vmatpush1.bf16.msra.mxu0 0
      %708 = vmatprep.mubr.bf16.mxu0 0
      %709 = vmatmul.mubr.bf16.gmra.mrb[0].mxu0 %v624
      %v710 = vpop.f32.mrb[0].mxu0
      %v711 = vadd.f32 0.0, %v710
      %v712 = vpop.f32.mrb[0].mxu0
      %v713 = vpop.f32.mrb[0].mxu0
      %v714 = vpop.f32.mrb[0].mxu0
      %715 = vdwg.mxu0
      %v716 = vadd.f32 %v606, %v670
      %v717 = vadd.f32 %v607, %v672
      %v718 = vadd.f32 %v608, %v711
      %v719 = vld [vmem:[%s246 + $0x4] sm:$0xff]
      %v720 = vld [vmem:[%s246 + $0xc] sm:$0xf]
      %s721 = scalar_lea.vmem %s1, 16
      %v722 = vld [vmem:[%s721] sm:$0xf]
      %v725 = vunpack.c.l.b16 %v719
      %v726 = vunpack.c.h.b16 %v719
      %v727 = vunpack.c.l.b16 %v720
      %v728 = vpack.c.b16 %v725, %v725
      %v729 = vpack.c.b16 %v726, %v726
      %v730 = vpack.c.b16 %v727, %v727
      %v732 = vsel %vm299, %v722, 0
      %v735 = vsel %vm303, %v728, 0
      %v738 = vsel %vm303, %v729, 0
      %v741 = vsel %vm303, %v730, 0
      %743 = vmatprep.subr.bf16.mxu0 %v738
      %744 = vmatpush1.bf16.msra.mxu0 %v735
      %745 = vmatprep.subr.bf16.mxu0 0
      %746 = vmatpush1.bf16.msra.mxu0 0
      %747 = vmatprep.subr.bf16.mxu0 0
      %748 = vmatpush1.bf16.msra.mxu0 0
      %749 = vmatprep.subr.bf16.mxu0 0
      %750 = vmatpush1.bf16.msra.mxu0 0
      %751 = vmatprep.subr.bf16.mxu0 0
      %752 = vmatpush1.bf16.msra.mxu0 0
      %753 = vmatprep.subr.bf16.mxu0 0
      %754 = vmatpush1.bf16.msra.mxu0 0
      %755 = vmatprep.subr.bf16.mxu0 0
      %756 = vmatpush1.bf16.msra.mxu0 0
      %757 = vmatprep.subr.bf16.mxu0 0
      %758 = vmatpush1.bf16.msra.mxu0 0
      %759 = vmatprep.subr.bf16.mxu0 0
      %760 = vmatpush1.bf16.msra.mxu0 0
      %761 = vmatprep.subr.bf16.mxu0 0
      %762 = vmatpush1.bf16.msra.mxu0 0
      %763 = vmatprep.subr.bf16.mxu0 0
      %764 = vmatpush1.bf16.msra.mxu0 0
      %765 = vmatprep.subr.bf16.mxu0 0
      %766 = vmatpush1.bf16.msra.mxu0 0
      %767 = vmatprep.subr.bf16.mxu0 0
      %768 = vmatpush1.bf16.msra.mxu0 0
      %769 = vmatprep.subr.bf16.mxu0 0
      %770 = vmatpush1.bf16.msra.mxu0 0
      %771 = vmatprep.subr.bf16.mxu0 0
      %772 = vmatpush1.bf16.msra.mxu0 0
      %773 = vmatprep.subr.bf16.mxu0 0
      %774 = vmatpush1.bf16.msra.mxu0 0
      %775 = vmatprep.mubr.bf16.mxu0 0
      %776 = vmatmul.mubr.bf16.gmra.mrb[0].mxu0 %v732
      %v777 = vpop.f32.mrb[0].mxu0
      %v778 = vadd.f32 0.0, %v777
      %v779 = vpop.f32.mrb[0].mxu0
      %v780 = vadd.f32 0.0, %v779
      %v781 = vpop.f32.mrb[0].mxu0
      %v782 = vpop.f32.mrb[0].mxu0
      %783 = vdwg.mxu0
      %784 = vmatprep.subr.bf16.mxu0 0
      %785 = vmatpush1.bf16.msra.mxu0 %v741
      %786 = vmatprep.subr.bf16.mxu0 0
      %787 = vmatpush1.bf16.msra.mxu0 0
      %788 = vmatprep.subr.bf16.mxu0 0
      %789 = vmatpush1.bf16.msra.mxu0 0
      %790 = vmatprep.subr.bf16.mxu0 0
      %791 = vmatpush1.bf16.msra.mxu0 0
      %792 = vmatprep.subr.bf16.mxu0 0
      %793 = vmatpush1.bf16.msra.mxu0 0
      %794 = vmatprep.subr.bf16.mxu0 0
      %795 = vmatpush1.bf16.msra.mxu0 0
      %796 = vmatprep.subr.bf16.mxu0 0
      %797 = vmatpush1.bf16.msra.mxu0 0
      %798 = vmatprep.subr.bf16.mxu0 0
      %799 = vmatpush1.bf16.msra.mxu0 0
      %800 = vmatprep.subr.bf16.mxu0 0
      %801 = vmatpush1.bf16.msra.mxu0 0
      %802 = vmatprep.subr.bf16.mxu0 0
      %803 = vmatpush1.bf16.msra.mxu0 0
      %804 = vmatprep.subr.bf16.mxu0 0
      %805 = vmatpush1.bf16.msra.mxu0 0
      %806 = vmatprep.subr.bf16.mxu0 0
      %807 = vmatpush1.bf16.msra.mxu0 0
      %808 = vmatprep.subr.bf16.mxu0 0
      %809 = vmatpush1.bf16.msra.mxu0 0
      %810 = vmatprep.subr.bf16.mxu0 0
      %811 = vmatpush1.bf16.msra.mxu0 0
      %812 = vmatprep.subr.bf16.mxu0 0
      %813 = vmatpush1.bf16.msra.mxu0 0
      %814 = vmatprep.subr.bf16.mxu0 0
      %815 = vmatpush1.bf16.msra.mxu0 0
      %816 = vmatprep.mubr.bf16.mxu0 0
      %817 = vmatmul.mubr.bf16.gmra.mrb[0].mxu0 %v732
      %v818 = vpop.f32.mrb[0].mxu0
      %v819 = vadd.f32 0.0, %v818
      %v820 = vpop.f32.mrb[0].mxu0
      %v821 = vpop.f32.mrb[0].mxu0
      %v822 = vpop.f32.mrb[0].mxu0
      %823 = vdwg.mxu0
      %v824 = vadd.f32 %v716, %v778
      %v825 = vadd.f32 %v717, %v780
      %v826 = vadd.f32 %v718, %v819
      %v827 = vld [vmem:[%s246 + $0x4] sm:$0xff]
      %v828 = vld [vmem:[%s246 + $0xc] sm:$0xff]
      %s829 = scalar_lea.vmem %s1, 20
      %v830 = vld [vmem:[%s829] sm:$0xf]
      %v833 = vunpack.c.l.b16 %v827
      %v834 = vunpack.c.h.b16 %v827
      %v835 = vunpack.c.l.b16 %v828
      %v836 = vunpack.c.h.b16 %v828
      %v837 = vpack.c.b16 %v833, %v833
      %v838 = vpack.c.b16 %v834, %v834
      %v839 = vpack.c.b16 %v835, %v835
      %v840 = vpack.c.b16 %v836, %v836
      %841 = vrot.lane.b32.xlu0 %v837, 127
      %v842 = vpop.permute.xlu0 %841
      %843 = vrot.lane.b32.xlu0 %v838, 127
      %v844 = vpop.permute.xlu0 %843
      %845 = vrot.lane.b32.xlu0 %v839, 127
      %v846 = vpop.permute.xlu0 %845
      %847 = vrot.lane.b32.xlu0 %v840, 127
      %v848 = vpop.permute.xlu0 %847
      %vm849 = vcmask 1039360
      %v850 = vsel %vm849, %v842, %v844
      %v851 = vsel %vm849, %v844, %v846
      %v852 = vsel %vm849, %v846, %v848
      %v854 = vsel %vm299, %v830, 0
      %v857 = vsel %vm303, %v850, 0
      %v860 = vsel %vm303, %v851, 0
      %v863 = vsel %vm303, %v852, 0
      %865 = vmatprep.subr.bf16.mxu0 %v860
      %866 = vmatpush1.bf16.msra.mxu0 %v857
      %867 = vmatprep.subr.bf16.mxu0 0
      %868 = vmatpush1.bf16.msra.mxu0 0
      %869 = vmatprep.subr.bf16.mxu0 0
      %870 = vmatpush1.bf16.msra.mxu0 0
      %871 = vmatprep.subr.bf16.mxu0 0
      %872 = vmatpush1.bf16.msra.mxu0 0
      %873 = vmatprep.subr.bf16.mxu0 0
      %874 = vmatpush1.bf16.msra.mxu0 0
      %875 = vmatprep.subr.bf16.mxu0 0
      %876 = vmatpush1.bf16.msra.mxu0 0
      %877 = vmatprep.subr.bf16.mxu0 0
      %878 = vmatpush1.bf16.msra.mxu0 0
      %879 = vmatprep.subr.bf16.mxu0 0
      %880 = vmatpush1.bf16.msra.mxu0 0
      %881 = vmatprep.subr.bf16.mxu0 0
      %882 = vmatpush1.bf16.msra.mxu0 0
      %883 = vmatprep.subr.bf16.mxu0 0
      %884 = vmatpush1.bf16.msra.mxu0 0
      %885 = vmatprep.subr.bf16.mxu0 0
      %886 = vmatpush1.bf16.msra.mxu0 0
      %887 = vmatprep.subr.bf16.mxu0 0
      %888 = vmatpush1.bf16.msra.mxu0 0
      %889 = vmatprep.subr.bf16.mxu0 0
      %890 = vmatpush1.bf16.msra.mxu0 0
      %891 = vmatprep.subr.bf16.mxu0 0
      %892 = vmatpush1.bf16.msra.mxu0 0
      %893 = vmatprep.subr.bf16.mxu0 0
      %894 = vmatpush1.bf16.msra.mxu0 0
      %895 = vmatprep.subr.bf16.mxu0 0
      %896 = vmatpush1.bf16.msra.mxu0 0
      %897 = vmatprep.mubr.bf16.mxu0 0
      %898 = vmatmul.mubr.bf16.gmra.mrb[0].mxu0 %v854
      %v899 = vpop.f32.mrb[0].mxu0
      %v900 = vadd.f32 0.0, %v899
      %v901 = vpop.f32.mrb[0].mxu0
      %v902 = vadd.f32 0.0, %v901
      %v903 = vpop.f32.mrb[0].mxu0
      %v904 = vpop.f32.mrb[0].mxu0
      %905 = vdwg.mxu0
      %906 = vmatprep.subr.bf16.mxu0 0
      %907 = vmatpush1.bf16.msra.mxu0 %v863
      %908 = vmatprep.subr.bf16.mxu0 0
      %909 = vmatpush1.bf16.msra.mxu0 0
      %910 = vmatprep.subr.bf16.mxu0 0
      %911 = vmatpush1.bf16.msra.mxu0 0
      %912 = vmatprep.subr.bf16.mxu0 0
      %913 = vmatpush1.bf16.msra.mxu0 0
      %914 = vmatprep.subr.bf16.mxu0 0
      %915 = vmatpush1.bf16.msra.mxu0 0
      %916 = vmatprep.subr.bf16.mxu0 0
      %917 = vmatpush1.bf16.msra.mxu0 0
      %918 = vmatprep.subr.bf16.mxu0 0
      %919 = vmatpush1.bf16.msra.mxu0 0
      %920 = vmatprep.subr.bf16.mxu0 0
      %921 = vmatpush1.bf16.msra.mxu0 0
      %922 = vmatprep.subr.bf16.mxu0 0
      %923 = vmatpush1.bf16.msra.mxu0 0
      %924 = vmatprep.subr.bf16.mxu0 0
      %925 = vmatpush1.bf16.msra.mxu0 0
      %926 = vmatprep.subr.bf16.mxu0 0
      %927 = vmatpush1.bf16.msra.mxu0 0
      %928 = vmatprep.subr.bf16.mxu0 0
      %929 = vmatpush1.bf16.msra.mxu0 0
      %930 = vmatprep.subr.bf16.mxu0 0
      %931 = vmatpush1.bf16.msra.mxu0 0
      %932 = vmatprep.subr.bf16.mxu0 0
      %933 = vmatpush1.bf16.msra.mxu0 0
      %934 = vmatprep.subr.bf16.mxu0 0
      %935 = vmatpush1.bf16.msra.mxu0 0
      %936 = vmatprep.subr.bf16.mxu0 0
      %937 = vmatpush1.bf16.msra.mxu0 0
      %938 = vmatprep.mubr.bf16.mxu0 0
      %939 = vmatmul.mubr.bf16.gmra.mrb[0].mxu0 %v854
      %v940 = vpop.f32.mrb[0].mxu0
      %v941 = vadd.f32 0.0, %v940
      %v942 = vpop.f32.mrb[0].mxu0
      %v943 = vpop.f32.mrb[0].mxu0
      %v944 = vpop.f32.mrb[0].mxu0
      %945 = vdwg.mxu0
      %v946 = vadd.f32 %v824, %v900
      %v947 = vadd.f32 %v825, %v902
      %v948 = vadd.f32 %v826, %v941
      %s949 = scalar_lea.vmem %s1, 24
      %v950 = vld [vmem:[%s949] sm:$0xf]
      %951 = vrot.lane.b32.xlu0 %v837, 111
      %v952 = vpop.permute.xlu0 %951
      %953 = vrot.lane.b32.xlu0 %v838, 111
      %v954 = vpop.permute.xlu0 %953
      %955 = vrot.lane.b32.xlu0 %v839, 111
      %v956 = vpop.permute.xlu0 %955
      %957 = vrot.lane.b32.xlu0 %v840, 111
      %v958 = vpop.permute.xlu0 %957
      %vm959 = vcmask 908288
      %v960 = vsel %vm959, %v952, %v954
      %v961 = vsel %vm959, %v954, %v956
      %v962 = vsel %vm959, %v956, %v958
      %v964 = vsel %vm299, %v950, 0
      %v967 = vsel %vm303, %v960, 0
      %v970 = vsel %vm303, %v961, 0
      %v973 = vsel %vm303, %v962, 0
      %975 = vmatprep.subr.bf16.mxu0 %v970
      %976 = vmatpush1.bf16.msra.mxu0 %v967
      %977 = vmatprep.subr.bf16.mxu0 0
      %978 = vmatpush1.bf16.msra.mxu0 0
      %979 = vmatprep.subr.bf16.mxu0 0
      %980 = vmatpush1.bf16.msra.mxu0 0
      %981 = vmatprep.subr.bf16.mxu0 0
      %982 = vmatpush1.bf16.msra.mxu0 0
      %983 = vmatprep.subr.bf16.mxu0 0
      %984 = vmatpush1.bf16.msra.mxu0 0
      %985 = vmatprep.subr.bf16.mxu0 0
      %986 = vmatpush1.bf16.msra.mxu0 0
      %987 = vmatprep.subr.bf16.mxu0 0
      %988 = vmatpush1.bf16.msra.mxu0 0
      %989 = vmatprep.subr.bf16.mxu0 0
      %990 = vmatpush1.bf16.msra.mxu0 0
      %991 = vmatprep.subr.bf16.mxu0 0
      %992 = vmatpush1.bf16.msra.mxu0 0
      %993 = vmatprep.subr.bf16.mxu0 0
      %994 = vmatpush1.bf16.msra.mxu0 0
      %995 = vmatprep.subr.bf16.mxu0 0
      %996 = vmatpush1.bf16.msra.mxu0 0
      %997 = vmatprep.subr.bf16.mxu0 0
      %998 = vmatpush1.bf16.msra.mxu0 0
      %999 = vmatprep.subr.bf16.mxu0 0
      %1000 = vmatpush1.bf16.msra.mxu0 0
      %1001 = vmatprep.subr.bf16.mxu0 0
      %1002 = vmatpush1.bf16.msra.mxu0 0
      %1003 = vmatprep.subr.bf16.mxu0 0
      %1004 = vmatpush1.bf16.msra.mxu0 0
      %1005 = vmatprep.subr.bf16.mxu0 0
      %1006 = vmatpush1.bf16.msra.mxu0 0
      %1007 = vmatprep.mubr.bf16.mxu0 0
      %1008 = vmatmul.mubr.bf16.gmra.mrb[0].mxu0 %v964
      %v1009 = vpop.f32.mrb[0].mxu0
      %v1010 = vadd.f32 0.0, %v1009
      %v1011 = vpop.f32.mrb[0].mxu0
      %v1012 = vadd.f32 0.0, %v1011
      %v1013 = vpop.f32.mrb[0].mxu0
      %v1014 = vpop.f32.mrb[0].mxu0
      %1015 = vdwg.mxu0
      %1016 = vmatprep.subr.bf16.mxu0 0
      %1017 = vmatpush1.bf16.msra.mxu0 %v973
      %1018 = vmatprep.subr.bf16.mxu0 0
      %1019 = vmatpush1.bf16.msra.mxu0 0
      %1020 = vmatprep.subr.bf16.mxu0 0
      %1021 = vmatpush1.bf16.msra.mxu0 0
      %1022 = vmatprep.subr.bf16.mxu0 0
      %1023 = vmatpush1.bf16.msra.mxu0 0
      %1024 = vmatprep.subr.bf16.mxu0 0
      %1025 = vmatpush1.bf16.msra.mxu0 0
      %1026 = vmatprep.subr.bf16.mxu0 0
      %1027 = vmatpush1.bf16.msra.mxu0 0
      %1028 = vmatprep.subr.bf16.mxu0 0
      %1029 = vmatpush1.bf16.msra.mxu0 0
      %1030 = vmatprep.subr.bf16.mxu0 0
      %1031 = vmatpush1.bf16.msra.mxu0 0
      %1032 = vmatprep.subr.bf16.mxu0 0
      %1033 = vmatpush1.bf16.msra.mxu0 0
      %1034 = vmatprep.subr.bf16.mxu0 0
      %1035 = vmatpush1.bf16.msra.mxu0 0
      %1036 = vmatprep.subr.bf16.mxu0 0
      %1037 = vmatpush1.bf16.msra.mxu0 0
      %1038 = vmatprep.subr.bf16.mxu0 0
      %1039 = vmatpush1.bf16.msra.mxu0 0
      %1040 = vmatprep.subr.bf16.mxu0 0
      %1041 = vmatpush1.bf16.msra.mxu0 0
      %1042 = vmatprep.subr.bf16.mxu0 0
      %1043 = vmatpush1.bf16.msra.mxu0 0
      %1044 = vmatprep.subr.bf16.mxu0 0
      %1045 = vmatpush1.bf16.msra.mxu0 0
      %1046 = vmatprep.subr.bf16.mxu0 0
      %1047 = vmatpush1.bf16.msra.mxu0 0
      %1048 = vmatprep.mubr.bf16.mxu0 0
      %1049 = vmatmul.mubr.bf16.gmra.mrb[0].mxu0 %v964
      %v1050 = vpop.f32.mrb[0].mxu0
      %v1051 = vadd.f32 0.0, %v1050
      %v1052 = vpop.f32.mrb[0].mxu0
      %v1053 = vpop.f32.mrb[0].mxu0
      %v1054 = vpop.f32.mrb[0].mxu0
      %1055 = vdwg.mxu0
      %v1056 = vadd.f32 %v946, %v1010
      %v1057 = vadd.f32 %v947, %v1012
      %v1058 = vadd.f32 %v948, %v1051
      %s1059 = scalar_lea.vmem %s1, 28
      %v1060 = vld [vmem:[%s1059] sm:$0xf]
      %1061 = vrot.lane.b32.xlu0 %v837, 110
      %v1062 = vpop.permute.xlu0 %1061
      %1063 = vrot.lane.b32.xlu0 %v838, 110
      %v1064 = vpop.permute.xlu0 %1063
      %1065 = vrot.lane.b32.xlu0 %v839, 110
      %v1066 = vpop.permute.xlu0 %1065
      %1067 = vrot.lane.b32.xlu0 %v840, 110
      %v1068 = vpop.permute.xlu0 %1067
      %vm1069 = vcmask 900096
      %v1070 = vsel %vm1069, %v1062, %v1064
      %v1071 = vsel %vm1069, %v1064, %v1066
      %v1072 = vsel %vm1069, %v1066, %v1068
      %v1074 = vsel %vm299, %v1060, 0
      %v1077 = vsel %vm303, %v1070, 0
      %v1080 = vsel %vm303, %v1071, 0
      %v1083 = vsel %vm303, %v1072, 0
      %1085 = vmatprep.subr.bf16.mxu0 %v1080
      %1086 = vmatpush1.bf16.msra.mxu0 %v1077
      %1087 = vmatprep.subr.bf16.mxu0 0
      %1088 = vmatpush1.bf16.msra.mxu0 0
      %1089 = vmatprep.subr.bf16.mxu0 0
      %1090 = vmatpush1.bf16.msra.mxu0 0
      %1091 = vmatprep.subr.bf16.mxu0 0
      %1092 = vmatpush1.bf16.msra.mxu0 0
      %1093 = vmatprep.subr.bf16.mxu0 0
      %1094 = vmatpush1.bf16.msra.mxu0 0
      %1095 = vmatprep.subr.bf16.mxu0 0
      %1096 = vmatpush1.bf16.msra.mxu0 0
      %1097 = vmatprep.subr.bf16.mxu0 0
      %1098 = vmatpush1.bf16.msra.mxu0 0
      %1099 = vmatprep.subr.bf16.mxu0 0
      %1100 = vmatpush1.bf16.msra.mxu0 0
      %1101 = vmatprep.subr.bf16.mxu0 0
      %1102 = vmatpush1.bf16.msra.mxu0 0
      %1103 = vmatprep.subr.bf16.mxu0 0
      %1104 = vmatpush1.bf16.msra.mxu0 0
      %1105 = vmatprep.subr.bf16.mxu0 0
      %1106 = vmatpush1.bf16.msra.mxu0 0
      %1107 = vmatprep.subr.bf16.mxu0 0
      %1108 = vmatpush1.bf16.msra.mxu0 0
      %1109 = vmatprep.subr.bf16.mxu0 0
      %1110 = vmatpush1.bf16.msra.mxu0 0
      %1111 = vmatprep.subr.bf16.mxu0 0
      %1112 = vmatpush1.bf16.msra.mxu0 0
      %1113 = vmatprep.subr.bf16.mxu0 0
      %1114 = vmatpush1.bf16.msra.mxu0 0
      %1115 = vmatprep.subr.bf16.mxu0 0
      %1116 = vmatpush1.bf16.msra.mxu0 0
      %1117 = vmatprep.mubr.bf16.mxu0 0
      %1118 = vmatmul.mubr.bf16.gmra.mrb[0].mxu0 %v1074
      %v1119 = vpop.f32.mrb[0].mxu0
      %v1120 = vadd.f32 0.0, %v1119
      %v1121 = vpop.f32.mrb[0].mxu0
      %v1122 = vadd.f32 0.0, %v1121
      %v1123 = vpop.f32.mrb[0].mxu0
      %v1124 = vpop.f32.mrb[0].mxu0
      %1125 = vdwg.mxu0
      %1126 = vmatprep.subr.bf16.mxu0 0
      %1127 = vmatpush1.bf16.msra.mxu0 %v1083
      %1128 = vmatprep.subr.bf16.mxu0 0
      %1129 = vmatpush1.bf16.msra.mxu0 0
      %1130 = vmatprep.subr.bf16.mxu0 0
      %1131 = vmatpush1.bf16.msra.mxu0 0
      %1132 = vmatprep.subr.bf16.mxu0 0
      %1133 = vmatpush1.bf16.msra.mxu0 0
      %1134 = vmatprep.subr.bf16.mxu0 0
      %1135 = vmatpush1.bf16.msra.mxu0 0
      %1136 = vmatprep.subr.bf16.mxu0 0
      %1137 = vmatpush1.bf16.msra.mxu0 0
      %1138 = vmatprep.subr.bf16.mxu0 0
      %1139 = vmatpush1.bf16.msra.mxu0 0
      %1140 = vmatprep.subr.bf16.mxu0 0
      %1141 = vmatpush1.bf16.msra.mxu0 0
      %1142 = vmatprep.subr.bf16.mxu0 0
      %1143 = vmatpush1.bf16.msra.mxu0 0
      %1144 = vmatprep.subr.bf16.mxu0 0
      %1145 = vmatpush1.bf16.msra.mxu0 0
      %1146 = vmatprep.subr.bf16.mxu0 0
      %1147 = vmatpush1.bf16.msra.mxu0 0
      %1148 = vmatprep.subr.bf16.mxu0 0
      %1149 = vmatpush1.bf16.msra.mxu0 0
      %1150 = vmatprep.subr.bf16.mxu0 0
      %1151 = vmatpush1.bf16.msra.mxu0 0
      %1152 = vmatprep.subr.bf16.mxu0 0
      %1153 = vmatpush1.bf16.msra.mxu0 0
      %1154 = vmatprep.subr.bf16.mxu0 0
      %1155 = vmatpush1.bf16.msra.mxu0 0
      %1156 = vmatprep.subr.bf16.mxu0 0
      %1157 = vmatpush1.bf16.msra.mxu0 0
      %1158 = vmatprep.mubr.bf16.mxu0 0
      %1159 = vmatmul.mubr.bf16.gmra.mrb[0].mxu0 %v1074
      %v1160 = vpop.f32.mrb[0].mxu0
      %v1161 = vadd.f32 0.0, %v1160
      %v1162 = vpop.f32.mrb[0].mxu0
      %v1163 = vpop.f32.mrb[0].mxu0
      %v1164 = vpop.f32.mrb[0].mxu0
      %1165 = vdwg.mxu0
      %v1166 = vadd.f32 %v1056, %v1120
      %v1167 = vadd.f32 %v1057, %v1122
      %v1168 = vadd.f32 %v1058, %v1161
      %s1169 = scalar_lea.vmem %s1, 32
      %v1170 = vld [vmem:[%s1169] sm:$0xf]
      %1171 = vrot.lane.b32.xlu0 %v837, 109
      %v1172 = vpop.permute.xlu0 %1171
      %1173 = vrot.lane.b32.xlu0 %v838, 109
      %v1174 = vpop.permute.xlu0 %1173
      %1175 = vrot.lane.b32.xlu0 %v839, 109
      %v1176 = vpop.permute.xlu0 %1175
      %1177 = vrot.lane.b32.xlu0 %v840, 109
      %v1178 = vpop.permute.xlu0 %1177
      %vm1179 = vcmask 891904
      %v1180 = vsel %vm1179, %v1172, %v1174
      %v1181 = vsel %vm1179, %v1174, %v1176
      %v1182 = vsel %vm1179, %v1176, %v1178
      %v1184 = vsel %vm299, %v1170, 0
      %v1187 = vsel %vm303, %v1180, 0
      %v1190 = vsel %vm303, %v1181, 0
      %v1193 = vsel %vm303, %v1182, 0
      %1195 = vmatprep.subr.bf16.mxu0 %v1190
      %1196 = vmatpush1.bf16.msra.mxu0 %v1187
      %1197 = vmatprep.subr.bf16.mxu0 0
      %1198 = vmatpush1.bf16.msra.mxu0 0
      %1199 = vmatprep.subr.bf16.mxu0 0
      %1200 = vmatpush1.bf16.msra.mxu0 0
      %1201 = vmatprep.subr.bf16.mxu0 0
      %1202 = vmatpush1.bf16.msra.mxu0 0
      %1203 = vmatprep.subr.bf16.mxu0 0
      %1204 = vmatpush1.bf16.msra.mxu0 0
      %1205 = vmatprep.subr.bf16.mxu0 0
      %1206 = vmatpush1.bf16.msra.mxu0 0
      %1207 = vmatprep.subr.bf16.mxu0 0
      %1208 = vmatpush1.bf16.msra.mxu0 0
      %1209 = vmatprep.subr.bf16.mxu0 0
      %1210 = vmatpush1.bf16.msra.mxu0 0
      %1211 = vmatprep.subr.bf16.mxu0 0
      %1212 = vmatpush1.bf16.msra.mxu0 0
      %1213 = vmatprep.subr.bf16.mxu0 0
      %1214 = vmatpush1.bf16.msra.mxu0 0
      %1215 = vmatprep.subr.bf16.mxu0 0
      %1216 = vmatpush1.bf16.msra.mxu0 0
      %1217 = vmatprep.subr.bf16.mxu0 0
      %1218 = vmatpush1.bf16.msra.mxu0 0
      %1219 = vmatprep.subr.bf16.mxu0 0
      %1220 = vmatpush1.bf16.msra.mxu0 0
      %1221 = vmatprep.subr.bf16.mxu0 0
      %1222 = vmatpush1.bf16.msra.mxu0 0
      %1223 = vmatprep.subr.bf16.mxu0 0
      %1224 = vmatpush1.bf16.msra.mxu0 0
      %1225 = vmatprep.subr.bf16.mxu0 0
      %1226 = vmatpush1.bf16.msra.mxu0 0
      %1227 = vmatprep.mubr.bf16.mxu0 0
      %1228 = vmatmul.mubr.bf16.gmra.mrb[0].mxu0 %v1184
      %v1229 = vpop.f32.mrb[0].mxu0
      %v1230 = vadd.f32 0.0, %v1229
      %v1231 = vpop.f32.mrb[0].mxu0
      %v1232 = vadd.f32 0.0, %v1231
      %v1233 = vpop.f32.mrb[0].mxu0
      %v1234 = vpop.f32.mrb[0].mxu0
      %1235 = vdwg.mxu0
      %1236 = vmatprep.subr.bf16.mxu0 0
      %1237 = vmatpush1.bf16.msra.mxu0 %v1193
      %1238 = vmatprep.subr.bf16.mxu0 0
      %1239 = vmatpush1.bf16.msra.mxu0 0
      %1240 = vmatprep.subr.bf16.mxu0 0
      %1241 = vmatpush1.bf16.msra.mxu0 0
      %1242 = vmatprep.subr.bf16.mxu0 0
      %1243 = vmatpush1.bf16.msra.mxu0 0
      %1244 = vmatprep.subr.bf16.mxu0 0
      %1245 = vmatpush1.bf16.msra.mxu0 0
      %1246 = vmatprep.subr.bf16.mxu0 0
      %1247 = vmatpush1.bf16.msra.mxu0 0
      %1248 = vmatprep.subr.bf16.mxu0 0
      %1249 = vmatpush1.bf16.msra.mxu0 0
      %1250 = vmatprep.subr.bf16.mxu0 0
      %1251 = vmatpush1.bf16.msra.mxu0 0
      %1252 = vmatprep.subr.bf16.mxu0 0
      %1253 = vmatpush1.bf16.msra.mxu0 0
      %1254 = vmatprep.subr.bf16.mxu0 0
      %1255 = vmatpush1.bf16.msra.mxu0 0
      %1256 = vmatprep.subr.bf16.mxu0 0
      %1257 = vmatpush1.bf16.msra.mxu0 0
      %1258 = vmatprep.subr.bf16.mxu0 0
      %1259 = vmatpush1.bf16.msra.mxu0 0
      %1260 = vmatprep.subr.bf16.mxu0 0
      %1261 = vmatpush1.bf16.msra.mxu0 0
      %1262 = vmatprep.subr.bf16.mxu0 0
      %1263 = vmatpush1.bf16.msra.mxu0 0
      %1264 = vmatprep.subr.bf16.mxu0 0
      %1265 = vmatpush1.bf16.msra.mxu0 0
      %1266 = vmatprep.subr.bf16.mxu0 0
      %1267 = vmatpush1.bf16.msra.mxu0 0
      %1268 = vmatprep.mubr.bf16.mxu0 0
      %1269 = vmatmul.mubr.bf16.gmra.mrb[0].mxu0 %v1184
      %v1270 = vpop.f32.mrb[0].mxu0
      %v1271 = vadd.f32 0.0, %v1270
      %v1272 = vpop.f32.mrb[0].mxu0
      %v1273 = vpop.f32.mrb[0].mxu0
      %v1274 = vpop.f32.mrb[0].mxu0
      %1275 = vdwg.mxu0
      %v1276 = vadd.f32 %v1166, %v1230
      %v1277 = vadd.f32 %v1167, %v1232
      %v1278 = vadd.f32 %v1168, %v1271
      %v1279 = vld [vmem:[%s2] sm:$0xff]
      %1281 = vset.pattern.permute.xlu0 0
      %1282 = vperm.xlu0 %1281, %v1279
      %v1283 = vpop.permute.xlu0 %1282
      %v1285 = vadd.f32 %v1276, %v1283
      %v1286 = vadd.f32 %v1277, %v1283
      %v1287 = vadd.f32 %v1278, %v1283
      %v1288 = vmax.f32 %v1285, 0.0
      %v1289 = vmax.f32 %v1286, 0.0
      %v1290 = vmax.f32 %v1287, 0.0
      %v1291 = vmul.f32 %v1288, %v260
      %v1292 = vmul.f32 %v1289, %v264
      %v1293 = vmul.f32 %v1290, %v268
      %v1294 = vpack.c.bf16 %v1291, %v1291
      %v1295 = vpack.c.bf16 %v1292, %v1292
      %v1296 = vpack.c.bf16 %v1293, %v1293
      %v1300 = vunpack.c.l.b16 %v1294
      %v1301 = vunpack.c.l.b16 %v1295
      %v1302 = vunpack.c.l.b16 %v1296
      %v1303 = vpack.c.b16 %v1301, %v1300
      %v1304 = vpack.c.b16 %v1302, %v1302
      %1307 = vst [vmem:[#allocation2 + $0x4] sm:$0xff] %v1303
      %1308 = vst [vmem:[#allocation2 + $0xc] sm:$0xf] %v1304
      %v1309 = vld [vmem:[#allocation2] sm:$0xff]
      %v1310 = vld [vmem:[#allocation2 + $0x8] sm:$0xff]
      %s1311 = scalar_lea.vmem %s1, 36
      %v1312 = vld [vmem:[%s1311] sm:$0xf]
      %s1313 = scalar_lea.vmem %s1, 40
      %v1314 = vld [vmem:[%s1313] sm:$0xf]
      %v1317 = vunpack.c.l.b16 %v1309
      %v1318 = vunpack.c.h.b16 %v1309
      %v1319 = vunpack.c.l.b16 %v1310
      %v1320 = vunpack.c.h.b16 %v1310
      %v1321 = vpack.c.b16 %v1317, %v1317
      %v1322 = vpack.c.b16 %v1318, %v1318
      %v1323 = vpack.c.b16 %v1319, %v1319
      %v1324 = vpack.c.b16 %v1320, %v1320
      %1325 = vrot.lane.b32.xlu0 %v1321, 18
      %v1326 = vpop.permute.xlu0 %1325
      %1327 = vrot.lane.b32.xlu0 %v1322, 18
      %v1328 = vpop.permute.xlu0 %1327
      %1329 = vrot.lane.b32.xlu0 %v1323, 18
      %v1330 = vpop.permute.xlu0 %1329
      %1331 = vrot.lane.b32.xlu0 %v1324, 18
      %v1332 = vpop.permute.xlu0 %1331
      %v1333 = vsel %vm295, %v1326, %v1328
      %v1334 = vsel %vm295, %v1328, %v1330
      %v1335 = vsel %vm295, %v1330, %v1332
      %v1337 = vsel %vm299, %v1314, 0
      %v1340 = vsel %vm303, %v1333, 0
      %v1343 = vsel %vm303, %v1334, 0
      %v1346 = vsel %vm303, %v1335, 0
      %1348 = vmatprep.subr.bf16.mxu0 %v1343
      %1349 = vmatpush1.bf16.msra.mxu0 %v1340
      %1350 = vmatprep.subr.bf16.mxu0 0
      %1351 = vmatpush1.bf16.msra.mxu0 0
      %1352 = vmatprep.subr.bf16.mxu0 0
      %1353 = vmatpush1.bf16.msra.mxu0 0
      %1354 = vmatprep.subr.bf16.mxu0 0
      %1355 = vmatpush1.bf16.msra.mxu0 0
      %1356 = vmatprep.subr.bf16.mxu0 0
      %1357 = vmatpush1.bf16.msra.mxu0 0
      %1358 = vmatprep.subr.bf16.mxu0 0
      %1359 = vmatpush1.bf16.msra.mxu0 0
      %1360 = vmatprep.subr.bf16.mxu0 0
      %1361 = vmatpush1.bf16.msra.mxu0 0
      %1362 = vmatprep.subr.bf16.mxu0 0
      %1363 = vmatpush1.bf16.msra.mxu0 0
      %1364 = vmatprep.subr.bf16.mxu0 0
      %1365 = vmatpush1.bf16.msra.mxu0 0
      %1366 = vmatprep.subr.bf16.mxu0 0
      %1367 = vmatpush1.bf16.msra.mxu0 0
      %1368 = vmatprep.subr.bf16.mxu0 0
      %1369 = vmatpush1.bf16.msra.mxu0 0
      %1370 = vmatprep.subr.bf16.mxu0 0
      %1371 = vmatpush1.bf16.msra.mxu0 0
      %1372 = vmatprep.subr.bf16.mxu0 0
      %1373 = vmatpush1.bf16.msra.mxu0 0
      %1374 = vmatprep.subr.bf16.mxu0 0
      %1375 = vmatpush1.bf16.msra.mxu0 0
      %1376 = vmatprep.subr.bf16.mxu0 0
      %1377 = vmatpush1.bf16.msra.mxu0 0
      %1378 = vmatprep.subr.bf16.mxu0 0
      %1379 = vmatpush1.bf16.msra.mxu0 0
      %1380 = vmatprep.mubr.bf16.mxu0 0
      %1381 = vmatmul.mubr.bf16.gmra.mrb[0].mxu0 %v1337
      %v1382 = vpop.f32.mrb[0].mxu0
      %v1383 = vadd.f32 0.0, %v1382
      %v1384 = vpop.f32.mrb[0].mxu0
      %v1385 = vadd.f32 0.0, %v1384
      %v1386 = vpop.f32.mrb[0].mxu0
      %v1387 = vpop.f32.mrb[0].mxu0
      %1388 = vdwg.mxu0
      %1389 = vmatprep.subr.bf16.mxu0 0
      %1390 = vmatpush1.bf16.msra.mxu0 %v1346
      %1391 = vmatprep.subr.bf16.mxu0 0
      %1392 = vmatpush1.bf16.msra.mxu0 0
      %1393 = vmatprep.subr.bf16.mxu0 0
      %1394 = vmatpush1.bf16.msra.mxu0 0
      %1395 = vmatprep.subr.bf16.mxu0 0
      %1396 = vmatpush1.bf16.msra.mxu0 0
      %1397 = vmatprep.subr.bf16.mxu0 0
      %1398 = vmatpush1.bf16.msra.mxu0 0
      %1399 = vmatprep.subr.bf16.mxu0 0
      %1400 = vmatpush1.bf16.msra.mxu0 0
      %1401 = vmatprep.subr.bf16.mxu0 0
      %1402 = vmatpush1.bf16.msra.mxu0 0
      %1403 = vmatprep.subr.bf16.mxu0 0
      %1404 = vmatpush1.bf16.msra.mxu0 0
      %1405 = vmatprep.subr.bf16.mxu0 0
      %1406 = vmatpush1.bf16.msra.mxu0 0
      %1407 = vmatprep.subr.bf16.mxu0 0
      %1408 = vmatpush1.bf16.msra.mxu0 0
      %1409 = vmatprep.subr.bf16.mxu0 0
      %1410 = vmatpush1.bf16.msra.mxu0 0
      %1411 = vmatprep.subr.bf16.mxu0 0
      %1412 = vmatpush1.bf16.msra.mxu0 0
      %1413 = vmatprep.subr.bf16.mxu0 0
      %1414 = vmatpush1.bf16.msra.mxu0 0
      %1415 = vmatprep.subr.bf16.mxu0 0
      %1416 = vmatpush1.bf16.msra.mxu0 0
      %1417 = vmatprep.subr.bf16.mxu0 0
      %1418 = vmatpush1.bf16.msra.mxu0 0
      %1419 = vmatprep.subr.bf16.mxu0 0
      %1420 = vmatpush1.bf16.msra.mxu0 0
      %1421 = vmatprep.mubr.bf16.mxu0 0
      %1422 = vmatmul.mubr.bf16.gmra.mrb[0].mxu0 %v1337
      %v1423 = vpop.f32.mrb[0].mxu0
      %v1424 = vadd.f32 0.0, %v1423
      %v1425 = vpop.f32.mrb[0].mxu0
      %v1426 = vpop.f32.mrb[0].mxu0
      %v1427 = vpop.f32.mrb[0].mxu0
      %1428 = vdwg.mxu0
      %1429 = vrot.lane.b32.xlu0 %v1321, 19
      %v1430 = vpop.permute.xlu0 %1429
      %1431 = vrot.lane.b32.xlu0 %v1322, 19
      %v1432 = vpop.permute.xlu0 %1431
      %1433 = vrot.lane.b32.xlu0 %v1323, 19
      %v1434 = vpop.permute.xlu0 %1433
      %1435 = vrot.lane.b32.xlu0 %v1324, 19
      %v1436 = vpop.permute.xlu0 %1435
      %v1437 = vsel %vm402, %v1430, %v1432
      %v1438 = vsel %vm402, %v1432, %v1434
      %v1439 = vsel %vm402, %v1434, %v1436
      %v1441 = vsel %vm299, %v1312, 0
      %v1444 = vsel %vm303, %v1437, 0
      %v1447 = vsel %vm303, %v1438, 0
      %v1450 = vsel %vm303, %v1439, 0
      %1452 = vmatprep.subr.bf16.mxu0 %v1447
      %1453 = vmatpush1.bf16.msra.mxu0 %v1444
      %1454 = vmatprep.subr.bf16.mxu0 0
      %1455 = vmatpush1.bf16.msra.mxu0 0
      %1456 = vmatprep.subr.bf16.mxu0 0
      %1457 = vmatpush1.bf16.msra.mxu0 0
      %1458 = vmatprep.subr.bf16.mxu0 0
      %1459 = vmatpush1.bf16.msra.mxu0 0
      %1460 = vmatprep.subr.bf16.mxu0 0
      %1461 = vmatpush1.bf16.msra.mxu0 0
      %1462 = vmatprep.subr.bf16.mxu0 0
      %1463 = vmatpush1.bf16.msra.mxu0 0
      %1464 = vmatprep.subr.bf16.mxu0 0
      %1465 = vmatpush1.bf16.msra.mxu0 0
      %1466 = vmatprep.subr.bf16.mxu0 0
      %1467 = vmatpush1.bf16.msra.mxu0 0
      %1468 = vmatprep.subr.bf16.mxu0 0
      %1469 = vmatpush1.bf16.msra.mxu0 0
      %1470 = vmatprep.subr.bf16.mxu0 0
      %1471 = vmatpush1.bf16.msra.mxu0 0
      %1472 = vmatprep.subr.bf16.mxu0 0
      %1473 = vmatpush1.bf16.msra.mxu0 0
      %1474 = vmatprep.subr.bf16.mxu0 0
      %1475 = vmatpush1.bf16.msra.mxu0 0
      %1476 = vmatprep.subr.bf16.mxu0 0
      %1477 = vmatpush1.bf16.msra.mxu0 0
      %1478 = vmatprep.subr.bf16.mxu0 0
      %1479 = vmatpush1.bf16.msra.mxu0 0
      %1480 = vmatprep.subr.bf16.mxu0 0
      %1481 = vmatpush1.bf16.msra.mxu0 0
      %1482 = vmatprep.subr.bf16.mxu0 0
      %1483 = vmatpush1.bf16.msra.mxu0 0
      %1484 = vmatprep.mubr.bf16.mxu0 0
      %1485 = vmatmul.mubr.bf16.gmra.mrb[0].mxu0 %v1441
      %v1486 = vpop.f32.mrb[0].mxu0
      %v1487 = vadd.f32 %v1383, %v1486
      %v1488 = vpop.f32.mrb[0].mxu0
      %v1489 = vadd.f32 %v1385, %v1488
      %v1490 = vpop.f32.mrb[0].mxu0
      %v1491 = vpop.f32.mrb[0].mxu0
      %1492 = vdwg.mxu0
      %1493 = vmatprep.subr.bf16.mxu0 0
      %1494 = vmatpush1.bf16.msra.mxu0 %v1450
      %1495 = vmatprep.subr.bf16.mxu0 0
      %1496 = vmatpush1.bf16.msra.mxu0 0
      %1497 = vmatprep.subr.bf16.mxu0 0
      %1498 = vmatpush1.bf16.msra.mxu0 0
      %1499 = vmatprep.subr.bf16.mxu0 0
      %1500 = vmatpush1.bf16.msra.mxu0 0
      %1501 = vmatprep.subr.bf16.mxu0 0
      %1502 = vmatpush1.bf16.msra.mxu0 0
      %1503 = vmatprep.subr.bf16.mxu0 0
      %1504 = vmatpush1.bf16.msra.mxu0 0
      %1505 = vmatprep.subr.bf16.mxu0 0
      %1506 = vmatpush1.bf16.msra.mxu0 0
      %1507 = vmatprep.subr.bf16.mxu0 0
      %1508 = vmatpush1.bf16.msra.mxu0 0
      %1509 = vmatprep.subr.bf16.mxu0 0
      %1510 = vmatpush1.bf16.msra.mxu0 0
      %1511 = vmatprep.subr.bf16.mxu0 0
      %1512 = vmatpush1.bf16.msra.mxu0 0
      %1513 = vmatprep.subr.bf16.mxu0 0
      %1514 = vmatpush1.bf16.msra.mxu0 0
      %1515 = vmatprep.subr.bf16.mxu0 0
      %1516 = vmatpush1.bf16.msra.mxu0 0
      %1517 = vmatprep.subr.bf16.mxu0 0
      %1518 = vmatpush1.bf16.msra.mxu0 0
      %1519 = vmatprep.subr.bf16.mxu0 0
      %1520 = vmatpush1.bf16.msra.mxu0 0
      %1521 = vmatprep.subr.bf16.mxu0 0
      %1522 = vmatpush1.bf16.msra.mxu0 0
      %1523 = vmatprep.subr.bf16.mxu0 0
      %1524 = vmatpush1.bf16.msra.mxu0 0
      %1525 = vmatprep.mubr.bf16.mxu0 0
      %1526 = vmatmul.mubr.bf16.gmra.mrb[0].mxu0 %v1441
      %v1527 = vpop.f32.mrb[0].mxu0
      %v1528 = vadd.f32 %v1424, %v1527
      %v1529 = vpop.f32.mrb[0].mxu0
      %v1530 = vpop.f32.mrb[0].mxu0
      %v1531 = vpop.f32.mrb[0].mxu0
      %1532 = vdwg.mxu0
      %s1533 = scalar_lea.vmem %s1, 44
      %v1534 = vld [vmem:[%s1533] sm:$0xf]
      %1535 = vrot.lane.b32.xlu0 %v1321, 17
      %v1536 = vpop.permute.xlu0 %1535
      %1537 = vrot.lane.b32.xlu0 %v1322, 17
      %v1538 = vpop.permute.xlu0 %1537
      %1539 = vrot.lane.b32.xlu0 %v1323, 17
      %v1540 = vpop.permute.xlu0 %1539
      %1541 = vrot.lane.b32.xlu0 %v1324, 17
      %v1542 = vpop.permute.xlu0 %1541
      %v1543 = vsel %vm509, %v1536, %v1538
      %v1544 = vsel %vm509, %v1538, %v1540
      %v1545 = vsel %vm509, %v1540, %v1542
      %v1547 = vsel %vm299, %v1534, 0
      %v1550 = vsel %vm303, %v1543, 0
      %v1553 = vsel %vm303, %v1544, 0
      %v1556 = vsel %vm303, %v1545, 0
      %1558 = vmatprep.subr.bf16.mxu0 %v1553
      %1559 = vmatpush1.bf16.msra.mxu0 %v1550
      %1560 = vmatprep.subr.bf16.mxu0 0
      %1561 = vmatpush1.bf16.msra.mxu0 0
      %1562 = vmatprep.subr.bf16.mxu0 0
      %1563 = vmatpush1.bf16.msra.mxu0 0
      %1564 = vmatprep.subr.bf16.mxu0 0
      %1565 = vmatpush1.bf16.msra.mxu0 0
      %1566 = vmatprep.subr.bf16.mxu0 0
      %1567 = vmatpush1.bf16.msra.mxu0 0
      %1568 = vmatprep.subr.bf16.mxu0 0
      %1569 = vmatpush1.bf16.msra.mxu0 0
      %1570 = vmatprep.subr.bf16.mxu0 0
      %1571 = vmatpush1.bf16.msra.mxu0 0
      %1572 = vmatprep.subr.bf16.mxu0 0
      %1573 = vmatpush1.bf16.msra.mxu0 0
      %1574 = vmatprep.subr.bf16.mxu0 0
      %1575 = vmatpush1.bf16.msra.mxu0 0
      %1576 = vmatprep.subr.bf16.mxu0 0
      %1577 = vmatpush1.bf16.msra.mxu0 0
      %1578 = vmatprep.subr.bf16.mxu0 0
      %1579 = vmatpush1.bf16.msra.mxu0 0
      %1580 = vmatprep.subr.bf16.mxu0 0
      %1581 = vmatpush1.bf16.msra.mxu0 0
      %1582 = vmatprep.subr.bf16.mxu0 0
      %1583 = vmatpush1.bf16.msra.mxu0 0
      %1584 = vmatprep.subr.bf16.mxu0 0
      %1585 = vmatpush1.bf16.msra.mxu0 0
      %1586 = vmatprep.subr.bf16.mxu0 0
      %1587 = vmatpush1.bf16.msra.mxu0 0
      %1588 = vmatprep.subr.bf16.mxu0 0
      %1589 = vmatpush1.bf16.msra.mxu0 0
      %1590 = vmatprep.mubr.bf16.mxu0 0
      %1591 = vmatmul.mubr.bf16.gmra.mrb[0].mxu0 %v1547
      %v1592 = vpop.f32.mrb[0].mxu0
      %v1593 = vadd.f32 0.0, %v1592
      %v1594 = vpop.f32.mrb[0].mxu0
      %v1595 = vadd.f32 0.0, %v1594
      %v1596 = vpop.f32.mrb[0].mxu0
      %v1597 = vpop.f32.mrb[0].mxu0
      %1598 = vdwg.mxu0
      %1599 = vmatprep.subr.bf16.mxu0 0
      %1600 = vmatpush1.bf16.msra.mxu0 %v1556
      %1601 = vmatprep.subr.bf16.mxu0 0
      %1602 = vmatpush1.bf16.msra.mxu0 0
      %1603 = vmatprep.subr.bf16.mxu0 0
      %1604 = vmatpush1.bf16.msra.mxu0 0
      %1605 = vmatprep.subr.bf16.mxu0 0
      %1606 = vmatpush1.bf16.msra.mxu0 0
      %1607 = vmatprep.subr.bf16.mxu0 0
      %1608 = vmatpush1.bf16.msra.mxu0 0
      %1609 = vmatprep.subr.bf16.mxu0 0
      %1610 = vmatpush1.bf16.msra.mxu0 0
      %1611 = vmatprep.subr.bf16.mxu0 0
      %1612 = vmatpush1.bf16.msra.mxu0 0
      %1613 = vmatprep.subr.bf16.mxu0 0
      %1614 = vmatpush1.bf16.msra.mxu0 0
      %1615 = vmatprep.subr.bf16.mxu0 0
      %1616 = vmatpush1.bf16.msra.mxu0 0
      %1617 = vmatprep.subr.bf16.mxu0 0
      %1618 = vmatpush1.bf16.msra.mxu0 0
      %1619 = vmatprep.subr.bf16.mxu0 0
      %1620 = vmatpush1.bf16.msra.mxu0 0
      %1621 = vmatprep.subr.bf16.mxu0 0
      %1622 = vmatpush1.bf16.msra.mxu0 0
      %1623 = vmatprep.subr.bf16.mxu0 0
      %1624 = vmatpush1.bf16.msra.mxu0 0
      %1625 = vmatprep.subr.bf16.mxu0 0
      %1626 = vmatpush1.bf16.msra.mxu0 0
      %1627 = vmatprep.subr.bf16.mxu0 0
      %1628 = vmatpush1.bf16.msra.mxu0 0
      %1629 = vmatprep.subr.bf16.mxu0 0
      %1630 = vmatpush1.bf16.msra.mxu0 0
      %1631 = vmatprep.mubr.bf16.mxu0 0
      %1632 = vmatmul.mubr.bf16.gmra.mrb[0].mxu0 %v1547
      %v1633 = vpop.f32.mrb[0].mxu0
      %v1634 = vadd.f32 0.0, %v1633
      %v1635 = vpop.f32.mrb[0].mxu0
      %v1636 = vpop.f32.mrb[0].mxu0
      %v1637 = vpop.f32.mrb[0].mxu0
      %1638 = vdwg.mxu0
      %v1639 = vadd.f32 %v1487, %v1593
      %v1640 = vadd.f32 %v1489, %v1595
      %v1641 = vadd.f32 %v1528, %v1634
      %s1642 = scalar_lea.vmem %s1, 48
      %v1643 = vld [vmem:[%s1642] sm:$0xf]
      %1644 = vrot.lane.b32.xlu0 %v1321, 1
      %v1645 = vpop.permute.xlu0 %1644
      %1646 = vrot.lane.b32.xlu0 %v1322, 1
      %v1647 = vpop.permute.xlu0 %1646
      %1648 = vrot.lane.b32.xlu0 %v1323, 1
      %v1649 = vpop.permute.xlu0 %1648
      %1650 = vrot.lane.b32.xlu0 %v1324, 1
      %v1651 = vpop.permute.xlu0 %1650
      %v1652 = vsel %vm619, %v1645, %v1647
      %v1653 = vsel %vm619, %v1647, %v1649
      %v1654 = vsel %vm619, %v1649, %v1651
      %v1656 = vsel %vm299, %v1643, 0
      %v1659 = vsel %vm303, %v1652, 0
      %v1662 = vsel %vm303, %v1653, 0
      %v1665 = vsel %vm303, %v1654, 0
      %1667 = vmatprep.subr.bf16.mxu0 %v1662
      %1668 = vmatpush1.bf16.msra.mxu0 %v1659
      %1669 = vmatprep.subr.bf16.mxu0 0
      %1670 = vmatpush1.bf16.msra.mxu0 0
      %1671 = vmatprep.subr.bf16.mxu0 0
      %1672 = vmatpush1.bf16.msra.mxu0 0
      %1673 = vmatprep.subr.bf16.mxu0 0
      %1674 = vmatpush1.bf16.msra.mxu0 0
      %1675 = vmatprep.subr.bf16.mxu0 0
      %1676 = vmatpush1.bf16.msra.mxu0 0
      %1677 = vmatprep.subr.bf16.mxu0 0
      %1678 = vmatpush1.bf16.msra.mxu0 0
      %1679 = vmatprep.subr.bf16.mxu0 0
      %1680 = vmatpush1.bf16.msra.mxu0 0
      %1681 = vmatprep.subr.bf16.mxu0 0
      %1682 = vmatpush1.bf16.msra.mxu0 0
      %1683 = vmatprep.subr.bf16.mxu0 0
      %1684 = vmatpush1.bf16.msra.mxu0 0
      %1685 = vmatprep.subr.bf16.mxu0 0
      %1686 = vmatpush1.bf16.msra.mxu0 0
      %1687 = vmatprep.subr.bf16.mxu0 0
      %1688 = vmatpush1.bf16.msra.mxu0 0
      %1689 = vmatprep.subr.bf16.mxu0 0
      %1690 = vmatpush1.bf16.msra.mxu0 0
      %1691 = vmatprep.subr.bf16.mxu0 0
      %1692 = vmatpush1.bf16.msra.mxu0 0
      %1693 = vmatprep.subr.bf16.mxu0 0
      %1694 = vmatpush1.bf16.msra.mxu0 0
      %1695 = vmatprep.subr.bf16.mxu0 0
      %1696 = vmatpush1.bf16.msra.mxu0 0
      %1697 = vmatprep.subr.bf16.mxu0 0
      %1698 = vmatpush1.bf16.msra.mxu0 0
      %1699 = vmatprep.mubr.bf16.mxu0 0
      %1700 = vmatmul.mubr.bf16.gmra.mrb[0].mxu0 %v1656
      %v1701 = vpop.f32.mrb[0].mxu0
      %v1702 = vadd.f32 0.0, %v1701
      %v1703 = vpop.f32.mrb[0].mxu0
      %v1704 = vadd.f32 0.0, %v1703
      %v1705 = vpop.f32.mrb[0].mxu0
      %v1706 = vpop.f32.mrb[0].mxu0
      %1707 = vdwg.mxu0
      %1708 = vmatprep.subr.bf16.mxu0 0
      %1709 = vmatpush1.bf16.msra.mxu0 %v1665
      %1710 = vmatprep.subr.bf16.mxu0 0
      %1711 = vmatpush1.bf16.msra.mxu0 0
      %1712 = vmatprep.subr.bf16.mxu0 0
      %1713 = vmatpush1.bf16.msra.mxu0 0
      %1714 = vmatprep.subr.bf16.mxu0 0
      %1715 = vmatpush1.bf16.msra.mxu0 0
      %1716 = vmatprep.subr.bf16.mxu0 0
      %1717 = vmatpush1.bf16.msra.mxu0 0
      %1718 = vmatprep.subr.bf16.mxu0 0
      %1719 = vmatpush1.bf16.msra.mxu0 0
      %1720 = vmatprep.subr.bf16.mxu0 0
      %1721 = vmatpush1.bf16.msra.mxu0 0
      %1722 = vmatprep.subr.bf16.mxu0 0
      %1723 = vmatpush1.bf16.msra.mxu0 0
      %1724 = vmatprep.subr.bf16.mxu0 0
      %1725 = vmatpush1.bf16.msra.mxu0 0
      %1726 = vmatprep.subr.bf16.mxu0 0
      %1727 = vmatpush1.bf16.msra.mxu0 0
      %1728 = vmatprep.subr.bf16.mxu0 0
      %1729 = vmatpush1.bf16.msra.mxu0 0
      %1730 = vmatprep.subr.bf16.mxu0 0
      %1731 = vmatpush1.bf16.msra.mxu0 0
      %1732 = vmatprep.subr.bf16.mxu0 0
      %1733 = vmatpush1.bf16.msra.mxu0 0
      %1734 = vmatprep.subr.bf16.mxu0 0
      %1735 = vmatpush1.bf16.msra.mxu0 0
      %1736 = vmatprep.subr.bf16.mxu0 0
      %1737 = vmatpush1.bf16.msra.mxu0 0
      %1738 = vmatprep.subr.bf16.mxu0 0
      %1739 = vmatpush1.bf16.msra.mxu0 0
      %1740 = vmatprep.mubr.bf16.mxu0 0
      %1741 = vmatmul.mubr.bf16.gmra.mrb[0].mxu0 %v1656
      %v1742 = vpop.f32.mrb[0].mxu0
      %v1743 = vadd.f32 0.0, %v1742
      %v1744 = vpop.f32.mrb[0].mxu0
      %v1745 = vpop.f32.mrb[0].mxu0
      %v1746 = vpop.f32.mrb[0].mxu0
      %1747 = vdwg.mxu0
      %v1748 = vadd.f32 %v1639, %v1702
      %v1749 = vadd.f32 %v1640, %v1704
      %v1750 = vadd.f32 %v1641, %v1743
      %v1751 = vld [vmem:[#allocation2 + $0x4] sm:$0xff]
      %v1752 = vld [vmem:[#allocation2 + $0xc] sm:$0xf]
      %s1753 = scalar_lea.vmem %s1, 52
      %v1754 = vld [vmem:[%s1753] sm:$0xf]
      %v1757 = vunpack.c.l.b16 %v1751
      %v1758 = vunpack.c.h.b16 %v1751
      %v1759 = vunpack.c.l.b16 %v1752
      %v1760 = vpack.c.b16 %v1757, %v1757
      %v1761 = vpack.c.b16 %v1758, %v1758
      %v1762 = vpack.c.b16 %v1759, %v1759
      %v1764 = vsel %vm299, %v1754, 0
      %v1767 = vsel %vm303, %v1760, 0
      %v1770 = vsel %vm303, %v1761, 0
      %v1773 = vsel %vm303, %v1762, 0
      %1775 = vmatprep.subr.bf16.mxu0 %v1770
      %1776 = vmatpush1.bf16.msra.mxu0 %v1767
      %1777 = vmatprep.subr.bf16.mxu0 0
      %1778 = vmatpush1.bf16.msra.mxu0 0
      %1779 = vmatprep.subr.bf16.mxu0 0
      %1780 = vmatpush1.bf16.msra.mxu0 0
      %1781 = vmatprep.subr.bf16.mxu0 0
      %1782 = vmatpush1.bf16.msra.mxu0 0
      %1783 = vmatprep.subr.bf16.mxu0 0
      %1784 = vmatpush1.bf16.msra.mxu0 0
      %1785 = vmatprep.subr.bf16.mxu0 0
      %1786 = vmatpush1.bf16.msra.mxu0 0
      %1787 = vmatprep.subr.bf16.mxu0 0
      %1788 = vmatpush1.bf16.msra.mxu0 0
      %1789 = vmatprep.subr.bf16.mxu0 0
      %1790 = vmatpush1.bf16.msra.mxu0 0
      %1791 = vmatprep.subr.bf16.mxu0 0
      %1792 = vmatpush1.bf16.msra.mxu0 0
      %1793 = vmatprep.subr.bf16.mxu0 0
      %1794 = vmatpush1.bf16.msra.mxu0 0
      %1795 = vmatprep.subr.bf16.mxu0 0
      %1796 = vmatpush1.bf16.msra.mxu0 0
      %1797 = vmatprep.subr.bf16.mxu0 0
      %1798 = vmatpush1.bf16.msra.mxu0 0
      %1799 = vmatprep.subr.bf16.mxu0 0
      %1800 = vmatpush1.bf16.msra.mxu0 0
      %1801 = vmatprep.subr.bf16.mxu0 0
      %1802 = vmatpush1.bf16.msra.mxu0 0
      %1803 = vmatprep.subr.bf16.mxu0 0
      %1804 = vmatpush1.bf16.msra.mxu0 0
      %1805 = vmatprep.subr.bf16.mxu0 0
      %1806 = vmatpush1.bf16.msra.mxu0 0
      %1807 = vmatprep.mubr.bf16.mxu0 0
      %1808 = vmatmul.mubr.bf16.gmra.mrb[0].mxu0 %v1764
      %v1809 = vpop.f32.mrb[0].mxu0
      %v1810 = vadd.f32 0.0, %v1809
      %v1811 = vpop.f32.mrb[0].mxu0
      %v1812 = vadd.f32 0.0, %v1811
      %v1813 = vpop.f32.mrb[0].mxu0
      %v1814 = vpop.f32.mrb[0].mxu0
      %1815 = vdwg.mxu0
      %1816 = vmatprep.subr.bf16.mxu0 0
      %1817 = vmatpush1.bf16.msra.mxu0 %v1773
      %1818 = vmatprep.subr.bf16.mxu0 0
      %1819 = vmatpush1.bf16.msra.mxu0 0
      %1820 = vmatprep.subr.bf16.mxu0 0
      %1821 = vmatpush1.bf16.msra.mxu0 0
      %1822 = vmatprep.subr.bf16.mxu0 0
      %1823 = vmatpush1.bf16.msra.mxu0 0
      %1824 = vmatprep.subr.bf16.mxu0 0
      %1825 = vmatpush1.bf16.msra.mxu0 0
      %1826 = vmatprep.subr.bf16.mxu0 0
      %1827 = vmatpush1.bf16.msra.mxu0 0
      %1828 = vmatprep.subr.bf16.mxu0 0
      %1829 = vmatpush1.bf16.msra.mxu0 0
      %1830 = vmatprep.subr.bf16.mxu0 0
      %1831 = vmatpush1.bf16.msra.mxu0 0
      %1832 = vmatprep.subr.bf16.mxu0 0
      %1833 = vmatpush1.bf16.msra.mxu0 0
      %1834 = vmatprep.subr.bf16.mxu0 0
      %1835 = vmatpush1.bf16.msra.mxu0 0
      %1836 = vmatprep.subr.bf16.mxu0 0
      %1837 = vmatpush1.bf16.msra.mxu0 0
      %1838 = vmatprep.subr.bf16.mxu0 0
      %1839 = vmatpush1.bf16.msra.mxu0 0
      %1840 = vmatprep.subr.bf16.mxu0 0
      %1841 = vmatpush1.bf16.msra.mxu0 0
      %1842 = vmatprep.subr.bf16.mxu0 0
      %1843 = vmatpush1.bf16.msra.mxu0 0
      %1844 = vmatprep.subr.bf16.mxu0 0
      %1845 = vmatpush1.bf16.msra.mxu0 0
      %1846 = vmatprep.subr.bf16.mxu0 0
      %1847 = vmatpush1.bf16.msra.mxu0 0
      %1848 = vmatprep.mubr.bf16.mxu0 0
      %1849 = vmatmul.mubr.bf16.gmra.mrb[0].mxu0 %v1764
      %v1850 = vpop.f32.mrb[0].mxu0
      %v1851 = vadd.f32 0.0, %v1850
      %v1852 = vpop.f32.mrb[0].mxu0
      %v1853 = vpop.f32.mrb[0].mxu0
      %v1854 = vpop.f32.mrb[0].mxu0
      %1855 = vdwg.mxu0
      %v1856 = vadd.f32 %v1748, %v1810
      %v1857 = vadd.f32 %v1749, %v1812
      %v1858 = vadd.f32 %v1750, %v1851
      %v1859 = vld [vmem:[#allocation2 + $0x4] sm:$0xff]
      %v1860 = vld [vmem:[#allocation2 + $0xc] sm:$0xff]
      %s1861 = scalar_lea.vmem %s1, 56
      %v1862 = vld [vmem:[%s1861] sm:$0xf]
      %v1865 = vunpack.c.l.b16 %v1859
      %v1866 = vunpack.c.h.b16 %v1859
      %v1867 = vunpack.c.l.b16 %v1860
      %v1868 = vunpack.c.h.b16 %v1860
      %v1869 = vpack.c.b16 %v1865, %v1865
      %v1870 = vpack.c.b16 %v1866, %v1866
      %v1871 = vpack.c.b16 %v1867, %v1867
      %v1872 = vpack.c.b16 %v1868, %v1868
      %1873 = vrot.lane.b32.xlu0 %v1869, 127
      %v1874 = vpop.permute.xlu0 %1873
      %1875 = vrot.lane.b32.xlu0 %v1870, 127
      %v1876 = vpop.permute.xlu0 %1875
      %1877 = vrot.lane.b32.xlu0 %v1871, 127
      %v1878 = vpop.permute.xlu0 %1877
      %1879 = vrot.lane.b32.xlu0 %v1872, 127
      %v1880 = vpop.permute.xlu0 %1879
      %v1881 = vsel %vm849, %v1874, %v1876
      %v1882 = vsel %vm849, %v1876, %v1878
      %v1883 = vsel %vm849, %v1878, %v1880
      %v1885 = vsel %vm299, %v1862, 0
      %v1888 = vsel %vm303, %v1881, 0
      %v1891 = vsel %vm303, %v1882, 0
      %v1894 = vsel %vm303, %v1883, 0
      %1896 = vmatprep.subr.bf16.mxu0 %v1891
      %1897 = vmatpush1.bf16.msra.mxu0 %v1888
      %1898 = vmatprep.subr.bf16.mxu0 0
      %1899 = vmatpush1.bf16.msra.mxu0 0
      %1900 = vmatprep.subr.bf16.mxu0 0
      %1901 = vmatpush1.bf16.msra.mxu0 0
      %1902 = vmatprep.subr.bf16.mxu0 0
      %1903 = vmatpush1.bf16.msra.mxu0 0
      %1904 = vmatprep.subr.bf16.mxu0 0
      %1905 = vmatpush1.bf16.msra.mxu0 0
      %1906 = vmatprep.subr.bf16.mxu0 0
      %1907 = vmatpush1.bf16.msra.mxu0 0
      %1908 = vmatprep.subr.bf16.mxu0 0
      %1909 = vmatpush1.bf16.msra.mxu0 0
      %1910 = vmatprep.subr.bf16.mxu0 0
      %1911 = vmatpush1.bf16.msra.mxu0 0
      %1912 = vmatprep.subr.bf16.mxu0 0
      %1913 = vmatpush1.bf16.msra.mxu0 0
      %1914 = vmatprep.subr.bf16.mxu0 0
      %1915 = vmatpush1.bf16.msra.mxu0 0
      %1916 = vmatprep.subr.bf16.mxu0 0
      %1917 = vmatpush1.bf16.msra.mxu0 0
      %1918 = vmatprep.subr.bf16.mxu0 0
      %1919 = vmatpush1.bf16.msra.mxu0 0
      %1920 = vmatprep.subr.bf16.mxu0 0
      %1921 = vmatpush1.bf16.msra.mxu0 0
      %1922 = vmatprep.subr.bf16.mxu0 0
      %1923 = vmatpush1.bf16.msra.mxu0 0
      %1924 = vmatprep.subr.bf16.mxu0 0
      %1925 = vmatpush1.bf16.msra.mxu0 0
      %1926 = vmatprep.subr.bf16.mxu0 0
      %1927 = vmatpush1.bf16.msra.mxu0 0
      %1928 = vmatprep.mubr.bf16.mxu0 0
      %1929 = vmatmul.mubr.bf16.gmra.mrb[0].mxu0 %v1885
      %v1930 = vpop.f32.mrb[0].mxu0
      %v1931 = vadd.f32 0.0, %v1930
      %v1932 = vpop.f32.mrb[0].mxu0
      %v1933 = vadd.f32 0.0, %v1932
      %v1934 = vpop.f32.mrb[0].mxu0
      %v1935 = vpop.f32.mrb[0].mxu0
      %1936 = vdwg.mxu0
      %1937 = vmatprep.subr.bf16.mxu0 0
      %1938 = vmatpush1.bf16.msra.mxu0 %v1894
      %1939 = vmatprep.subr.bf16.mxu0 0
      %1940 = vmatpush1.bf16.msra.mxu0 0
      %1941 = vmatprep.subr.bf16.mxu0 0
      %1942 = vmatpush1.bf16.msra.mxu0 0
      %1943 = vmatprep.subr.bf16.mxu0 0
      %1944 = vmatpush1.bf16.msra.mxu0 0
      %1945 = vmatprep.subr.bf16.mxu0 0
      %1946 = vmatpush1.bf16.msra.mxu0 0
      %1947 = vmatprep.subr.bf16.mxu0 0
      %1948 = vmatpush1.bf16.msra.mxu0 0
      %1949 = vmatprep.subr.bf16.mxu0 0
      %1950 = vmatpush1.bf16.msra.mxu0 0
      %1951 = vmatprep.subr.bf16.mxu0 0
      %1952 = vmatpush1.bf16.msra.mxu0 0
      %1953 = vmatprep.subr.bf16.mxu0 0
      %1954 = vmatpush1.bf16.msra.mxu0 0
      %1955 = vmatprep.subr.bf16.mxu0 0
      %1956 = vmatpush1.bf16.msra.mxu0 0
      %1957 = vmatprep.subr.bf16.mxu0 0
      %1958 = vmatpush1.bf16.msra.mxu0 0
      %1959 = vmatprep.subr.bf16.mxu0 0
      %1960 = vmatpush1.bf16.msra.mxu0 0
      %1961 = vmatprep.subr.bf16.mxu0 0
      %1962 = vmatpush1.bf16.msra.mxu0 0
      %1963 = vmatprep.subr.bf16.mxu0 0
      %1964 = vmatpush1.bf16.msra.mxu0 0
      %1965 = vmatprep.subr.bf16.mxu0 0
      %1966 = vmatpush1.bf16.msra.mxu0 0
      %1967 = vmatprep.subr.bf16.mxu0 0
      %1968 = vmatpush1.bf16.msra.mxu0 0
      %1969 = vmatprep.mubr.bf16.mxu0 0
      %1970 = vmatmul.mubr.bf16.gmra.mrb[0].mxu0 %v1885
      %v1971 = vpop.f32.mrb[0].mxu0
      %v1972 = vadd.f32 0.0, %v1971
      %v1973 = vpop.f32.mrb[0].mxu0
      %v1974 = vpop.f32.mrb[0].mxu0
      %v1975 = vpop.f32.mrb[0].mxu0
      %1976 = vdwg.mxu0
      %v1977 = vadd.f32 %v1856, %v1931
      %v1978 = vadd.f32 %v1857, %v1933
      %v1979 = vadd.f32 %v1858, %v1972
      %s1980 = scalar_lea.vmem %s1, 60
      %v1981 = vld [vmem:[%s1980] sm:$0xf]
      %1982 = vrot.lane.b32.xlu0 %v1869, 111
      %v1983 = vpop.permute.xlu0 %1982
      %1984 = vrot.lane.b32.xlu0 %v1870, 111
      %v1985 = vpop.permute.xlu0 %1984
      %1986 = vrot.lane.b32.xlu0 %v1871, 111
      %v1987 = vpop.permute.xlu0 %1986
      %1988 = vrot.lane.b32.xlu0 %v1872, 111
      %v1989 = vpop.permute.xlu0 %1988
      %v1990 = vsel %vm959, %v1983, %v1985
      %v1991 = vsel %vm959, %v1985, %v1987
      %v1992 = vsel %vm959, %v1987, %v1989
      %v1994 = vsel %vm299, %v1981, 0
      %v1997 = vsel %vm303, %v1990, 0
      %v2000 = vsel %vm303, %v1991, 0
      %v2003 = vsel %vm303, %v1992, 0
      %2005 = vmatprep.subr.bf16.mxu0 %v2000
      %2006 = vmatpush1.bf16.msra.mxu0 %v1997
      %2007 = vmatprep.subr.bf16.mxu0 0
      %2008 = vmatpush1.bf16.msra.mxu0 0
      %2009 = vmatprep.subr.bf16.mxu0 0
      %2010 = vmatpush1.bf16.msra.mxu0 0
      %2011 = vmatprep.subr.bf16.mxu0 0
      %2012 = vmatpush1.bf16.msra.mxu0 0
      %2013 = vmatprep.subr.bf16.mxu0 0
      %2014 = vmatpush1.bf16.msra.mxu0 0
      %2015 = vmatprep.subr.bf16.mxu0 0
      %2016 = vmatpush1.bf16.msra.mxu0 0
      %2017 = vmatprep.subr.bf16.mxu0 0
      %2018 = vmatpush1.bf16.msra.mxu0 0
      %2019 = vmatprep.subr.bf16.mxu0 0
      %2020 = vmatpush1.bf16.msra.mxu0 0
      %2021 = vmatprep.subr.bf16.mxu0 0
      %2022 = vmatpush1.bf16.msra.mxu0 0
      %2023 = vmatprep.subr.bf16.mxu0 0
      %2024 = vmatpush1.bf16.msra.mxu0 0
      %2025 = vmatprep.subr.bf16.mxu0 0
      %2026 = vmatpush1.bf16.msra.mxu0 0
      %2027 = vmatprep.subr.bf16.mxu0 0
      %2028 = vmatpush1.bf16.msra.mxu0 0
      %2029 = vmatprep.subr.bf16.mxu0 0
      %2030 = vmatpush1.bf16.msra.mxu0 0
      %2031 = vmatprep.subr.bf16.mxu0 0
      %2032 = vmatpush1.bf16.msra.mxu0 0
      %2033 = vmatprep.subr.bf16.mxu0 0
      %2034 = vmatpush1.bf16.msra.mxu0 0
      %2035 = vmatprep.subr.bf16.mxu0 0
      %2036 = vmatpush1.bf16.msra.mxu0 0
      %2037 = vmatprep.mubr.bf16.mxu0 0
      %2038 = vmatmul.mubr.bf16.gmra.mrb[0].mxu0 %v1994
      %v2039 = vpop.f32.mrb[0].mxu0
      %v2040 = vadd.f32 0.0, %v2039
      %v2041 = vpop.f32.mrb[0].mxu0
      %v2042 = vadd.f32 0.0, %v2041
      %v2043 = vpop.f32.mrb[0].mxu0
      %v2044 = vpop.f32.mrb[0].mxu0
      %2045 = vdwg.mxu0
      %2046 = vmatprep.subr.bf16.mxu0 0
      %2047 = vmatpush1.bf16.msra.mxu0 %v2003
      %2048 = vmatprep.subr.bf16.mxu0 0
      %2049 = vmatpush1.bf16.msra.mxu0 0
      %2050 = vmatprep.subr.bf16.mxu0 0
      %2051 = vmatpush1.bf16.msra.mxu0 0
      %2052 = vmatprep.subr.bf16.mxu0 0
      %2053 = vmatpush1.bf16.msra.mxu0 0
      %2054 = vmatprep.subr.bf16.mxu0 0
      %2055 = vmatpush1.bf16.msra.mxu0 0
      %2056 = vmatprep.subr.bf16.mxu0 0
      %2057 = vmatpush1.bf16.msra.mxu0 0
      %2058 = vmatprep.subr.bf16.mxu0 0
      %2059 = vmatpush1.bf16.msra.mxu0 0
      %2060 = vmatprep.subr.bf16.mxu0 0
      %2061 = vmatpush1.bf16.msra.mxu0 0
      %2062 = vmatprep.subr.bf16.mxu0 0
      %2063 = vmatpush1.bf16.msra.mxu0 0
      %2064 = vmatprep.subr.bf16.mxu0 0
      %2065 = vmatpush1.bf16.msra.mxu0 0
      %2066 = vmatprep.subr.bf16.mxu0 0
      %2067 = vmatpush1.bf16.msra.mxu0 0
      %2068 = vmatprep.subr.bf16.mxu0 0
      %2069 = vmatpush1.bf16.msra.mxu0 0
      %2070 = vmatprep.subr.bf16.mxu0 0
      %2071 = vmatpush1.bf16.msra.mxu0 0
      %2072 = vmatprep.subr.bf16.mxu0 0
      %2073 = vmatpush1.bf16.msra.mxu0 0
      %2074 = vmatprep.subr.bf16.mxu0 0
      %2075 = vmatpush1.bf16.msra.mxu0 0
      %2076 = vmatprep.subr.bf16.mxu0 0
      %2077 = vmatpush1.bf16.msra.mxu0 0
      %2078 = vmatprep.mubr.bf16.mxu0 0
      %2079 = vmatmul.mubr.bf16.gmra.mrb[0].mxu0 %v1994
      %v2080 = vpop.f32.mrb[0].mxu0
      %v2081 = vadd.f32 0.0, %v2080
      %v2082 = vpop.f32.mrb[0].mxu0
      %v2083 = vpop.f32.mrb[0].mxu0
      %v2084 = vpop.f32.mrb[0].mxu0
      %2085 = vdwg.mxu0
      %v2086 = vadd.f32 %v1977, %v2040
      %v2087 = vadd.f32 %v1978, %v2042
      %v2088 = vadd.f32 %v1979, %v2081
      %s2089 = scalar_lea.vmem %s1, 64
      %v2090 = vld [vmem:[%s2089] sm:$0xf]
      %2091 = vrot.lane.b32.xlu0 %v1869, 110
      %v2092 = vpop.permute.xlu0 %2091
      %2093 = vrot.lane.b32.xlu0 %v1870, 110
      %v2094 = vpop.permute.xlu0 %2093
      %2095 = vrot.lane.b32.xlu0 %v1871, 110
      %v2096 = vpop.permute.xlu0 %2095
      %2097 = vrot.lane.b32.xlu0 %v1872, 110
      %v2098 = vpop.permute.xlu0 %2097
      %v2099 = vsel %vm1069, %v2092, %v2094
      %v2100 = vsel %vm1069, %v2094, %v2096
      %v2101 = vsel %vm1069, %v2096, %v2098
      %v2103 = vsel %vm299, %v2090, 0
      %v2106 = vsel %vm303, %v2099, 0
      %v2109 = vsel %vm303, %v2100, 0
      %v2112 = vsel %vm303, %v2101, 0
      %2114 = vmatprep.subr.bf16.mxu0 %v2109
      %2115 = vmatpush1.bf16.msra.mxu0 %v2106
      %2116 = vmatprep.subr.bf16.mxu0 0
      %2117 = vmatpush1.bf16.msra.mxu0 0
      %2118 = vmatprep.subr.bf16.mxu0 0
      %2119 = vmatpush1.bf16.msra.mxu0 0
      %2120 = vmatprep.subr.bf16.mxu0 0
      %2121 = vmatpush1.bf16.msra.mxu0 0
      %2122 = vmatprep.subr.bf16.mxu0 0
      %2123 = vmatpush1.bf16.msra.mxu0 0
      %2124 = vmatprep.subr.bf16.mxu0 0
      %2125 = vmatpush1.bf16.msra.mxu0 0
      %2126 = vmatprep.subr.bf16.mxu0 0
      %2127 = vmatpush1.bf16.msra.mxu0 0
      %2128 = vmatprep.subr.bf16.mxu0 0
      %2129 = vmatpush1.bf16.msra.mxu0 0
      %2130 = vmatprep.subr.bf16.mxu0 0
      %2131 = vmatpush1.bf16.msra.mxu0 0
      %2132 = vmatprep.subr.bf16.mxu0 0
      %2133 = vmatpush1.bf16.msra.mxu0 0
      %2134 = vmatprep.subr.bf16.mxu0 0
      %2135 = vmatpush1.bf16.msra.mxu0 0
      %2136 = vmatprep.subr.bf16.mxu0 0
      %2137 = vmatpush1.bf16.msra.mxu0 0
      %2138 = vmatprep.subr.bf16.mxu0 0
      %2139 = vmatpush1.bf16.msra.mxu0 0
      %2140 = vmatprep.subr.bf16.mxu0 0
      %2141 = vmatpush1.bf16.msra.mxu0 0
      %2142 = vmatprep.subr.bf16.mxu0 0
      %2143 = vmatpush1.bf16.msra.mxu0 0
      %2144 = vmatprep.subr.bf16.mxu0 0
      %2145 = vmatpush1.bf16.msra.mxu0 0
      %2146 = vmatprep.mubr.bf16.mxu0 0
      %2147 = vmatmul.mubr.bf16.gmra.mrb[0].mxu0 %v2103
      %v2148 = vpop.f32.mrb[0].mxu0
      %v2149 = vadd.f32 0.0, %v2148
      %v2150 = vpop.f32.mrb[0].mxu0
      %v2151 = vadd.f32 0.0, %v2150
      %v2152 = vpop.f32.mrb[0].mxu0
      %v2153 = vpop.f32.mrb[0].mxu0
      %2154 = vdwg.mxu0
      %2155 = vmatprep.subr.bf16.mxu0 0
      %2156 = vmatpush1.bf16.msra.mxu0 %v2112
      %2157 = vmatprep.subr.bf16.mxu0 0
      %2158 = vmatpush1.bf16.msra.mxu0 0
      %2159 = vmatprep.subr.bf16.mxu0 0
      %2160 = vmatpush1.bf16.msra.mxu0 0
      %2161 = vmatprep.subr.bf16.mxu0 0
      %2162 = vmatpush1.bf16.msra.mxu0 0
      %2163 = vmatprep.subr.bf16.mxu0 0
      %2164 = vmatpush1.bf16.msra.mxu0 0
      %2165 = vmatprep.subr.bf16.mxu0 0
      %2166 = vmatpush1.bf16.msra.mxu0 0
      %2167 = vmatprep.subr.bf16.mxu0 0
      %2168 = vmatpush1.bf16.msra.mxu0 0
      %2169 = vmatprep.subr.bf16.mxu0 0
      %2170 = vmatpush1.bf16.msra.mxu0 0
      %2171 = vmatprep.subr.bf16.mxu0 0
      %2172 = vmatpush1.bf16.msra.mxu0 0
      %2173 = vmatprep.subr.bf16.mxu0 0
      %2174 = vmatpush1.bf16.msra.mxu0 0
      %2175 = vmatprep.subr.bf16.mxu0 0
      %2176 = vmatpush1.bf16.msra.mxu0 0
      %2177 = vmatprep.subr.bf16.mxu0 0
      %2178 = vmatpush1.bf16.msra.mxu0 0
      %2179 = vmatprep.subr.bf16.mxu0 0
      %2180 = vmatpush1.bf16.msra.mxu0 0
      %2181 = vmatprep.subr.bf16.mxu0 0
      %2182 = vmatpush1.bf16.msra.mxu0 0
      %2183 = vmatprep.subr.bf16.mxu0 0
      %2184 = vmatpush1.bf16.msra.mxu0 0
      %2185 = vmatprep.subr.bf16.mxu0 0
      %2186 = vmatpush1.bf16.msra.mxu0 0
      %2187 = vmatprep.mubr.bf16.mxu0 0
      %2188 = vmatmul.mubr.bf16.gmra.mrb[0].mxu0 %v2103
      %v2189 = vpop.f32.mrb[0].mxu0
      %v2190 = vadd.f32 0.0, %v2189
      %v2191 = vpop.f32.mrb[0].mxu0
      %v2192 = vpop.f32.mrb[0].mxu0
      %v2193 = vpop.f32.mrb[0].mxu0
      %2194 = vdwg.mxu0
      %v2195 = vadd.f32 %v2086, %v2149
      %v2196 = vadd.f32 %v2087, %v2151
      %v2197 = vadd.f32 %v2088, %v2190
      %s2198 = scalar_lea.vmem %s1, 68
      %v2199 = vld [vmem:[%s2198] sm:$0xf]
      %2200 = vrot.lane.b32.xlu0 %v1869, 109
      %v2201 = vpop.permute.xlu0 %2200
      %2202 = vrot.lane.b32.xlu0 %v1870, 109
      %v2203 = vpop.permute.xlu0 %2202
      %2204 = vrot.lane.b32.xlu0 %v1871, 109
      %v2205 = vpop.permute.xlu0 %2204
      %2206 = vrot.lane.b32.xlu0 %v1872, 109
      %v2207 = vpop.permute.xlu0 %2206
      %v2208 = vsel %vm1179, %v2201, %v2203
      %v2209 = vsel %vm1179, %v2203, %v2205
      %v2210 = vsel %vm1179, %v2205, %v2207
      %v2212 = vsel %vm299, %v2199, 0
      %v2215 = vsel %vm303, %v2208, 0
      %v2218 = vsel %vm303, %v2209, 0
      %v2221 = vsel %vm303, %v2210, 0
      %2223 = vmatprep.subr.bf16.mxu0 %v2218
      %2224 = vmatpush1.bf16.msra.mxu0 %v2215
      %2225 = vmatprep.subr.bf16.mxu0 0
      %2226 = vmatpush1.bf16.msra.mxu0 0
      %2227 = vmatprep.subr.bf16.mxu0 0
      %2228 = vmatpush1.bf16.msra.mxu0 0
      %2229 = vmatprep.subr.bf16.mxu0 0
      %2230 = vmatpush1.bf16.msra.mxu0 0
      %2231 = vmatprep.subr.bf16.mxu0 0
      %2232 = vmatpush1.bf16.msra.mxu0 0
      %2233 = vmatprep.subr.bf16.mxu0 0
      %2234 = vmatpush1.bf16.msra.mxu0 0
      %2235 = vmatprep.subr.bf16.mxu0 0
      %2236 = vmatpush1.bf16.msra.mxu0 0
      %2237 = vmatprep.subr.bf16.mxu0 0
      %2238 = vmatpush1.bf16.msra.mxu0 0
      %2239 = vmatprep.subr.bf16.mxu0 0
      %2240 = vmatpush1.bf16.msra.mxu0 0
      %2241 = vmatprep.subr.bf16.mxu0 0
      %2242 = vmatpush1.bf16.msra.mxu0 0
      %2243 = vmatprep.subr.bf16.mxu0 0
      %2244 = vmatpush1.bf16.msra.mxu0 0
      %2245 = vmatprep.subr.bf16.mxu0 0
      %2246 = vmatpush1.bf16.msra.mxu0 0
      %2247 = vmatprep.subr.bf16.mxu0 0
      %2248 = vmatpush1.bf16.msra.mxu0 0
      %2249 = vmatprep.subr.bf16.mxu0 0
      %2250 = vmatpush1.bf16.msra.mxu0 0
      %2251 = vmatprep.subr.bf16.mxu0 0
      %2252 = vmatpush1.bf16.msra.mxu0 0
      %2253 = vmatprep.subr.bf16.mxu0 0
      %2254 = vmatpush1.bf16.msra.mxu0 0
      %2255 = vmatprep.mubr.bf16.mxu0 0
      %2256 = vmatmul.mubr.bf16.gmra.mrb[0].mxu0 %v2212
      %v2257 = vpop.f32.mrb[0].mxu0
      %v2258 = vadd.f32 0.0, %v2257
      %v2259 = vpop.f32.mrb[0].mxu0
      %v2260 = vadd.f32 0.0, %v2259
      %v2261 = vpop.f32.mrb[0].mxu0
      %v2262 = vpop.f32.mrb[0].mxu0
      %2263 = vdwg.mxu0
      %2264 = vmatprep.subr.bf16.mxu0 0
      %2265 = vmatpush1.bf16.msra.mxu0 %v2221
      %2266 = vmatprep.subr.bf16.mxu0 0
      %2267 = vmatpush1.bf16.msra.mxu0 0
      %2268 = vmatprep.subr.bf16.mxu0 0
      %2269 = vmatpush1.bf16.msra.mxu0 0
      %2270 = vmatprep.subr.bf16.mxu0 0
      %2271 = vmatpush1.bf16.msra.mxu0 0
      %2272 = vmatprep.subr.bf16.mxu0 0
      %2273 = vmatpush1.bf16.msra.mxu0 0
      %2274 = vmatprep.subr.bf16.mxu0 0
      %2275 = vmatpush1.bf16.msra.mxu0 0
      %2276 = vmatprep.subr.bf16.mxu0 0
      %2277 = vmatpush1.bf16.msra.mxu0 0
      %2278 = vmatprep.subr.bf16.mxu0 0
      %2279 = vmatpush1.bf16.msra.mxu0 0
      %2280 = vmatprep.subr.bf16.mxu0 0
      %2281 = vmatpush1.bf16.msra.mxu0 0
      %2282 = vmatprep.subr.bf16.mxu0 0
      %2283 = vmatpush1.bf16.msra.mxu0 0
      %2284 = vmatprep.subr.bf16.mxu0 0
      %2285 = vmatpush1.bf16.msra.mxu0 0
      %2286 = vmatprep.subr.bf16.mxu0 0
      %2287 = vmatpush1.bf16.msra.mxu0 0
      %2288 = vmatprep.subr.bf16.mxu0 0
      %2289 = vmatpush1.bf16.msra.mxu0 0
      %2290 = vmatprep.subr.bf16.mxu0 0
      %2291 = vmatpush1.bf16.msra.mxu0 0
      %2292 = vmatprep.subr.bf16.mxu0 0
      %2293 = vmatpush1.bf16.msra.mxu0 0
      %2294 = vmatprep.subr.bf16.mxu0 0
      %2295 = vmatpush1.bf16.msra.mxu0 0
      %2296 = vmatprep.mubr.bf16.mxu0 0
      %2297 = vmatmul.mubr.bf16.gmra.mrb[0].mxu0 %v2212
      %v2298 = vpop.f32.mrb[0].mxu0
      %v2299 = vadd.f32 0.0, %v2298
      %v2300 = vpop.f32.mrb[0].mxu0
      %v2301 = vpop.f32.mrb[0].mxu0
      %v2302 = vpop.f32.mrb[0].mxu0
      %2303 = vdwg.mxu0
      %v2304 = vadd.f32 %v2195, %v2258
      %v2305 = vadd.f32 %v2196, %v2260
      %v2306 = vadd.f32 %v2197, %v2299
      %s2307 = scalar_lea.vmem %s2, 8
      %v2308 = vld [vmem:[%s2307] sm:$0xff]
      %2310 = vset.pattern.permute.xlu0 0
      %2311 = vperm.xlu0 %2310, %v2308
      %v2312 = vpop.permute.xlu0 %2311
      %v2314 = vadd.f32 %v2304, %v2312
      %v2315 = vadd.f32 %v2305, %v2312
      %v2316 = vadd.f32 %v2306, %v2312
      %v2317 = vmax.f32 %v2314, 0.0
      %v2318 = vmax.f32 %v2315, 0.0
      %v2319 = vmax.f32 %v2316, 0.0
      %v2320 = vmul.f32 %v2317, %v260
      %v2321 = vmul.f32 %v2318, %v264
      %v2322 = vmul.f32 %v2319, %v268
      %v2323 = vpack.c.bf16 %v2320, %v2320
      %v2324 = vpack.c.bf16 %v2321, %v2321
      %v2325 = vpack.c.bf16 %v2322, %v2322
      %v2329 = vunpack.c.l.b16 %v2323
      %v2330 = vunpack.c.l.b16 %v2324
      %v2331 = vunpack.c.l.b16 %v2325
      %v2332 = vpack.c.b16 %v2330, %v2329
      %v2333 = vpack.c.b16 %v2331, %v2331
      %2336 = vst [vmem:[#allocation2 + $0x4] sm:$0xff] %v2332
      %2337 = vst [vmem:[#allocation2 + $0xc] sm:$0xf] %v2333
      %v2338 = vld [vmem:[#allocation2] sm:$0xff]
      %v2339 = vld [vmem:[#allocation2 + $0x8] sm:$0xff]
      %s2340 = scalar_lea.vmem %s1, 72
      %v2341 = vld [vmem:[%s2340] sm:$0xf]
      %s2342 = scalar_lea.vmem %s1, 76
      %v2343 = vld [vmem:[%s2342] sm:$0xf]
      %v2346 = vunpack.c.l.b16 %v2338
      %v2347 = vunpack.c.h.b16 %v2338
      %v2348 = vunpack.c.l.b16 %v2339
      %v2349 = vunpack.c.h.b16 %v2339
      %v2350 = vpack.c.b16 %v2346, %v2346
      %v2351 = vpack.c.b16 %v2347, %v2347
      %v2352 = vpack.c.b16 %v2348, %v2348
      %v2353 = vpack.c.b16 %v2349, %v2349
      %2354 = vrot.lane.b32.xlu0 %v2350, 18
      %v2355 = vpop.permute.xlu0 %2354
      %2356 = vrot.lane.b32.xlu0 %v2351, 18
      %v2357 = vpop.permute.xlu0 %2356
      %2358 = vrot.lane.b32.xlu0 %v2352, 18
      %v2359 = vpop.permute.xlu0 %2358
      %2360 = vrot.lane.b32.xlu0 %v2353, 18
      %v2361 = vpop.permute.xlu0 %2360
      %v2362 = vsel %vm295, %v2355, %v2357
      %v2363 = vsel %vm295, %v2357, %v2359
      %v2364 = vsel %vm295, %v2359, %v2361
      %v2366 = vsel %vm299, %v2343, 0
      %v2369 = vsel %vm303, %v2362, 0
      %v2372 = vsel %vm303, %v2363, 0
      %v2375 = vsel %vm303, %v2364, 0
      %2377 = vmatprep.subr.bf16.mxu0 %v2372
      %2378 = vmatpush1.bf16.msra.mxu0 %v2369
      %2379 = vmatprep.subr.bf16.mxu0 0
      %2380 = vmatpush1.bf16.msra.mxu0 0
      %2381 = vmatprep.subr.bf16.mxu0 0
      %2382 = vmatpush1.bf16.msra.mxu0 0
      %2383 = vmatprep.subr.bf16.mxu0 0
      %2384 = vmatpush1.bf16.msra.mxu0 0
      %2385 = vmatprep.subr.bf16.mxu0 0
      %2386 = vmatpush1.bf16.msra.mxu0 0
      %2387 = vmatprep.subr.bf16.mxu0 0
      %2388 = vmatpush1.bf16.msra.mxu0 0
      %2389 = vmatprep.subr.bf16.mxu0 0
      %2390 = vmatpush1.bf16.msra.mxu0 0
      %2391 = vmatprep.subr.bf16.mxu0 0
      %2392 = vmatpush1.bf16.msra.mxu0 0
      %2393 = vmatprep.subr.bf16.mxu0 0
      %2394 = vmatpush1.bf16.msra.mxu0 0
      %2395 = vmatprep.subr.bf16.mxu0 0
      %2396 = vmatpush1.bf16.msra.mxu0 0
      %2397 = vmatprep.subr.bf16.mxu0 0
      %2398 = vmatpush1.bf16.msra.mxu0 0
      %2399 = vmatprep.subr.bf16.mxu0 0
      %2400 = vmatpush1.bf16.msra.mxu0 0
      %2401 = vmatprep.subr.bf16.mxu0 0
      %2402 = vmatpush1.bf16.msra.mxu0 0
      %2403 = vmatprep.subr.bf16.mxu0 0
      %2404 = vmatpush1.bf16.msra.mxu0 0
      %2405 = vmatprep.subr.bf16.mxu0 0
      %2406 = vmatpush1.bf16.msra.mxu0 0
      %2407 = vmatprep.subr.bf16.mxu0 0
      %2408 = vmatpush1.bf16.msra.mxu0 0
      %2409 = vmatprep.mubr.bf16.mxu0 0
      %2410 = vmatmul.mubr.bf16.gmra.mrb[0].mxu0 %v2366
      %v2411 = vpop.f32.mrb[0].mxu0
      %v2412 = vadd.f32 0.0, %v2411
      %v2413 = vpop.f32.mrb[0].mxu0
      %v2414 = vadd.f32 0.0, %v2413
      %v2415 = vpop.f32.mrb[0].mxu0
      %v2416 = vpop.f32.mrb[0].mxu0
      %2417 = vdwg.mxu0
      %2418 = vmatprep.subr.bf16.mxu0 0
      %2419 = vmatpush1.bf16.msra.mxu0 %v2375
      %2420 = vmatprep.subr.bf16.mxu0 0
      %2421 = vmatpush1.bf16.msra.mxu0 0
      %2422 = vmatprep.subr.bf16.mxu0 0
      %2423 = vmatpush1.bf16.msra.mxu0 0
      %2424 = vmatprep.subr.bf16.mxu0 0
      %2425 = vmatpush1.bf16.msra.mxu0 0
      %2426 = vmatprep.subr.bf16.mxu0 0
      %2427 = vmatpush1.bf16.msra.mxu0 0
      %2428 = vmatprep.subr.bf16.mxu0 0
      %2429 = vmatpush1.bf16.msra.mxu0 0
      %2430 = vmatprep.subr.bf16.mxu0 0
      %2431 = vmatpush1.bf16.msra.mxu0 0
      %2432 = vmatprep.subr.bf16.mxu0 0
      %2433 = vmatpush1.bf16.msra.mxu0 0
      %2434 = vmatprep.subr.bf16.mxu0 0
      %2435 = vmatpush1.bf16.msra.mxu0 0
      %2436 = vmatprep.subr.bf16.mxu0 0
      %2437 = vmatpush1.bf16.msra.mxu0 0
      %2438 = vmatprep.subr.bf16.mxu0 0
      %2439 = vmatpush1.bf16.msra.mxu0 0
      %2440 = vmatprep.subr.bf16.mxu0 0
      %2441 = vmatpush1.bf16.msra.mxu0 0
      %2442 = vmatprep.subr.bf16.mxu0 0
      %2443 = vmatpush1.bf16.msra.mxu0 0
      %2444 = vmatprep.subr.bf16.mxu0 0
      %2445 = vmatpush1.bf16.msra.mxu0 0
      %2446 = vmatprep.subr.bf16.mxu0 0
      %2447 = vmatpush1.bf16.msra.mxu0 0
      %2448 = vmatprep.subr.bf16.mxu0 0
      %2449 = vmatpush1.bf16.msra.mxu0 0
      %2450 = vmatprep.mubr.bf16.mxu0 0
      %2451 = vmatmul.mubr.bf16.gmra.mrb[0].mxu0 %v2366
      %v2452 = vpop.f32.mrb[0].mxu0
      %v2453 = vadd.f32 0.0, %v2452
      %v2454 = vpop.f32.mrb[0].mxu0
      %v2455 = vpop.f32.mrb[0].mxu0
      %v2456 = vpop.f32.mrb[0].mxu0
      %2457 = vdwg.mxu0
      %2458 = vrot.lane.b32.xlu0 %v2350, 19
      %v2459 = vpop.permute.xlu0 %2458
      %2460 = vrot.lane.b32.xlu0 %v2351, 19
      %v2461 = vpop.permute.xlu0 %2460
      %2462 = vrot.lane.b32.xlu0 %v2352, 19
      %v2463 = vpop.permute.xlu0 %2462
      %2464 = vrot.lane.b32.xlu0 %v2353, 19
      %v2465 = vpop.permute.xlu0 %2464
      %v2466 = vsel %vm402, %v2459, %v2461
      %v2467 = vsel %vm402, %v2461, %v2463
      %v2468 = vsel %vm402, %v2463, %v2465
      %v2470 = vsel %vm299, %v2341, 0
      %v2473 = vsel %vm303, %v2466, 0
      %v2476 = vsel %vm303, %v2467, 0
      %v2479 = vsel %vm303, %v2468, 0
      %2481 = vmatprep.subr.bf16.mxu0 %v2476
      %2482 = vmatpush1.bf16.msra.mxu0 %v2473
      %2483 = vmatprep.subr.bf16.mxu0 0
      %2484 = vmatpush1.bf16.msra.mxu0 0
      %2485 = vmatprep.subr.bf16.mxu0 0
      %2486 = vmatpush1.bf16.msra.mxu0 0
      %2487 = vmatprep.subr.bf16.mxu0 0
      %2488 = vmatpush1.bf16.msra.mxu0 0
      %2489 = vmatprep.subr.bf16.mxu0 0
      %2490 = vmatpush1.bf16.msra.mxu0 0
      %2491 = vmatprep.subr.bf16.mxu0 0
      %2492 = vmatpush1.bf16.msra.mxu0 0
      %2493 = vmatprep.subr.bf16.mxu0 0
      %2494 = vmatpush1.bf16.msra.mxu0 0
      %2495 = vmatprep.subr.bf16.mxu0 0
      %2496 = vmatpush1.bf16.msra.mxu0 0
      %2497 = vmatprep.subr.bf16.mxu0 0
      %2498 = vmatpush1.bf16.msra.mxu0 0
      %2499 = vmatprep.subr.bf16.mxu0 0
      %2500 = vmatpush1.bf16.msra.mxu0 0
      %2501 = vmatprep.subr.bf16.mxu0 0
      %2502 = vmatpush1.bf16.msra.mxu0 0
      %2503 = vmatprep.subr.bf16.mxu0 0
      %2504 = vmatpush1.bf16.msra.mxu0 0
      %2505 = vmatprep.subr.bf16.mxu0 0
      %2506 = vmatpush1.bf16.msra.mxu0 0
      %2507 = vmatprep.subr.bf16.mxu0 0
      %2508 = vmatpush1.bf16.msra.mxu0 0
      %2509 = vmatprep.subr.bf16.mxu0 0
      %2510 = vmatpush1.bf16.msra.mxu0 0
      %2511 = vmatprep.subr.bf16.mxu0 0
      %2512 = vmatpush1.bf16.msra.mxu0 0
      %2513 = vmatprep.mubr.bf16.mxu0 0
      %2514 = vmatmul.mubr.bf16.gmra.mrb[0].mxu0 %v2470
      %v2515 = vpop.f32.mrb[0].mxu0
      %v2516 = vadd.f32 %v2412, %v2515
      %v2517 = vpop.f32.mrb[0].mxu0
      %v2518 = vadd.f32 %v2414, %v2517
      %v2519 = vpop.f32.mrb[0].mxu0
      %v2520 = vpop.f32.mrb[0].mxu0
      %2521 = vdwg.mxu0
      %2522 = vmatprep.subr.bf16.mxu0 0
      %2523 = vmatpush1.bf16.msra.mxu0 %v2479
      %2524 = vmatprep.subr.bf16.mxu0 0
      %2525 = vmatpush1.bf16.msra.mxu0 0
      %2526 = vmatprep.subr.bf16.mxu0 0
      %2527 = vmatpush1.bf16.msra.mxu0 0
      %2528 = vmatprep.subr.bf16.mxu0 0
      %2529 = vmatpush1.bf16.msra.mxu0 0
      %2530 = vmatprep.subr.bf16.mxu0 0
      %2531 = vmatpush1.bf16.msra.mxu0 0
      %2532 = vmatprep.subr.bf16.mxu0 0
      %2533 = vmatpush1.bf16.msra.mxu0 0
      %2534 = vmatprep.subr.bf16.mxu0 0
      %2535 = vmatpush1.bf16.msra.mxu0 0
      %2536 = vmatprep.subr.bf16.mxu0 0
      %2537 = vmatpush1.bf16.msra.mxu0 0
      %2538 = vmatprep.subr.bf16.mxu0 0
      %2539 = vmatpush1.bf16.msra.mxu0 0
      %2540 = vmatprep.subr.bf16.mxu0 0
      %2541 = vmatpush1.bf16.msra.mxu0 0
      %2542 = vmatprep.subr.bf16.mxu0 0
      %2543 = vmatpush1.bf16.msra.mxu0 0
      %2544 = vmatprep.subr.bf16.mxu0 0
      %2545 = vmatpush1.bf16.msra.mxu0 0
      %2546 = vmatprep.subr.bf16.mxu0 0
      %2547 = vmatpush1.bf16.msra.mxu0 0
      %2548 = vmatprep.subr.bf16.mxu0 0
      %2549 = vmatpush1.bf16.msra.mxu0 0
      %2550 = vmatprep.subr.bf16.mxu0 0
      %2551 = vmatpush1.bf16.msra.mxu0 0
      %2552 = vmatprep.subr.bf16.mxu0 0
      %2553 = vmatpush1.bf16.msra.mxu0 0
      %2554 = vmatprep.mubr.bf16.mxu0 0
      %2555 = vmatmul.mubr.bf16.gmra.mrb[0].mxu0 %v2470
      %v2556 = vpop.f32.mrb[0].mxu0
      %v2557 = vadd.f32 %v2453, %v2556
      %v2558 = vpop.f32.mrb[0].mxu0
      %v2559 = vpop.f32.mrb[0].mxu0
      %v2560 = vpop.f32.mrb[0].mxu0
      %2561 = vdwg.mxu0
      %s2562 = scalar_lea.vmem %s1, 80
      %v2563 = vld [vmem:[%s2562] sm:$0xf]
      %2564 = vrot.lane.b32.xlu0 %v2350, 17
      %v2565 = vpop.permute.xlu0 %2564
      %2566 = vrot.lane.b32.xlu0 %v2351, 17
      %v2567 = vpop.permute.xlu0 %2566
      %2568 = vrot.lane.b32.xlu0 %v2352, 17
      %v2569 = vpop.permute.xlu0 %2568
      %2570 = vrot.lane.b32.xlu0 %v2353, 17
      %v2571 = vpop.permute.xlu0 %2570
      %v2572 = vsel %vm509, %v2565, %v2567
      %v2573 = vsel %vm509, %v2567, %v2569
      %v2574 = vsel %vm509, %v2569, %v2571
      %v2576 = vsel %vm299, %v2563, 0
      %v2579 = vsel %vm303, %v2572, 0
      %v2582 = vsel %vm303, %v2573, 0
      %v2585 = vsel %vm303, %v2574, 0
      %2587 = vmatprep.subr.bf16.mxu0 %v2582
      %2588 = vmatpush1.bf16.msra.mxu0 %v2579
      %2589 = vmatprep.subr.bf16.mxu0 0
      %2590 = vmatpush1.bf16.msra.mxu0 0
      %2591 = vmatprep.subr.bf16.mxu0 0
      %2592 = vmatpush1.bf16.msra.mxu0 0
      %2593 = vmatprep.subr.bf16.mxu0 0
      %2594 = vmatpush1.bf16.msra.mxu0 0
      %2595 = vmatprep.subr.bf16.mxu0 0
      %2596 = vmatpush1.bf16.msra.mxu0 0
      %2597 = vmatprep.subr.bf16.mxu0 0
      %2598 = vmatpush1.bf16.msra.mxu0 0
      %2599 = vmatprep.subr.bf16.mxu0 0
      %2600 = vmatpush1.bf16.msra.mxu0 0
      %2601 = vmatprep.subr.bf16.mxu0 0
      %2602 = vmatpush1.bf16.msra.mxu0 0
      %2603 = vmatprep.subr.bf16.mxu0 0
      %2604 = vmatpush1.bf16.msra.mxu0 0
      %2605 = vmatprep.subr.bf16.mxu0 0
      %2606 = vmatpush1.bf16.msra.mxu0 0
      %2607 = vmatprep.subr.bf16.mxu0 0
      %2608 = vmatpush1.bf16.msra.mxu0 0
      %2609 = vmatprep.subr.bf16.mxu0 0
      %2610 = vmatpush1.bf16.msra.mxu0 0
      %2611 = vmatprep.subr.bf16.mxu0 0
      %2612 = vmatpush1.bf16.msra.mxu0 0
      %2613 = vmatprep.subr.bf16.mxu0 0
      %2614 = vmatpush1.bf16.msra.mxu0 0
      %2615 = vmatprep.subr.bf16.mxu0 0
      %2616 = vmatpush1.bf16.msra.mxu0 0
      %2617 = vmatprep.subr.bf16.mxu0 0
      %2618 = vmatpush1.bf16.msra.mxu0 0
      %2619 = vmatprep.mubr.bf16.mxu0 0
      %2620 = vmatmul.mubr.bf16.gmra.mrb[0].mxu0 %v2576
      %v2621 = vpop.f32.mrb[0].mxu0
      %v2622 = vadd.f32 0.0, %v2621
      %v2623 = vpop.f32.mrb[0].mxu0
      %v2624 = vadd.f32 0.0, %v2623
      %v2625 = vpop.f32.mrb[0].mxu0
      %v2626 = vpop.f32.mrb[0].mxu0
      %2627 = vdwg.mxu0
      %2628 = vmatprep.subr.bf16.mxu0 0
      %2629 = vmatpush1.bf16.msra.mxu0 %v2585
      %2630 = vmatprep.subr.bf16.mxu0 0
      %2631 = vmatpush1.bf16.msra.mxu0 0
      %2632 = vmatprep.subr.bf16.mxu0 0
      %2633 = vmatpush1.bf16.msra.mxu0 0
      %2634 = vmatprep.subr.bf16.mxu0 0
      %2635 = vmatpush1.bf16.msra.mxu0 0
      %2636 = vmatprep.subr.bf16.mxu0 0
      %2637 = vmatpush1.bf16.msra.mxu0 0
      %2638 = vmatprep.subr.bf16.mxu0 0
      %2639 = vmatpush1.bf16.msra.mxu0 0
      %2640 = vmatprep.subr.bf16.mxu0 0
      %2641 = vmatpush1.bf16.msra.mxu0 0
      %2642 = vmatprep.subr.bf16.mxu0 0
      %2643 = vmatpush1.bf16.msra.mxu0 0
      %2644 = vmatprep.subr.bf16.mxu0 0
      %2645 = vmatpush1.bf16.msra.mxu0 0
      %2646 = vmatprep.subr.bf16.mxu0 0
      %2647 = vmatpush1.bf16.msra.mxu0 0
      %2648 = vmatprep.subr.bf16.mxu0 0
      %2649 = vmatpush1.bf16.msra.mxu0 0
      %2650 = vmatprep.subr.bf16.mxu0 0
      %2651 = vmatpush1.bf16.msra.mxu0 0
      %2652 = vmatprep.subr.bf16.mxu0 0
      %2653 = vmatpush1.bf16.msra.mxu0 0
      %2654 = vmatprep.subr.bf16.mxu0 0
      %2655 = vmatpush1.bf16.msra.mxu0 0
      %2656 = vmatprep.subr.bf16.mxu0 0
      %2657 = vmatpush1.bf16.msra.mxu0 0
      %2658 = vmatprep.subr.bf16.mxu0 0
      %2659 = vmatpush1.bf16.msra.mxu0 0
      %2660 = vmatprep.mubr.bf16.mxu0 0
      %2661 = vmatmul.mubr.bf16.gmra.mrb[0].mxu0 %v2576
      %v2662 = vpop.f32.mrb[0].mxu0
      %v2663 = vadd.f32 0.0, %v2662
      %v2664 = vpop.f32.mrb[0].mxu0
      %v2665 = vpop.f32.mrb[0].mxu0
      %v2666 = vpop.f32.mrb[0].mxu0
      %2667 = vdwg.mxu0
      %v2668 = vadd.f32 %v2516, %v2622
      %v2669 = vadd.f32 %v2518, %v2624
      %v2670 = vadd.f32 %v2557, %v2663
      %s2671 = scalar_lea.vmem %s1, 84
      %v2672 = vld [vmem:[%s2671] sm:$0xf]
      %2673 = vrot.lane.b32.xlu0 %v2350, 1
      %v2674 = vpop.permute.xlu0 %2673
      %2675 = vrot.lane.b32.xlu0 %v2351, 1
      %v2676 = vpop.permute.xlu0 %2675
      %2677 = vrot.lane.b32.xlu0 %v2352, 1
      %v2678 = vpop.permute.xlu0 %2677
      %2679 = vrot.lane.b32.xlu0 %v2353, 1
      %v2680 = vpop.permute.xlu0 %2679
      %v2681 = vsel %vm619, %v2674, %v2676
      %v2682 = vsel %vm619, %v2676, %v2678
      %v2683 = vsel %vm619, %v2678, %v2680
      %v2685 = vsel %vm299, %v2672, 0
      %v2688 = vsel %vm303, %v2681, 0
      %v2691 = vsel %vm303, %v2682, 0
      %v2694 = vsel %vm303, %v2683, 0
      %2696 = vmatprep.subr.bf16.mxu0 %v2691
      %2697 = vmatpush1.bf16.msra.mxu0 %v2688
      %2698 = vmatprep.subr.bf16.mxu0 0
      %2699 = vmatpush1.bf16.msra.mxu0 0
      %2700 = vmatprep.subr.bf16.mxu0 0
      %2701 = vmatpush1.bf16.msra.mxu0 0
      %2702 = vmatprep.subr.bf16.mxu0 0
      %2703 = vmatpush1.bf16.msra.mxu0 0
      %2704 = vmatprep.subr.bf16.mxu0 0
      %2705 = vmatpush1.bf16.msra.mxu0 0
      %2706 = vmatprep.subr.bf16.mxu0 0
      %2707 = vmatpush1.bf16.msra.mxu0 0
      %2708 = vmatprep.subr.bf16.mxu0 0
      %2709 = vmatpush1.bf16.msra.mxu0 0
      %2710 = vmatprep.subr.bf16.mxu0 0
      %2711 = vmatpush1.bf16.msra.mxu0 0
      %2712 = vmatprep.subr.bf16.mxu0 0
      %2713 = vmatpush1.bf16.msra.mxu0 0
      %2714 = vmatprep.subr.bf16.mxu0 0
      %2715 = vmatpush1.bf16.msra.mxu0 0
      %2716 = vmatprep.subr.bf16.mxu0 0
      %2717 = vmatpush1.bf16.msra.mxu0 0
      %2718 = vmatprep.subr.bf16.mxu0 0
      %2719 = vmatpush1.bf16.msra.mxu0 0
      %2720 = vmatprep.subr.bf16.mxu0 0
      %2721 = vmatpush1.bf16.msra.mxu0 0
      %2722 = vmatprep.subr.bf16.mxu0 0
      %2723 = vmatpush1.bf16.msra.mxu0 0
      %2724 = vmatprep.subr.bf16.mxu0 0
      %2725 = vmatpush1.bf16.msra.mxu0 0
      %2726 = vmatprep.subr.bf16.mxu0 0
      %2727 = vmatpush1.bf16.msra.mxu0 0
      %2728 = vmatprep.mubr.bf16.mxu0 0
      %2729 = vmatmul.mubr.bf16.gmra.mrb[0].mxu0 %v2685
      %v2730 = vpop.f32.mrb[0].mxu0
      %v2731 = vadd.f32 0.0, %v2730
      %v2732 = vpop.f32.mrb[0].mxu0
      %v2733 = vadd.f32 0.0, %v2732
      %v2734 = vpop.f32.mrb[0].mxu0
      %v2735 = vpop.f32.mrb[0].mxu0
      %2736 = vdwg.mxu0
      %2737 = vmatprep.subr.bf16.mxu0 0
      %2738 = vmatpush1.bf16.msra.mxu0 %v2694
      %2739 = vmatprep.subr.bf16.mxu0 0
      %2740 = vmatpush1.bf16.msra.mxu0 0
      %2741 = vmatprep.subr.bf16.mxu0 0
      %2742 = vmatpush1.bf16.msra.mxu0 0
      %2743 = vmatprep.subr.bf16.mxu0 0
      %2744 = vmatpush1.bf16.msra.mxu0 0
      %2745 = vmatprep.subr.bf16.mxu0 0
      %2746 = vmatpush1.bf16.msra.mxu0 0
      %2747 = vmatprep.subr.bf16.mxu0 0
      %2748 = vmatpush1.bf16.msra.mxu0 0
      %2749 = vmatprep.subr.bf16.mxu0 0
      %2750 = vmatpush1.bf16.msra.mxu0 0
      %2751 = vmatprep.subr.bf16.mxu0 0
      %2752 = vmatpush1.bf16.msra.mxu0 0
      %2753 = vmatprep.subr.bf16.mxu0 0
      %2754 = vmatpush1.bf16.msra.mxu0 0
      %2755 = vmatprep.subr.bf16.mxu0 0
      %2756 = vmatpush1.bf16.msra.mxu0 0
      %2757 = vmatprep.subr.bf16.mxu0 0
      %2758 = vmatpush1.bf16.msra.mxu0 0
      %2759 = vmatprep.subr.bf16.mxu0 0
      %2760 = vmatpush1.bf16.msra.mxu0 0
      %2761 = vmatprep.subr.bf16.mxu0 0
      %2762 = vmatpush1.bf16.msra.mxu0 0
      %2763 = vmatprep.subr.bf16.mxu0 0
      %2764 = vmatpush1.bf16.msra.mxu0 0
      %2765 = vmatprep.subr.bf16.mxu0 0
      %2766 = vmatpush1.bf16.msra.mxu0 0
      %2767 = vmatprep.subr.bf16.mxu0 0
      %2768 = vmatpush1.bf16.msra.mxu0 0
      %2769 = vmatprep.mubr.bf16.mxu0 0
      %2770 = vmatmul.mubr.bf16.gmra.mrb[0].mxu0 %v2685
      %v2771 = vpop.f32.mrb[0].mxu0
      %v2772 = vadd.f32 0.0, %v2771
      %v2773 = vpop.f32.mrb[0].mxu0
      %v2774 = vpop.f32.mrb[0].mxu0
      %v2775 = vpop.f32.mrb[0].mxu0
      %2776 = vdwg.mxu0
      %v2777 = vadd.f32 %v2668, %v2731
      %v2778 = vadd.f32 %v2669, %v2733
      %v2779 = vadd.f32 %v2670, %v2772
      %v2780 = vld [vmem:[#allocation2 + $0x4] sm:$0xff]
      %v2781 = vld [vmem:[#allocation2 + $0xc] sm:$0xf]
      %s2782 = scalar_lea.vmem %s1, 88
      %v2783 = vld [vmem:[%s2782] sm:$0xf]
      %v2786 = vunpack.c.l.b16 %v2780
      %v2787 = vunpack.c.h.b16 %v2780
      %v2788 = vunpack.c.l.b16 %v2781
      %v2789 = vpack.c.b16 %v2786, %v2786
      %v2790 = vpack.c.b16 %v2787, %v2787
      %v2791 = vpack.c.b16 %v2788, %v2788
      %v2793 = vsel %vm299, %v2783, 0
      %v2796 = vsel %vm303, %v2789, 0
      %v2799 = vsel %vm303, %v2790, 0
      %v2802 = vsel %vm303, %v2791, 0
      %2804 = vmatprep.subr.bf16.mxu0 %v2799
      %2805 = vmatpush1.bf16.msra.mxu0 %v2796
      %2806 = vmatprep.subr.bf16.mxu0 0
      %2807 = vmatpush1.bf16.msra.mxu0 0
      %2808 = vmatprep.subr.bf16.mxu0 0
      %2809 = vmatpush1.bf16.msra.mxu0 0
      %2810 = vmatprep.subr.bf16.mxu0 0
      %2811 = vmatpush1.bf16.msra.mxu0 0
      %2812 = vmatprep.subr.bf16.mxu0 0
      %2813 = vmatpush1.bf16.msra.mxu0 0
      %2814 = vmatprep.subr.bf16.mxu0 0
      %2815 = vmatpush1.bf16.msra.mxu0 0
      %2816 = vmatprep.subr.bf16.mxu0 0
      %2817 = vmatpush1.bf16.msra.mxu0 0
      %2818 = vmatprep.subr.bf16.mxu0 0
      %2819 = vmatpush1.bf16.msra.mxu0 0
      %2820 = vmatprep.subr.bf16.mxu0 0
      %2821 = vmatpush1.bf16.msra.mxu0 0
      %2822 = vmatprep.subr.bf16.mxu0 0
      %2823 = vmatpush1.bf16.msra.mxu0 0
      %2824 = vmatprep.subr.bf16.mxu0 0
      %2825 = vmatpush1.bf16.msra.mxu0 0
      %2826 = vmatprep.subr.bf16.mxu0 0
      %2827 = vmatpush1.bf16.msra.mxu0 0
      %2828 = vmatprep.subr.bf16.mxu0 0
      %2829 = vmatpush1.bf16.msra.mxu0 0
      %2830 = vmatprep.subr.bf16.mxu0 0
      %2831 = vmatpush1.bf16.msra.mxu0 0
      %2832 = vmatprep.subr.bf16.mxu0 0
      %2833 = vmatpush1.bf16.msra.mxu0 0
      %2834 = vmatprep.subr.bf16.mxu0 0
      %2835 = vmatpush1.bf16.msra.mxu0 0
      %2836 = vmatprep.mubr.bf16.mxu0 0
      %2837 = vmatmul.mubr.bf16.gmra.mrb[0].mxu0 %v2793
      %v2838 = vpop.f32.mrb[0].mxu0
      %v2839 = vadd.f32 0.0, %v2838
      %v2840 = vpop.f32.mrb[0].mxu0
      %v2841 = vadd.f32 0.0, %v2840
      %v2842 = vpop.f32.mrb[0].mxu0
      %v2843 = vpop.f32.mrb[0].mxu0
      %2844 = vdwg.mxu0
      %2845 = vmatprep.subr.bf16.mxu0 0
      %2846 = vmatpush1.bf16.msra.mxu0 %v2802
      %2847 = vmatprep.subr.bf16.mxu0 0
      %2848 = vmatpush1.bf16.msra.mxu0 0
      %2849 = vmatprep.subr.bf16.mxu0 0
      %2850 = vmatpush1.bf16.msra.mxu0 0
      %2851 = vmatprep.subr.bf16.mxu0 0
      %2852 = vmatpush1.bf16.msra.mxu0 0
      %2853 = vmatprep.subr.bf16.mxu0 0
      %2854 = vmatpush1.bf16.msra.mxu0 0
      %2855 = vmatprep.subr.bf16.mxu0 0
      %2856 = vmatpush1.bf16.msra.mxu0 0
      %2857 = vmatprep.subr.bf16.mxu0 0
      %2858 = vmatpush1.bf16.msra.mxu0 0
      %2859 = vmatprep.subr.bf16.mxu0 0
      %2860 = vmatpush1.bf16.msra.mxu0 0
      %2861 = vmatprep.subr.bf16.mxu0 0
      %2862 = vmatpush1.bf16.msra.mxu0 0
      %2863 = vmatprep.subr.bf16.mxu0 0
      %2864 = vmatpush1.bf16.msra.mxu0 0
      %2865 = vmatprep.subr.bf16.mxu0 0
      %2866 = vmatpush1.bf16.msra.mxu0 0
      %2867 = vmatprep.subr.bf16.mxu0 0
      %2868 = vmatpush1.bf16.msra.mxu0 0
      %2869 = vmatprep.subr.bf16.mxu0 0
      %2870 = vmatpush1.bf16.msra.mxu0 0
      %2871 = vmatprep.subr.bf16.mxu0 0
      %2872 = vmatpush1.bf16.msra.mxu0 0
      %2873 = vmatprep.subr.bf16.mxu0 0
      %2874 = vmatpush1.bf16.msra.mxu0 0
      %2875 = vmatprep.subr.bf16.mxu0 0
      %2876 = vmatpush1.bf16.msra.mxu0 0
      %2877 = vmatprep.mubr.bf16.mxu0 0
      %2878 = vmatmul.mubr.bf16.gmra.mrb[0].mxu0 %v2793
      %v2879 = vpop.f32.mrb[0].mxu0
      %v2880 = vadd.f32 0.0, %v2879
      %v2881 = vpop.f32.mrb[0].mxu0
      %v2882 = vpop.f32.mrb[0].mxu0
      %v2883 = vpop.f32.mrb[0].mxu0
      %2884 = vdwg.mxu0
      %v2885 = vadd.f32 %v2777, %v2839
      %v2886 = vadd.f32 %v2778, %v2841
      %v2887 = vadd.f32 %v2779, %v2880
      %v2888 = vld [vmem:[#allocation2 + $0x4] sm:$0xff]
      %v2889 = vld [vmem:[#allocation2 + $0xc] sm:$0xff]
      %s2890 = scalar_lea.vmem %s1, 92
      %v2891 = vld [vmem:[%s2890] sm:$0xf]
      %v2894 = vunpack.c.l.b16 %v2888
      %v2895 = vunpack.c.h.b16 %v2888
      %v2896 = vunpack.c.l.b16 %v2889
      %v2897 = vunpack.c.h.b16 %v2889
      %v2898 = vpack.c.b16 %v2894, %v2894
      %v2899 = vpack.c.b16 %v2895, %v2895
      %v2900 = vpack.c.b16 %v2896, %v2896
      %v2901 = vpack.c.b16 %v2897, %v2897
      %2902 = vrot.lane.b32.xlu0 %v2898, 127
      %v2903 = vpop.permute.xlu0 %2902
      %2904 = vrot.lane.b32.xlu0 %v2899, 127
      %v2905 = vpop.permute.xlu0 %2904
      %2906 = vrot.lane.b32.xlu0 %v2900, 127
      %v2907 = vpop.permute.xlu0 %2906
      %2908 = vrot.lane.b32.xlu0 %v2901, 127
      %v2909 = vpop.permute.xlu0 %2908
      %v2910 = vsel %vm849, %v2903, %v2905
      %v2911 = vsel %vm849, %v2905, %v2907
      %v2912 = vsel %vm849, %v2907, %v2909
      %v2914 = vsel %vm299, %v2891, 0
      %v2917 = vsel %vm303, %v2910, 0
      %v2920 = vsel %vm303, %v2911, 0
      %v2923 = vsel %vm303, %v2912, 0
      %2925 = vmatprep.subr.bf16.mxu0 %v2920
      %2926 = vmatpush1.bf16.msra.mxu0 %v2917
      %2927 = vmatprep.subr.bf16.mxu0 0
      %2928 = vmatpush1.bf16.msra.mxu0 0
      %2929 = vmatprep.subr.bf16.mxu0 0
      %2930 = vmatpush1.bf16.msra.mxu0 0
      %2931 = vmatprep.subr.bf16.mxu0 0
      %2932 = vmatpush1.bf16.msra.mxu0 0
      %2933 = vmatprep.subr.bf16.mxu0 0
      %2934 = vmatpush1.bf16.msra.mxu0 0
      %2935 = vmatprep.subr.bf16.mxu0 0
      %2936 = vmatpush1.bf16.msra.mxu0 0
      %2937 = vmatprep.subr.bf16.mxu0 0
      %2938 = vmatpush1.bf16.msra.mxu0 0
      %2939 = vmatprep.subr.bf16.mxu0 0
      %2940 = vmatpush1.bf16.msra.mxu0 0
      %2941 = vmatprep.subr.bf16.mxu0 0
      %2942 = vmatpush1.bf16.msra.mxu0 0
      %2943 = vmatprep.subr.bf16.mxu0 0
      %2944 = vmatpush1.bf16.msra.mxu0 0
      %2945 = vmatprep.subr.bf16.mxu0 0
      %2946 = vmatpush1.bf16.msra.mxu0 0
      %2947 = vmatprep.subr.bf16.mxu0 0
      %2948 = vmatpush1.bf16.msra.mxu0 0
      %2949 = vmatprep.subr.bf16.mxu0 0
      %2950 = vmatpush1.bf16.msra.mxu0 0
      %2951 = vmatprep.subr.bf16.mxu0 0
      %2952 = vmatpush1.bf16.msra.mxu0 0
      %2953 = vmatprep.subr.bf16.mxu0 0
      %2954 = vmatpush1.bf16.msra.mxu0 0
      %2955 = vmatprep.subr.bf16.mxu0 0
      %2956 = vmatpush1.bf16.msra.mxu0 0
      %2957 = vmatprep.mubr.bf16.mxu0 0
      %2958 = vmatmul.mubr.bf16.gmra.mrb[0].mxu0 %v2914
      %v2959 = vpop.f32.mrb[0].mxu0
      %v2960 = vadd.f32 0.0, %v2959
      %v2961 = vpop.f32.mrb[0].mxu0
      %v2962 = vadd.f32 0.0, %v2961
      %v2963 = vpop.f32.mrb[0].mxu0
      %v2964 = vpop.f32.mrb[0].mxu0
      %2965 = vdwg.mxu0
      %2966 = vmatprep.subr.bf16.mxu0 0
      %2967 = vmatpush1.bf16.msra.mxu0 %v2923
      %2968 = vmatprep.subr.bf16.mxu0 0
      %2969 = vmatpush1.bf16.msra.mxu0 0
      %2970 = vmatprep.subr.bf16.mxu0 0
      %2971 = vmatpush1.bf16.msra.mxu0 0
      %2972 = vmatprep.subr.bf16.mxu0 0
      %2973 = vmatpush1.bf16.msra.mxu0 0
      %2974 = vmatprep.subr.bf16.mxu0 0
      %2975 = vmatpush1.bf16.msra.mxu0 0
      %2976 = vmatprep.subr.bf16.mxu0 0
      %2977 = vmatpush1.bf16.msra.mxu0 0
      %2978 = vmatprep.subr.bf16.mxu0 0
      %2979 = vmatpush1.bf16.msra.mxu0 0
      %2980 = vmatprep.subr.bf16.mxu0 0
      %2981 = vmatpush1.bf16.msra.mxu0 0
      %2982 = vmatprep.subr.bf16.mxu0 0
      %2983 = vmatpush1.bf16.msra.mxu0 0
      %2984 = vmatprep.subr.bf16.mxu0 0
      %2985 = vmatpush1.bf16.msra.mxu0 0
      %2986 = vmatprep.subr.bf16.mxu0 0
      %2987 = vmatpush1.bf16.msra.mxu0 0
      %2988 = vmatprep.subr.bf16.mxu0 0
      %2989 = vmatpush1.bf16.msra.mxu0 0
      %2990 = vmatprep.subr.bf16.mxu0 0
      %2991 = vmatpush1.bf16.msra.mxu0 0
      %2992 = vmatprep.subr.bf16.mxu0 0
      %2993 = vmatpush1.bf16.msra.mxu0 0
      %2994 = vmatprep.subr.bf16.mxu0 0
      %2995 = vmatpush1.bf16.msra.mxu0 0
      %2996 = vmatprep.subr.bf16.mxu0 0
      %2997 = vmatpush1.bf16.msra.mxu0 0
      %2998 = vmatprep.mubr.bf16.mxu0 0
      %2999 = vmatmul.mubr.bf16.gmra.mrb[0].mxu0 %v2914
      %v3000 = vpop.f32.mrb[0].mxu0
      %v3001 = vadd.f32 0.0, %v3000
      %v3002 = vpop.f32.mrb[0].mxu0
      %v3003 = vpop.f32.mrb[0].mxu0
      %v3004 = vpop.f32.mrb[0].mxu0
      %3005 = vdwg.mxu0
      %v3006 = vadd.f32 %v2885, %v2960
      %v3007 = vadd.f32 %v2886, %v2962
      %v3008 = vadd.f32 %v2887, %v3001
      %s3009 = scalar_lea.vmem %s1, 96
      %v3010 = vld [vmem:[%s3009] sm:$0xf]
      %3011 = vrot.lane.b32.xlu0 %v2898, 111
      %v3012 = vpop.permute.xlu0 %3011
      %3013 = vrot.lane.b32.xlu0 %v2899, 111
      %v3014 = vpop.permute.xlu0 %3013
      %3015 = vrot.lane.b32.xlu0 %v2900, 111
      %v3016 = vpop.permute.xlu0 %3015
      %3017 = vrot.lane.b32.xlu0 %v2901, 111
      %v3018 = vpop.permute.xlu0 %3017
      %v3019 = vsel %vm959, %v3012, %v3014
      %v3020 = vsel %vm959, %v3014, %v3016
      %v3021 = vsel %vm959, %v3016, %v3018
      %v3023 = vsel %vm299, %v3010, 0
      %v3026 = vsel %vm303, %v3019, 0
      %v3029 = vsel %vm303, %v3020, 0
      %v3032 = vsel %vm303, %v3021, 0
      %3034 = vmatprep.subr.bf16.mxu0 %v3029
      %3035 = vmatpush1.bf16.msra.mxu0 %v3026
      %3036 = vmatprep.subr.bf16.mxu0 0
      %3037 = vmatpush1.bf16.msra.mxu0 0
      %3038 = vmatprep.subr.bf16.mxu0 0
      %3039 = vmatpush1.bf16.msra.mxu0 0
      %3040 = vmatprep.subr.bf16.mxu0 0
      %3041 = vmatpush1.bf16.msra.mxu0 0
      %3042 = vmatprep.subr.bf16.mxu0 0
      %3043 = vmatpush1.bf16.msra.mxu0 0
      %3044 = vmatprep.subr.bf16.mxu0 0
      %3045 = vmatpush1.bf16.msra.mxu0 0
      %3046 = vmatprep.subr.bf16.mxu0 0
      %3047 = vmatpush1.bf16.msra.mxu0 0
      %3048 = vmatprep.subr.bf16.mxu0 0
      %3049 = vmatpush1.bf16.msra.mxu0 0
      %3050 = vmatprep.subr.bf16.mxu0 0
      %3051 = vmatpush1.bf16.msra.mxu0 0
      %3052 = vmatprep.subr.bf16.mxu0 0
      %3053 = vmatpush1.bf16.msra.mxu0 0
      %3054 = vmatprep.subr.bf16.mxu0 0
      %3055 = vmatpush1.bf16.msra.mxu0 0
      %3056 = vmatprep.subr.bf16.mxu0 0
      %3057 = vmatpush1.bf16.msra.mxu0 0
      %3058 = vmatprep.subr.bf16.mxu0 0
      %3059 = vmatpush1.bf16.msra.mxu0 0
      %3060 = vmatprep.subr.bf16.mxu0 0
      %3061 = vmatpush1.bf16.msra.mxu0 0
      %3062 = vmatprep.subr.bf16.mxu0 0
      %3063 = vmatpush1.bf16.msra.mxu0 0
      %3064 = vmatprep.subr.bf16.mxu0 0
      %3065 = vmatpush1.bf16.msra.mxu0 0
      %3066 = vmatprep.mubr.bf16.mxu0 0
      %3067 = vmatmul.mubr.bf16.gmra.mrb[0].mxu0 %v3023
      %v3068 = vpop.f32.mrb[0].mxu0
      %v3069 = vadd.f32 0.0, %v3068
      %v3070 = vpop.f32.mrb[0].mxu0
      %v3071 = vadd.f32 0.0, %v3070
      %v3072 = vpop.f32.mrb[0].mxu0
      %v3073 = vpop.f32.mrb[0].mxu0
      %3074 = vdwg.mxu0
      %3075 = vmatprep.subr.bf16.mxu0 0
      %3076 = vmatpush1.bf16.msra.mxu0 %v3032
      %3077 = vmatprep.subr.bf16.mxu0 0
      %3078 = vmatpush1.bf16.msra.mxu0 0
      %3079 = vmatprep.subr.bf16.mxu0 0
      %3080 = vmatpush1.bf16.msra.mxu0 0
      %3081 = vmatprep.subr.bf16.mxu0 0
      %3082 = vmatpush1.bf16.msra.mxu0 0
      %3083 = vmatprep.subr.bf16.mxu0 0
      %3084 = vmatpush1.bf16.msra.mxu0 0
      %3085 = vmatprep.subr.bf16.mxu0 0
      %3086 = vmatpush1.bf16.msra.mxu0 0
      %3087 = vmatprep.subr.bf16.mxu0 0
      %3088 = vmatpush1.bf16.msra.mxu0 0
      %3089 = vmatprep.subr.bf16.mxu0 0
      %3090 = vmatpush1.bf16.msra.mxu0 0
      %3091 = vmatprep.subr.bf16.mxu0 0
      %3092 = vmatpush1.bf16.msra.mxu0 0
      %3093 = vmatprep.subr.bf16.mxu0 0
      %3094 = vmatpush1.bf16.msra.mxu0 0
      %3095 = vmatprep.subr.bf16.mxu0 0
      %3096 = vmatpush1.bf16.msra.mxu0 0
      %3097 = vmatprep.subr.bf16.mxu0 0
      %3098 = vmatpush1.bf16.msra.mxu0 0
      %3099 = vmatprep.subr.bf16.mxu0 0
      %3100 = vmatpush1.bf16.msra.mxu0 0
      %3101 = vmatprep.subr.bf16.mxu0 0
      %3102 = vmatpush1.bf16.msra.mxu0 0
      %3103 = vmatprep.subr.bf16.mxu0 0
      %3104 = vmatpush1.bf16.msra.mxu0 0
      %3105 = vmatprep.subr.bf16.mxu0 0
      %3106 = vmatpush1.bf16.msra.mxu0 0
      %3107 = vmatprep.mubr.bf16.mxu0 0
      %3108 = vmatmul.mubr.bf16.gmra.mrb[0].mxu0 %v3023
      %v3109 = vpop.f32.mrb[0].mxu0
      %v3110 = vadd.f32 0.0, %v3109
      %v3111 = vpop.f32.mrb[0].mxu0
      %v3112 = vpop.f32.mrb[0].mxu0
      %v3113 = vpop.f32.mrb[0].mxu0
      %3114 = vdwg.mxu0
      %v3115 = vadd.f32 %v3006, %v3069
      %v3116 = vadd.f32 %v3007, %v3071
      %v3117 = vadd.f32 %v3008, %v3110
      %s3118 = scalar_lea.vmem %s1, 100
      %v3119 = vld [vmem:[%s3118] sm:$0xf]
      %3120 = vrot.lane.b32.xlu0 %v2898, 110
      %v3121 = vpop.permute.xlu0 %3120
      %3122 = vrot.lane.b32.xlu0 %v2899, 110
      %v3123 = vpop.permute.xlu0 %3122
      %3124 = vrot.lane.b32.xlu0 %v2900, 110
      %v3125 = vpop.permute.xlu0 %3124
      %3126 = vrot.lane.b32.xlu0 %v2901, 110
      %v3127 = vpop.permute.xlu0 %3126
      %v3128 = vsel %vm1069, %v3121, %v3123
      %v3129 = vsel %vm1069, %v3123, %v3125
      %v3130 = vsel %vm1069, %v3125, %v3127
      %v3132 = vsel %vm299, %v3119, 0
      %v3135 = vsel %vm303, %v3128, 0
      %v3138 = vsel %vm303, %v3129, 0
      %v3141 = vsel %vm303, %v3130, 0
      %3143 = vmatprep.subr.bf16.mxu0 %v3138
      %3144 = vmatpush1.bf16.msra.mxu0 %v3135
      %3145 = vmatprep.subr.bf16.mxu0 0
      %3146 = vmatpush1.bf16.msra.mxu0 0
      %3147 = vmatprep.subr.bf16.mxu0 0
      %3148 = vmatpush1.bf16.msra.mxu0 0
      %3149 = vmatprep.subr.bf16.mxu0 0
      %3150 = vmatpush1.bf16.msra.mxu0 0
      %3151 = vmatprep.subr.bf16.mxu0 0
      %3152 = vmatpush1.bf16.msra.mxu0 0
      %3153 = vmatprep.subr.bf16.mxu0 0
      %3154 = vmatpush1.bf16.msra.mxu0 0
      %3155 = vmatprep.subr.bf16.mxu0 0
      %3156 = vmatpush1.bf16.msra.mxu0 0
      %3157 = vmatprep.subr.bf16.mxu0 0
      %3158 = vmatpush1.bf16.msra.mxu0 0
      %3159 = vmatprep.subr.bf16.mxu0 0
      %3160 = vmatpush1.bf16.msra.mxu0 0
      %3161 = vmatprep.subr.bf16.mxu0 0
      %3162 = vmatpush1.bf16.msra.mxu0 0
      %3163 = vmatprep.subr.bf16.mxu0 0
      %3164 = vmatpush1.bf16.msra.mxu0 0
      %3165 = vmatprep.subr.bf16.mxu0 0
      %3166 = vmatpush1.bf16.msra.mxu0 0
      %3167 = vmatprep.subr.bf16.mxu0 0
      %3168 = vmatpush1.bf16.msra.mxu0 0
      %3169 = vmatprep.subr.bf16.mxu0 0
      %3170 = vmatpush1.bf16.msra.mxu0 0
      %3171 = vmatprep.subr.bf16.mxu0 0
      %3172 = vmatpush1.bf16.msra.mxu0 0
      %3173 = vmatprep.subr.bf16.mxu0 0
      %3174 = vmatpush1.bf16.msra.mxu0 0
      %3175 = vmatprep.mubr.bf16.mxu0 0
      %3176 = vmatmul.mubr.bf16.gmra.mrb[0].mxu0 %v3132
      %v3177 = vpop.f32.mrb[0].mxu0
      %v3178 = vadd.f32 0.0, %v3177
      %v3179 = vpop.f32.mrb[0].mxu0
      %v3180 = vadd.f32 0.0, %v3179
      %v3181 = vpop.f32.mrb[0].mxu0
      %v3182 = vpop.f32.mrb[0].mxu0
      %3183 = vdwg.mxu0
      %3184 = vmatprep.subr.bf16.mxu0 0
      %3185 = vmatpush1.bf16.msra.mxu0 %v3141
      %3186 = vmatprep.subr.bf16.mxu0 0
      %3187 = vmatpush1.bf16.msra.mxu0 0
      %3188 = vmatprep.subr.bf16.mxu0 0
      %3189 = vmatpush1.bf16.msra.mxu0 0
      %3190 = vmatprep.subr.bf16.mxu0 0
      %3191 = vmatpush1.bf16.msra.mxu0 0
      %3192 = vmatprep.subr.bf16.mxu0 0
      %3193 = vmatpush1.bf16.msra.mxu0 0
      %3194 = vmatprep.subr.bf16.mxu0 0
      %3195 = vmatpush1.bf16.msra.mxu0 0
      %3196 = vmatprep.subr.bf16.mxu0 0
      %3197 = vmatpush1.bf16.msra.mxu0 0
      %3198 = vmatprep.subr.bf16.mxu0 0
      %3199 = vmatpush1.bf16.msra.mxu0 0
      %3200 = vmatprep.subr.bf16.mxu0 0
      %3201 = vmatpush1.bf16.msra.mxu0 0
      %3202 = vmatprep.subr.bf16.mxu0 0
      %3203 = vmatpush1.bf16.msra.mxu0 0
      %3204 = vmatprep.subr.bf16.mxu0 0
      %3205 = vmatpush1.bf16.msra.mxu0 0
      %3206 = vmatprep.subr.bf16.mxu0 0
      %3207 = vmatpush1.bf16.msra.mxu0 0
      %3208 = vmatprep.subr.bf16.mxu0 0
      %3209 = vmatpush1.bf16.msra.mxu0 0
      %3210 = vmatprep.subr.bf16.mxu0 0
      %3211 = vmatpush1.bf16.msra.mxu0 0
      %3212 = vmatprep.subr.bf16.mxu0 0
      %3213 = vmatpush1.bf16.msra.mxu0 0
      %3214 = vmatprep.subr.bf16.mxu0 0
      %3215 = vmatpush1.bf16.msra.mxu0 0
      %3216 = vmatprep.mubr.bf16.mxu0 0
      %3217 = vmatmul.mubr.bf16.gmra.mrb[0].mxu0 %v3132
      %v3218 = vpop.f32.mrb[0].mxu0
      %v3219 = vadd.f32 0.0, %v3218
      %v3220 = vpop.f32.mrb[0].mxu0
      %v3221 = vpop.f32.mrb[0].mxu0
      %v3222 = vpop.f32.mrb[0].mxu0
      %3223 = vdwg.mxu0
      %v3224 = vadd.f32 %v3115, %v3178
      %v3225 = vadd.f32 %v3116, %v3180
      %v3226 = vadd.f32 %v3117, %v3219
      %s3227 = scalar_lea.vmem %s1, 104
      %v3228 = vld [vmem:[%s3227] sm:$0xf]
      %3229 = vrot.lane.b32.xlu0 %v2898, 109
      %v3230 = vpop.permute.xlu0 %3229
      %3231 = vrot.lane.b32.xlu0 %v2899, 109
      %v3232 = vpop.permute.xlu0 %3231
      %3233 = vrot.lane.b32.xlu0 %v2900, 109
      %v3234 = vpop.permute.xlu0 %3233
      %3235 = vrot.lane.b32.xlu0 %v2901, 109
      %v3236 = vpop.permute.xlu0 %3235
      %v3237 = vsel %vm1179, %v3230, %v3232
      %v3238 = vsel %vm1179, %v3232, %v3234
      %v3239 = vsel %vm1179, %v3234, %v3236
      %v3241 = vsel %vm299, %v3228, 0
      %v3244 = vsel %vm303, %v3237, 0
      %v3247 = vsel %vm303, %v3238, 0
      %v3250 = vsel %vm303, %v3239, 0
      %3252 = vmatprep.subr.bf16.mxu0 %v3247
      %3253 = vmatpush1.bf16.msra.mxu0 %v3244
      %3254 = vmatprep.subr.bf16.mxu0 0
      %3255 = vmatpush1.bf16.msra.mxu0 0
      %3256 = vmatprep.subr.bf16.mxu0 0
      %3257 = vmatpush1.bf16.msra.mxu0 0
      %3258 = vmatprep.subr.bf16.mxu0 0
      %3259 = vmatpush1.bf16.msra.mxu0 0
      %3260 = vmatprep.subr.bf16.mxu0 0
      %3261 = vmatpush1.bf16.msra.mxu0 0
      %3262 = vmatprep.subr.bf16.mxu0 0
      %3263 = vmatpush1.bf16.msra.mxu0 0
      %3264 = vmatprep.subr.bf16.mxu0 0
      %3265 = vmatpush1.bf16.msra.mxu0 0
      %3266 = vmatprep.subr.bf16.mxu0 0
      %3267 = vmatpush1.bf16.msra.mxu0 0
      %3268 = vmatprep.subr.bf16.mxu0 0
      %3269 = vmatpush1.bf16.msra.mxu0 0
      %3270 = vmatprep.subr.bf16.mxu0 0
      %3271 = vmatpush1.bf16.msra.mxu0 0
      %3272 = vmatprep.subr.bf16.mxu0 0
      %3273 = vmatpush1.bf16.msra.mxu0 0
      %3274 = vmatprep.subr.bf16.mxu0 0
      %3275 = vmatpush1.bf16.msra.mxu0 0
      %3276 = vmatprep.subr.bf16.mxu0 0
      %3277 = vmatpush1.bf16.msra.mxu0 0
      %3278 = vmatprep.subr.bf16.mxu0 0
      %3279 = vmatpush1.bf16.msra.mxu0 0
      %3280 = vmatprep.subr.bf16.mxu0 0
      %3281 = vmatpush1.bf16.msra.mxu0 0
      %3282 = vmatprep.subr.bf16.mxu0 0
      %3283 = vmatpush1.bf16.msra.mxu0 0
      %3284 = vmatprep.mubr.bf16.mxu0 0
      %3285 = vmatmul.mubr.bf16.gmra.mrb[0].mxu0 %v3241
      %v3286 = vpop.f32.mrb[0].mxu0
      %v3287 = vadd.f32 0.0, %v3286
      %v3288 = vpop.f32.mrb[0].mxu0
      %v3289 = vadd.f32 0.0, %v3288
      %v3290 = vpop.f32.mrb[0].mxu0
      %v3291 = vpop.f32.mrb[0].mxu0
      %3292 = vdwg.mxu0
      %3293 = vmatprep.subr.bf16.mxu0 0
      %3294 = vmatpush1.bf16.msra.mxu0 %v3250
      %3295 = vmatprep.subr.bf16.mxu0 0
      %3296 = vmatpush1.bf16.msra.mxu0 0
      %3297 = vmatprep.subr.bf16.mxu0 0
      %3298 = vmatpush1.bf16.msra.mxu0 0
      %3299 = vmatprep.subr.bf16.mxu0 0
      %3300 = vmatpush1.bf16.msra.mxu0 0
      %3301 = vmatprep.subr.bf16.mxu0 0
      %3302 = vmatpush1.bf16.msra.mxu0 0
      %3303 = vmatprep.subr.bf16.mxu0 0
      %3304 = vmatpush1.bf16.msra.mxu0 0
      %3305 = vmatprep.subr.bf16.mxu0 0
      %3306 = vmatpush1.bf16.msra.mxu0 0
      %3307 = vmatprep.subr.bf16.mxu0 0
      %3308 = vmatpush1.bf16.msra.mxu0 0
      %3309 = vmatprep.subr.bf16.mxu0 0
      %3310 = vmatpush1.bf16.msra.mxu0 0
      %3311 = vmatprep.subr.bf16.mxu0 0
      %3312 = vmatpush1.bf16.msra.mxu0 0
      %3313 = vmatprep.subr.bf16.mxu0 0
      %3314 = vmatpush1.bf16.msra.mxu0 0
      %3315 = vmatprep.subr.bf16.mxu0 0
      %3316 = vmatpush1.bf16.msra.mxu0 0
      %3317 = vmatprep.subr.bf16.mxu0 0
      %3318 = vmatpush1.bf16.msra.mxu0 0
      %3319 = vmatprep.subr.bf16.mxu0 0
      %3320 = vmatpush1.bf16.msra.mxu0 0
      %3321 = vmatprep.subr.bf16.mxu0 0
      %3322 = vmatpush1.bf16.msra.mxu0 0
      %3323 = vmatprep.subr.bf16.mxu0 0
      %3324 = vmatpush1.bf16.msra.mxu0 0
      %3325 = vmatprep.mubr.bf16.mxu0 0
      %3326 = vmatmul.mubr.bf16.gmra.mrb[0].mxu0 %v3241
      %v3327 = vpop.f32.mrb[0].mxu0
      %v3328 = vadd.f32 0.0, %v3327
      %v3329 = vpop.f32.mrb[0].mxu0
      %v3330 = vpop.f32.mrb[0].mxu0
      %v3331 = vpop.f32.mrb[0].mxu0
      %3332 = vdwg.mxu0
      %v3333 = vadd.f32 %v3224, %v3287
      %v3334 = vadd.f32 %v3225, %v3289
      %v3335 = vadd.f32 %v3226, %v3328
      %s3336 = scalar_lea.vmem %s2, 16
      %v3337 = vld [vmem:[%s3336] sm:$0xff]
      %3339 = vset.pattern.permute.xlu0 0
      %3340 = vperm.xlu0 %3339, %v3337
      %v3341 = vpop.permute.xlu0 %3340
      %v3343 = vadd.f32 %v3333, %v3341
      %v3344 = vadd.f32 %v3334, %v3341
      %v3345 = vadd.f32 %v3335, %v3341
      %v3346 = vmax.f32 %v3343, 0.0
      %v3347 = vmax.f32 %v3344, 0.0
      %v3348 = vmax.f32 %v3345, 0.0
      %v3349 = vmul.f32 %v3346, %v260
      %v3350 = vmul.f32 %v3347, %v264
      %v3351 = vmul.f32 %v3348, %v268
      %v3352 = vpack.c.bf16 %v3349, %v3349
      %v3353 = vpack.c.bf16 %v3350, %v3350
      %v3354 = vpack.c.bf16 %v3351, %v3351
      %v3358 = vunpack.c.l.b16 %v3352
      %v3359 = vunpack.c.l.b16 %v3353
      %v3360 = vunpack.c.l.b16 %v3354
      %v3361 = vpack.c.b16 %v3359, %v3358
      %v3362 = vpack.c.b16 %v3360, %v3360
      %3365 = vst [vmem:[#allocation2 + $0x4] sm:$0xff] %v3361
      %3366 = vst [vmem:[#allocation2 + $0xc] sm:$0xf] %v3362
      %v3367 = vld [vmem:[#allocation2] sm:$0xff]
      %v3368 = vld [vmem:[#allocation2 + $0x8] sm:$0xff]
      %s3369 = scalar_lea.vmem %s1, 108
      %v3370 = vld [vmem:[%s3369] sm:$0xf]
      %s3371 = scalar_lea.vmem %s1, 112
      %v3372 = vld [vmem:[%s3371] sm:$0xf]
      %v3375 = vunpack.c.l.b16 %v3367
      %v3376 = vunpack.c.h.b16 %v3367
      %v3377 = vunpack.c.l.b16 %v3368
      %v3378 = vunpack.c.h.b16 %v3368
      %v3379 = vpack.c.b16 %v3375, %v3375
      %v3380 = vpack.c.b16 %v3376, %v3376
      %v3381 = vpack.c.b16 %v3377, %v3377
      %v3382 = vpack.c.b16 %v3378, %v3378
      %3383 = vrot.lane.b32.xlu0 %v3379, 18
      %v3384 = vpop.permute.xlu0 %3383
      %3385 = vrot.lane.b32.xlu0 %v3380, 18
      %v3386 = vpop.permute.xlu0 %3385
      %3387 = vrot.lane.b32.xlu0 %v3381, 18
      %v3388 = vpop.permute.xlu0 %3387
      %3389 = vrot.lane.b32.xlu0 %v3382, 18
      %v3390 = vpop.permute.xlu0 %3389
      %v3391 = vsel %vm295, %v3384, %v3386
      %v3392 = vsel %vm295, %v3386, %v3388
      %v3393 = vsel %vm295, %v3388, %v3390
      %v3395 = vsel %vm299, %v3372, 0
      %v3398 = vsel %vm303, %v3391, 0
      %v3401 = vsel %vm303, %v3392, 0
      %v3404 = vsel %vm303, %v3393, 0
      %3406 = vmatprep.subr.bf16.mxu0 %v3401
      %3407 = vmatpush1.bf16.msra.mxu0 %v3398
      %3408 = vmatprep.subr.bf16.mxu0 0
      %3409 = vmatpush1.bf16.msra.mxu0 0
      %3410 = vmatprep.subr.bf16.mxu0 0
      %3411 = vmatpush1.bf16.msra.mxu0 0
      %3412 = vmatprep.subr.bf16.mxu0 0
      %3413 = vmatpush1.bf16.msra.mxu0 0
      %3414 = vmatprep.subr.bf16.mxu0 0
      %3415 = vmatpush1.bf16.msra.mxu0 0
      %3416 = vmatprep.subr.bf16.mxu0 0
      %3417 = vmatpush1.bf16.msra.mxu0 0
      %3418 = vmatprep.subr.bf16.mxu0 0
      %3419 = vmatpush1.bf16.msra.mxu0 0
      %3420 = vmatprep.subr.bf16.mxu0 0
      %3421 = vmatpush1.bf16.msra.mxu0 0
      %3422 = vmatprep.subr.bf16.mxu0 0
      %3423 = vmatpush1.bf16.msra.mxu0 0
      %3424 = vmatprep.subr.bf16.mxu0 0
      %3425 = vmatpush1.bf16.msra.mxu0 0
      %3426 = vmatprep.subr.bf16.mxu0 0
      %3427 = vmatpush1.bf16.msra.mxu0 0
      %3428 = vmatprep.subr.bf16.mxu0 0
      %3429 = vmatpush1.bf16.msra.mxu0 0
      %3430 = vmatprep.subr.bf16.mxu0 0
      %3431 = vmatpush1.bf16.msra.mxu0 0
      %3432 = vmatprep.subr.bf16.mxu0 0
      %3433 = vmatpush1.bf16.msra.mxu0 0
      %3434 = vmatprep.subr.bf16.mxu0 0
      %3435 = vmatpush1.bf16.msra.mxu0 0
      %3436 = vmatprep.subr.bf16.mxu0 0
      %3437 = vmatpush1.bf16.msra.mxu0 0
      %3438 = vmatprep.mubr.bf16.mxu0 0
      %3439 = vmatmul.mubr.bf16.gmra.mrb[0].mxu0 %v3395
      %v3440 = vpop.f32.mrb[0].mxu0
      %v3441 = vadd.f32 0.0, %v3440
      %v3442 = vpop.f32.mrb[0].mxu0
      %v3443 = vadd.f32 0.0, %v3442
      %v3444 = vpop.f32.mrb[0].mxu0
      %v3445 = vpop.f32.mrb[0].mxu0
      %3446 = vdwg.mxu0
      %3447 = vmatprep.subr.bf16.mxu0 0
      %3448 = vmatpush1.bf16.msra.mxu0 %v3404
      %3449 = vmatprep.subr.bf16.mxu0 0
      %3450 = vmatpush1.bf16.msra.mxu0 0
      %3451 = vmatprep.subr.bf16.mxu0 0
      %3452 = vmatpush1.bf16.msra.mxu0 0
      %3453 = vmatprep.subr.bf16.mxu0 0
      %3454 = vmatpush1.bf16.msra.mxu0 0
      %3455 = vmatprep.subr.bf16.mxu0 0
      %3456 = vmatpush1.bf16.msra.mxu0 0
      %3457 = vmatprep.subr.bf16.mxu0 0
      %3458 = vmatpush1.bf16.msra.mxu0 0
      %3459 = vmatprep.subr.bf16.mxu0 0
      %3460 = vmatpush1.bf16.msra.mxu0 0
      %3461 = vmatprep.subr.bf16.mxu0 0
      %3462 = vmatpush1.bf16.msra.mxu0 0
      %3463 = vmatprep.subr.bf16.mxu0 0
      %3464 = vmatpush1.bf16.msra.mxu0 0
      %3465 = vmatprep.subr.bf16.mxu0 0
      %3466 = vmatpush1.bf16.msra.mxu0 0
      %3467 = vmatprep.subr.bf16.mxu0 0
      %3468 = vmatpush1.bf16.msra.mxu0 0
      %3469 = vmatprep.subr.bf16.mxu0 0
      %3470 = vmatpush1.bf16.msra.mxu0 0
      %3471 = vmatprep.subr.bf16.mxu0 0
      %3472 = vmatpush1.bf16.msra.mxu0 0
      %3473 = vmatprep.subr.bf16.mxu0 0
      %3474 = vmatpush1.bf16.msra.mxu0 0
      %3475 = vmatprep.subr.bf16.mxu0 0
      %3476 = vmatpush1.bf16.msra.mxu0 0
      %3477 = vmatprep.subr.bf16.mxu0 0
      %3478 = vmatpush1.bf16.msra.mxu0 0
      %3479 = vmatprep.mubr.bf16.mxu0 0
      %3480 = vmatmul.mubr.bf16.gmra.mrb[0].mxu0 %v3395
      %v3481 = vpop.f32.mrb[0].mxu0
      %v3482 = vadd.f32 0.0, %v3481
      %v3483 = vpop.f32.mrb[0].mxu0
      %v3484 = vpop.f32.mrb[0].mxu0
      %v3485 = vpop.f32.mrb[0].mxu0
      %3486 = vdwg.mxu0
      %3487 = vrot.lane.b32.xlu0 %v3379, 19
      %v3488 = vpop.permute.xlu0 %3487
      %3489 = vrot.lane.b32.xlu0 %v3380, 19
      %v3490 = vpop.permute.xlu0 %3489
      %3491 = vrot.lane.b32.xlu0 %v3381, 19
      %v3492 = vpop.permute.xlu0 %3491
      %3493 = vrot.lane.b32.xlu0 %v3382, 19
      %v3494 = vpop.permute.xlu0 %3493
      %v3495 = vsel %vm402, %v3488, %v3490
      %v3496 = vsel %vm402, %v3490, %v3492
      %v3497 = vsel %vm402, %v3492, %v3494
      %v3499 = vsel %vm299, %v3370, 0
      %v3502 = vsel %vm303, %v3495, 0
      %v3505 = vsel %vm303, %v3496, 0
      %v3508 = vsel %vm303, %v3497, 0
      %3510 = vmatprep.subr.bf16.mxu0 %v3505
      %3511 = vmatpush1.bf16.msra.mxu0 %v3502
      %3512 = vmatprep.subr.bf16.mxu0 0
      %3513 = vmatpush1.bf16.msra.mxu0 0
      %3514 = vmatprep.subr.bf16.mxu0 0
      %3515 = vmatpush1.bf16.msra.mxu0 0
      %3516 = vmatprep.subr.bf16.mxu0 0
      %3517 = vmatpush1.bf16.msra.mxu0 0
      %3518 = vmatprep.subr.bf16.mxu0 0
      %3519 = vmatpush1.bf16.msra.mxu0 0
      %3520 = vmatprep.subr.bf16.mxu0 0
      %3521 = vmatpush1.bf16.msra.mxu0 0
      %3522 = vmatprep.subr.bf16.mxu0 0
      %3523 = vmatpush1.bf16.msra.mxu0 0
      %3524 = vmatprep.subr.bf16.mxu0 0
      %3525 = vmatpush1.bf16.msra.mxu0 0
      %3526 = vmatprep.subr.bf16.mxu0 0
      %3527 = vmatpush1.bf16.msra.mxu0 0
      %3528 = vmatprep.subr.bf16.mxu0 0
      %3529 = vmatpush1.bf16.msra.mxu0 0
      %3530 = vmatprep.subr.bf16.mxu0 0
      %3531 = vmatpush1.bf16.msra.mxu0 0
      %3532 = vmatprep.subr.bf16.mxu0 0
      %3533 = vmatpush1.bf16.msra.mxu0 0
      %3534 = vmatprep.subr.bf16.mxu0 0
      %3535 = vmatpush1.bf16.msra.mxu0 0
      %3536 = vmatprep.subr.bf16.mxu0 0
      %3537 = vmatpush1.bf16.msra.mxu0 0
      %3538 = vmatprep.subr.bf16.mxu0 0
      %3539 = vmatpush1.bf16.msra.mxu0 0
      %3540 = vmatprep.subr.bf16.mxu0 0
      %3541 = vmatpush1.bf16.msra.mxu0 0
      %3542 = vmatprep.mubr.bf16.mxu0 0
      %3543 = vmatmul.mubr.bf16.gmra.mrb[0].mxu0 %v3499
      %v3544 = vpop.f32.mrb[0].mxu0
      %v3545 = vadd.f32 %v3441, %v3544
      %v3546 = vpop.f32.mrb[0].mxu0
      %v3547 = vadd.f32 %v3443, %v3546
      %v3548 = vpop.f32.mrb[0].mxu0
      %v3549 = vpop.f32.mrb[0].mxu0
      %3550 = vdwg.mxu0
      %3551 = vmatprep.subr.bf16.mxu0 0
      %3552 = vmatpush1.bf16.msra.mxu0 %v3508
      %3553 = vmatprep.subr.bf16.mxu0 0
      %3554 = vmatpush1.bf16.msra.mxu0 0
      %3555 = vmatprep.subr.bf16.mxu0 0
      %3556 = vmatpush1.bf16.msra.mxu0 0
      %3557 = vmatprep.subr.bf16.mxu0 0
      %3558 = vmatpush1.bf16.msra.mxu0 0
      %3559 = vmatprep.subr.bf16.mxu0 0
      %3560 = vmatpush1.bf16.msra.mxu0 0
      %3561 = vmatprep.subr.bf16.mxu0 0
      %3562 = vmatpush1.bf16.msra.mxu0 0
      %3563 = vmatprep.subr.bf16.mxu0 0
      %3564 = vmatpush1.bf16.msra.mxu0 0
      %3565 = vmatprep.subr.bf16.mxu0 0
      %3566 = vmatpush1.bf16.msra.mxu0 0
      %3567 = vmatprep.subr.bf16.mxu0 0
      %3568 = vmatpush1.bf16.msra.mxu0 0
      %3569 = vmatprep.subr.bf16.mxu0 0
      %3570 = vmatpush1.bf16.msra.mxu0 0
      %3571 = vmatprep.subr.bf16.mxu0 0
      %3572 = vmatpush1.bf16.msra.mxu0 0
      %3573 = vmatprep.subr.bf16.mxu0 0
      %3574 = vmatpush1.bf16.msra.mxu0 0
      %3575 = vmatprep.subr.bf16.mxu0 0
      %3576 = vmatpush1.bf16.msra.mxu0 0
      %3577 = vmatprep.subr.bf16.mxu0 0
      %3578 = vmatpush1.bf16.msra.mxu0 0
      %3579 = vmatprep.subr.bf16.mxu0 0
      %3580 = vmatpush1.bf16.msra.mxu0 0
      %3581 = vmatprep.subr.bf16.mxu0 0
      %3582 = vmatpush1.bf16.msra.mxu0 0
      %3583 = vmatprep.mubr.bf16.mxu0 0
      %3584 = vmatmul.mubr.bf16.gmra.mrb[0].mxu0 %v3499
      %v3585 = vpop.f32.mrb[0].mxu0
      %v3586 = vadd.f32 %v3482, %v3585
      %v3587 = vpop.f32.mrb[0].mxu0
      %v3588 = vpop.f32.mrb[0].mxu0
      %v3589 = vpop.f32.mrb[0].mxu0
      %3590 = vdwg.mxu0
      %s3591 = scalar_lea.vmem %s1, 116
      %v3592 = vld [vmem:[%s3591] sm:$0xf]
      %3593 = vrot.lane.b32.xlu0 %v3379, 17
      %v3594 = vpop.permute.xlu0 %3593
      %3595 = vrot.lane.b32.xlu0 %v3380, 17
      %v3596 = vpop.permute.xlu0 %3595
      %3597 = vrot.lane.b32.xlu0 %v3381, 17
      %v3598 = vpop.permute.xlu0 %3597
      %3599 = vrot.lane.b32.xlu0 %v3382, 17
      %v3600 = vpop.permute.xlu0 %3599
      %v3601 = vsel %vm509, %v3594, %v3596
      %v3602 = vsel %vm509, %v3596, %v3598
      %v3603 = vsel %vm509, %v3598, %v3600
      %v3605 = vsel %vm299, %v3592, 0
      %v3608 = vsel %vm303, %v3601, 0
      %v3611 = vsel %vm303, %v3602, 0
      %v3614 = vsel %vm303, %v3603, 0
      %3616 = vmatprep.subr.bf16.mxu0 %v3611
      %3617 = vmatpush1.bf16.msra.mxu0 %v3608
      %3618 = vmatprep.subr.bf16.mxu0 0
      %3619 = vmatpush1.bf16.msra.mxu0 0
      %3620 = vmatprep.subr.bf16.mxu0 0
      %3621 = vmatpush1.bf16.msra.mxu0 0
      %3622 = vmatprep.subr.bf16.mxu0 0
      %3623 = vmatpush1.bf16.msra.mxu0 0
      %3624 = vmatprep.subr.bf16.mxu0 0
      %3625 = vmatpush1.bf16.msra.mxu0 0
      %3626 = vmatprep.subr.bf16.mxu0 0
      %3627 = vmatpush1.bf16.msra.mxu0 0
      %3628 = vmatprep.subr.bf16.mxu0 0
      %3629 = vmatpush1.bf16.msra.mxu0 0
      %3630 = vmatprep.subr.bf16.mxu0 0
      %3631 = vmatpush1.bf16.msra.mxu0 0
      %3632 = vmatprep.subr.bf16.mxu0 0
      %3633 = vmatpush1.bf16.msra.mxu0 0
      %3634 = vmatprep.subr.bf16.mxu0 0
      %3635 = vmatpush1.bf16.msra.mxu0 0
      %3636 = vmatprep.subr.bf16.mxu0 0
      %3637 = vmatpush1.bf16.msra.mxu0 0
      %3638 = vmatprep.subr.bf16.mxu0 0
      %3639 = vmatpush1.bf16.msra.mxu0 0
      %3640 = vmatprep.subr.bf16.mxu0 0
      %3641 = vmatpush1.bf16.msra.mxu0 0
      %3642 = vmatprep.subr.bf16.mxu0 0
      %3643 = vmatpush1.bf16.msra.mxu0 0
      %3644 = vmatprep.subr.bf16.mxu0 0
      %3645 = vmatpush1.bf16.msra.mxu0 0
      %3646 = vmatprep.subr.bf16.mxu0 0
      %3647 = vmatpush1.bf16.msra.mxu0 0
      %3648 = vmatprep.mubr.bf16.mxu0 0
      %3649 = vmatmul.mubr.bf16.gmra.mrb[0].mxu0 %v3605
      %v3650 = vpop.f32.mrb[0].mxu0
      %v3651 = vadd.f32 0.0, %v3650
      %v3652 = vpop.f32.mrb[0].mxu0
      %v3653 = vadd.f32 0.0, %v3652
      %v3654 = vpop.f32.mrb[0].mxu0
      %v3655 = vpop.f32.mrb[0].mxu0
      %3656 = vdwg.mxu0
      %3657 = vmatprep.subr.bf16.mxu0 0
      %3658 = vmatpush1.bf16.msra.mxu0 %v3614
      %3659 = vmatprep.subr.bf16.mxu0 0
      %3660 = vmatpush1.bf16.msra.mxu0 0
      %3661 = vmatprep.subr.bf16.mxu0 0
      %3662 = vmatpush1.bf16.msra.mxu0 0
      %3663 = vmatprep.subr.bf16.mxu0 0
      %3664 = vmatpush1.bf16.msra.mxu0 0
      %3665 = vmatprep.subr.bf16.mxu0 0
      %3666 = vmatpush1.bf16.msra.mxu0 0
      %3667 = vmatprep.subr.bf16.mxu0 0
      %3668 = vmatpush1.bf16.msra.mxu0 0
      %3669 = vmatprep.subr.bf16.mxu0 0
      %3670 = vmatpush1.bf16.msra.mxu0 0
      %3671 = vmatprep.subr.bf16.mxu0 0
      %3672 = vmatpush1.bf16.msra.mxu0 0
      %3673 = vmatprep.subr.bf16.mxu0 0
      %3674 = vmatpush1.bf16.msra.mxu0 0
      %3675 = vmatprep.subr.bf16.mxu0 0
      %3676 = vmatpush1.bf16.msra.mxu0 0
      %3677 = vmatprep.subr.bf16.mxu0 0
      %3678 = vmatpush1.bf16.msra.mxu0 0
      %3679 = vmatprep.subr.bf16.mxu0 0
      %3680 = vmatpush1.bf16.msra.mxu0 0
      %3681 = vmatprep.subr.bf16.mxu0 0
      %3682 = vmatpush1.bf16.msra.mxu0 0
      %3683 = vmatprep.subr.bf16.mxu0 0
      %3684 = vmatpush1.bf16.msra.mxu0 0
      %3685 = vmatprep.subr.bf16.mxu0 0
      %3686 = vmatpush1.bf16.msra.mxu0 0
      %3687 = vmatprep.subr.bf16.mxu0 0
      %3688 = vmatpush1.bf16.msra.mxu0 0
      %3689 = vmatprep.mubr.bf16.mxu0 0
      %3690 = vmatmul.mubr.bf16.gmra.mrb[0].mxu0 %v3605
      %v3691 = vpop.f32.mrb[0].mxu0
      %v3692 = vadd.f32 0.0, %v3691
      %v3693 = vpop.f32.mrb[0].mxu0
      %v3694 = vpop.f32.mrb[0].mxu0
      %v3695 = vpop.f32.mrb[0].mxu0
      %3696 = vdwg.mxu0
      %v3697 = vadd.f32 %v3545, %v3651
      %v3698 = vadd.f32 %v3547, %v3653
      %v3699 = vadd.f32 %v3586, %v3692
      %s3700 = scalar_lea.vmem %s1, 120
      %v3701 = vld [vmem:[%s3700] sm:$0xf]
      %3702 = vrot.lane.b32.xlu0 %v3379, 1
      %v3703 = vpop.permute.xlu0 %3702
      %3704 = vrot.lane.b32.xlu0 %v3380, 1
      %v3705 = vpop.permute.xlu0 %3704
      %3706 = vrot.lane.b32.xlu0 %v3381, 1
      %v3707 = vpop.permute.xlu0 %3706
      %3708 = vrot.lane.b32.xlu0 %v3382, 1
      %v3709 = vpop.permute.xlu0 %3708
      %v3710 = vsel %vm619, %v3703, %v3705
      %v3711 = vsel %vm619, %v3705, %v3707
      %v3712 = vsel %vm619, %v3707, %v3709
      %v3714 = vsel %vm299, %v3701, 0
      %v3717 = vsel %vm303, %v3710, 0
      %v3720 = vsel %vm303, %v3711, 0
      %v3723 = vsel %vm303, %v3712, 0
      %3725 = vmatprep.subr.bf16.mxu0 %v3720
      %3726 = vmatpush1.bf16.msra.mxu0 %v3717
      %3727 = vmatprep.subr.bf16.mxu0 0
      %3728 = vmatpush1.bf16.msra.mxu0 0
      %3729 = vmatprep.subr.bf16.mxu0 0
      %3730 = vmatpush1.bf16.msra.mxu0 0
      %3731 = vmatprep.subr.bf16.mxu0 0
      %3732 = vmatpush1.bf16.msra.mxu0 0
      %3733 = vmatprep.subr.bf16.mxu0 0
      %3734 = vmatpush1.bf16.msra.mxu0 0
      %3735 = vmatprep.subr.bf16.mxu0 0
      %3736 = vmatpush1.bf16.msra.mxu0 0
      %3737 = vmatprep.subr.bf16.mxu0 0
      %3738 = vmatpush1.bf16.msra.mxu0 0
      %3739 = vmatprep.subr.bf16.mxu0 0
      %3740 = vmatpush1.bf16.msra.mxu0 0
      %3741 = vmatprep.subr.bf16.mxu0 0
      %3742 = vmatpush1.bf16.msra.mxu0 0
      %3743 = vmatprep.subr.bf16.mxu0 0
      %3744 = vmatpush1.bf16.msra.mxu0 0
      %3745 = vmatprep.subr.bf16.mxu0 0
      %3746 = vmatpush1.bf16.msra.mxu0 0
      %3747 = vmatprep.subr.bf16.mxu0 0
      %3748 = vmatpush1.bf16.msra.mxu0 0
      %3749 = vmatprep.subr.bf16.mxu0 0
      %3750 = vmatpush1.bf16.msra.mxu0 0
      %3751 = vmatprep.subr.bf16.mxu0 0
      %3752 = vmatpush1.bf16.msra.mxu0 0
      %3753 = vmatprep.subr.bf16.mxu0 0
      %3754 = vmatpush1.bf16.msra.mxu0 0
      %3755 = vmatprep.subr.bf16.mxu0 0
      %3756 = vmatpush1.bf16.msra.mxu0 0
      %3757 = vmatprep.mubr.bf16.mxu0 0
      %3758 = vmatmul.mubr.bf16.gmra.mrb[0].mxu0 %v3714
      %v3759 = vpop.f32.mrb[0].mxu0
      %v3760 = vadd.f32 0.0, %v3759
      %v3761 = vpop.f32.mrb[0].mxu0
      %v3762 = vadd.f32 0.0, %v3761
      %v3763 = vpop.f32.mrb[0].mxu0
      %v3764 = vpop.f32.mrb[0].mxu0
      %3765 = vdwg.mxu0
      %3766 = vmatprep.subr.bf16.mxu0 0
      %3767 = vmatpush1.bf16.msra.mxu0 %v3723
      %3768 = vmatprep.subr.bf16.mxu0 0
      %3769 = vmatpush1.bf16.msra.mxu0 0
      %3770 = vmatprep.subr.bf16.mxu0 0
      %3771 = vmatpush1.bf16.msra.mxu0 0
      %3772 = vmatprep.subr.bf16.mxu0 0
      %3773 = vmatpush1.bf16.msra.mxu0 0
      %3774 = vmatprep.subr.bf16.mxu0 0
      %3775 = vmatpush1.bf16.msra.mxu0 0
      %3776 = vmatprep.subr.bf16.mxu0 0
      %3777 = vmatpush1.bf16.msra.mxu0 0
      %3778 = vmatprep.subr.bf16.mxu0 0
      %3779 = vmatpush1.bf16.msra.mxu0 0
      %3780 = vmatprep.subr.bf16.mxu0 0
      %3781 = vmatpush1.bf16.msra.mxu0 0
      %3782 = vmatprep.subr.bf16.mxu0 0
      %3783 = vmatpush1.bf16.msra.mxu0 0
      %3784 = vmatprep.subr.bf16.mxu0 0
      %3785 = vmatpush1.bf16.msra.mxu0 0
      %3786 = vmatprep.subr.bf16.mxu0 0
      %3787 = vmatpush1.bf16.msra.mxu0 0
      %3788 = vmatprep.subr.bf16.mxu0 0
      %3789 = vmatpush1.bf16.msra.mxu0 0
      %3790 = vmatprep.subr.bf16.mxu0 0
      %3791 = vmatpush1.bf16.msra.mxu0 0
      %3792 = vmatprep.subr.bf16.mxu0 0
      %3793 = vmatpush1.bf16.msra.mxu0 0
      %3794 = vmatprep.subr.bf16.mxu0 0
      %3795 = vmatpush1.bf16.msra.mxu0 0
      %3796 = vmatprep.subr.bf16.mxu0 0
      %3797 = vmatpush1.bf16.msra.mxu0 0
      %3798 = vmatprep.mubr.bf16.mxu0 0
      %3799 = vmatmul.mubr.bf16.gmra.mrb[0].mxu0 %v3714
      %v3800 = vpop.f32.mrb[0].mxu0
      %v3801 = vadd.f32 0.0, %v3800
      %v3802 = vpop.f32.mrb[0].mxu0
      %v3803 = vpop.f32.mrb[0].mxu0
      %v3804 = vpop.f32.mrb[0].mxu0
      %3805 = vdwg.mxu0
      %v3806 = vadd.f32 %v3697, %v3760
      %v3807 = vadd.f32 %v3698, %v3762
      %v3808 = vadd.f32 %v3699, %v3801
      %v3809 = vld [vmem:[#allocation2 + $0x4] sm:$0xff]
      %v3810 = vld [vmem:[#allocation2 + $0xc] sm:$0xf]
      %s3811 = scalar_lea.vmem %s1, 124
      %v3812 = vld [vmem:[%s3811] sm:$0xf]
      %v3815 = vunpack.c.l.b16 %v3809
      %v3816 = vunpack.c.h.b16 %v3809
      %v3817 = vunpack.c.l.b16 %v3810
      %v3818 = vpack.c.b16 %v3815, %v3815
      %v3819 = vpack.c.b16 %v3816, %v3816
      %v3820 = vpack.c.b16 %v3817, %v3817
      %v3822 = vsel %vm299, %v3812, 0
      %v3825 = vsel %vm303, %v3818, 0
      %v3828 = vsel %vm303, %v3819, 0
      %v3831 = vsel %vm303, %v3820, 0
      %3833 = vmatprep.subr.bf16.mxu0 %v3828
      %3834 = vmatpush1.bf16.msra.mxu0 %v3825
      %3835 = vmatprep.subr.bf16.mxu0 0
      %3836 = vmatpush1.bf16.msra.mxu0 0
      %3837 = vmatprep.subr.bf16.mxu0 0
      %3838 = vmatpush1.bf16.msra.mxu0 0
      %3839 = vmatprep.subr.bf16.mxu0 0
      %3840 = vmatpush1.bf16.msra.mxu0 0
      %3841 = vmatprep.subr.bf16.mxu0 0
      %3842 = vmatpush1.bf16.msra.mxu0 0
      %3843 = vmatprep.subr.bf16.mxu0 0
      %3844 = vmatpush1.bf16.msra.mxu0 0
      %3845 = vmatprep.subr.bf16.mxu0 0
      %3846 = vmatpush1.bf16.msra.mxu0 0
      %3847 = vmatprep.subr.bf16.mxu0 0
      %3848 = vmatpush1.bf16.msra.mxu0 0
      %3849 = vmatprep.subr.bf16.mxu0 0
      %3850 = vmatpush1.bf16.msra.mxu0 0
      %3851 = vmatprep.subr.bf16.mxu0 0
      %3852 = vmatpush1.bf16.msra.mxu0 0
      %3853 = vmatprep.subr.bf16.mxu0 0
      %3854 = vmatpush1.bf16.msra.mxu0 0
      %3855 = vmatprep.subr.bf16.mxu0 0
      %3856 = vmatpush1.bf16.msra.mxu0 0
      %3857 = vmatprep.subr.bf16.mxu0 0
      %3858 = vmatpush1.bf16.msra.mxu0 0
      %3859 = vmatprep.subr.bf16.mxu0 0
      %3860 = vmatpush1.bf16.msra.mxu0 0
      %3861 = vmatprep.subr.bf16.mxu0 0
      %3862 = vmatpush1.bf16.msra.mxu0 0
      %3863 = vmatprep.subr.bf16.mxu0 0
      %3864 = vmatpush1.bf16.msra.mxu0 0
      %3865 = vmatprep.mubr.bf16.mxu0 0
      %3866 = vmatmul.mubr.bf16.gmra.mrb[0].mxu0 %v3822
      %v3867 = vpop.f32.mrb[0].mxu0
      %v3868 = vadd.f32 0.0, %v3867
      %v3869 = vpop.f32.mrb[0].mxu0
      %v3870 = vadd.f32 0.0, %v3869
      %v3871 = vpop.f32.mrb[0].mxu0
      %v3872 = vpop.f32.mrb[0].mxu0
      %3873 = vdwg.mxu0
      %3874 = vmatprep.subr.bf16.mxu0 0
      %3875 = vmatpush1.bf16.msra.mxu0 %v3831
      %3876 = vmatprep.subr.bf16.mxu0 0
      %3877 = vmatpush1.bf16.msra.mxu0 0
      %3878 = vmatprep.subr.bf16.mxu0 0
      %3879 = vmatpush1.bf16.msra.mxu0 0
      %3880 = vmatprep.subr.bf16.mxu0 0
      %3881 = vmatpush1.bf16.msra.mxu0 0
      %3882 = vmatprep.subr.bf16.mxu0 0
      %3883 = vmatpush1.bf16.msra.mxu0 0
      %3884 = vmatprep.subr.bf16.mxu0 0
      %3885 = vmatpush1.bf16.msra.mxu0 0
      %3886 = vmatprep.subr.bf16.mxu0 0
      %3887 = vmatpush1.bf16.msra.mxu0 0
      %3888 = vmatprep.subr.bf16.mxu0 0
      %3889 = vmatpush1.bf16.msra.mxu0 0
      %3890 = vmatprep.subr.bf16.mxu0 0
      %3891 = vmatpush1.bf16.msra.mxu0 0
      %3892 = vmatprep.subr.bf16.mxu0 0
      %3893 = vmatpush1.bf16.msra.mxu0 0
      %3894 = vmatprep.subr.bf16.mxu0 0
      %3895 = vmatpush1.bf16.msra.mxu0 0
      %3896 = vmatprep.subr.bf16.mxu0 0
      %3897 = vmatpush1.bf16.msra.mxu0 0
      %3898 = vmatprep.subr.bf16.mxu0 0
      %3899 = vmatpush1.bf16.msra.mxu0 0
      %3900 = vmatprep.subr.bf16.mxu0 0
      %3901 = vmatpush1.bf16.msra.mxu0 0
      %3902 = vmatprep.subr.bf16.mxu0 0
      %3903 = vmatpush1.bf16.msra.mxu0 0
      %3904 = vmatprep.subr.bf16.mxu0 0
      %3905 = vmatpush1.bf16.msra.mxu0 0
      %3906 = vmatprep.mubr.bf16.mxu0 0
      %3907 = vmatmul.mubr.bf16.gmra.mrb[0].mxu0 %v3822
      %v3908 = vpop.f32.mrb[0].mxu0
      %v3909 = vadd.f32 0.0, %v3908
      %v3910 = vpop.f32.mrb[0].mxu0
      %v3911 = vpop.f32.mrb[0].mxu0
      %v3912 = vpop.f32.mrb[0].mxu0
      %3913 = vdwg.mxu0
      %v3914 = vadd.f32 %v3806, %v3868
      %v3915 = vadd.f32 %v3807, %v3870
      %v3916 = vadd.f32 %v3808, %v3909
      %v3917 = vld [vmem:[#allocation2 + $0x4] sm:$0xff]
      %v3918 = vld [vmem:[#allocation2 + $0xc] sm:$0xff]
      %s3919 = scalar_lea.vmem %s1, 128
      %v3920 = vld [vmem:[%s3919] sm:$0xf]
      %v3923 = vunpack.c.l.b16 %v3917
      %v3924 = vunpack.c.h.b16 %v3917
      %v3925 = vunpack.c.l.b16 %v3918
      %v3926 = vunpack.c.h.b16 %v3918
      %v3927 = vpack.c.b16 %v3923, %v3923
      %v3928 = vpack.c.b16 %v3924, %v3924
      %v3929 = vpack.c.b16 %v3925, %v3925
      %v3930 = vpack.c.b16 %v3926, %v3926
      %3931 = vrot.lane.b32.xlu0 %v3927, 127
      %v3932 = vpop.permute.xlu0 %3931
      %3933 = vrot.lane.b32.xlu0 %v3928, 127
      %v3934 = vpop.permute.xlu0 %3933
      %3935 = vrot.lane.b32.xlu0 %v3929, 127
      %v3936 = vpop.permute.xlu0 %3935
      %3937 = vrot.lane.b32.xlu0 %v3930, 127
      %v3938 = vpop.permute.xlu0 %3937
      %v3939 = vsel %vm849, %v3932, %v3934
      %v3940 = vsel %vm849, %v3934, %v3936
      %v3941 = vsel %vm849, %v3936, %v3938
      %v3943 = vsel %vm299, %v3920, 0
      %v3946 = vsel %vm303, %v3939, 0
      %v3949 = vsel %vm303, %v3940, 0
      %v3952 = vsel %vm303, %v3941, 0
      %3954 = vmatprep.subr.bf16.mxu0 %v3949
      %3955 = vmatpush1.bf16.msra.mxu0 %v3946
      %3956 = vmatprep.subr.bf16.mxu0 0
      %3957 = vmatpush1.bf16.msra.mxu0 0
      %3958 = vmatprep.subr.bf16.mxu0 0
      %3959 = vmatpush1.bf16.msra.mxu0 0
      %3960 = vmatprep.subr.bf16.mxu0 0
      %3961 = vmatpush1.bf16.msra.mxu0 0
      %3962 = vmatprep.subr.bf16.mxu0 0
      %3963 = vmatpush1.bf16.msra.mxu0 0
      %3964 = vmatprep.subr.bf16.mxu0 0
      %3965 = vmatpush1.bf16.msra.mxu0 0
      %3966 = vmatprep.subr.bf16.mxu0 0
      %3967 = vmatpush1.bf16.msra.mxu0 0
      %3968 = vmatprep.subr.bf16.mxu0 0
      %3969 = vmatpush1.bf16.msra.mxu0 0
      %3970 = vmatprep.subr.bf16.mxu0 0
      %3971 = vmatpush1.bf16.msra.mxu0 0
      %3972 = vmatprep.subr.bf16.mxu0 0
      %3973 = vmatpush1.bf16.msra.mxu0 0
      %3974 = vmatprep.subr.bf16.mxu0 0
      %3975 = vmatpush1.bf16.msra.mxu0 0
      %3976 = vmatprep.subr.bf16.mxu0 0
      %3977 = vmatpush1.bf16.msra.mxu0 0
      %3978 = vmatprep.subr.bf16.mxu0 0
      %3979 = vmatpush1.bf16.msra.mxu0 0
      %3980 = vmatprep.subr.bf16.mxu0 0
      %3981 = vmatpush1.bf16.msra.mxu0 0
      %3982 = vmatprep.subr.bf16.mxu0 0
      %3983 = vmatpush1.bf16.msra.mxu0 0
      %3984 = vmatprep.subr.bf16.mxu0 0
      %3985 = vmatpush1.bf16.msra.mxu0 0
      %3986 = vmatprep.mubr.bf16.mxu0 0
      %3987 = vmatmul.mubr.bf16.gmra.mrb[0].mxu0 %v3943
      %v3988 = vpop.f32.mrb[0].mxu0
      %v3989 = vadd.f32 0.0, %v3988
      %v3990 = vpop.f32.mrb[0].mxu0
      %v3991 = vadd.f32 0.0, %v3990
      %v3992 = vpop.f32.mrb[0].mxu0
      %v3993 = vpop.f32.mrb[0].mxu0
      %3994 = vdwg.mxu0
      %3995 = vmatprep.subr.bf16.mxu0 0
      %3996 = vmatpush1.bf16.msra.mxu0 %v3952
      %3997 = vmatprep.subr.bf16.mxu0 0
      %3998 = vmatpush1.bf16.msra.mxu0 0
      %3999 = vmatprep.subr.bf16.mxu0 0
      %4000 = vmatpush1.bf16.msra.mxu0 0
      %4001 = vmatprep.subr.bf16.mxu0 0
      %4002 = vmatpush1.bf16.msra.mxu0 0
      %4003 = vmatprep.subr.bf16.mxu0 0
      %4004 = vmatpush1.bf16.msra.mxu0 0
      %4005 = vmatprep.subr.bf16.mxu0 0
      %4006 = vmatpush1.bf16.msra.mxu0 0
      %4007 = vmatprep.subr.bf16.mxu0 0
      %4008 = vmatpush1.bf16.msra.mxu0 0
      %4009 = vmatprep.subr.bf16.mxu0 0
      %4010 = vmatpush1.bf16.msra.mxu0 0
      %4011 = vmatprep.subr.bf16.mxu0 0
      %4012 = vmatpush1.bf16.msra.mxu0 0
      %4013 = vmatprep.subr.bf16.mxu0 0
      %4014 = vmatpush1.bf16.msra.mxu0 0
      %4015 = vmatprep.subr.bf16.mxu0 0
      %4016 = vmatpush1.bf16.msra.mxu0 0
      %4017 = vmatprep.subr.bf16.mxu0 0
      %4018 = vmatpush1.bf16.msra.mxu0 0
      %4019 = vmatprep.subr.bf16.mxu0 0
      %4020 = vmatpush1.bf16.msra.mxu0 0
      %4021 = vmatprep.subr.bf16.mxu0 0
      %4022 = vmatpush1.bf16.msra.mxu0 0
      %4023 = vmatprep.subr.bf16.mxu0 0
      %4024 = vmatpush1.bf16.msra.mxu0 0
      %4025 = vmatprep.subr.bf16.mxu0 0
      %4026 = vmatpush1.bf16.msra.mxu0 0
      %4027 = vmatprep.mubr.bf16.mxu0 0
      %4028 = vmatmul.mubr.bf16.gmra.mrb[0].mxu0 %v3943
      %v4029 = vpop.f32.mrb[0].mxu0
      %v4030 = vadd.f32 0.0, %v4029
      %v4031 = vpop.f32.mrb[0].mxu0
      %v4032 = vpop.f32.mrb[0].mxu0
      %v4033 = vpop.f32.mrb[0].mxu0
      %4034 = vdwg.mxu0
      %v4035 = vadd.f32 %v3914, %v3989
      %v4036 = vadd.f32 %v3915, %v3991
      %v4037 = vadd.f32 %v3916, %v4030
      %s4038 = scalar_lea.vmem %s1, 132
      %v4039 = vld [vmem:[%s4038] sm:$0xf]
      %4040 = vrot.lane.b32.xlu0 %v3927, 111
      %v4041 = vpop.permute.xlu0 %4040
      %4042 = vrot.lane.b32.xlu0 %v3928, 111
      %v4043 = vpop.permute.xlu0 %4042
      %4044 = vrot.lane.b32.xlu0 %v3929, 111
      %v4045 = vpop.permute.xlu0 %4044
      %4046 = vrot.lane.b32.xlu0 %v3930, 111
      %v4047 = vpop.permute.xlu0 %4046
      %v4048 = vsel %vm959, %v4041, %v4043
      %v4049 = vsel %vm959, %v4043, %v4045
      %v4050 = vsel %vm959, %v4045, %v4047
      %v4052 = vsel %vm299, %v4039, 0
      %v4055 = vsel %vm303, %v4048, 0
      %v4058 = vsel %vm303, %v4049, 0
      %v4061 = vsel %vm303, %v4050, 0
      %4063 = vmatprep.subr.bf16.mxu0 %v4058
      %4064 = vmatpush1.bf16.msra.mxu0 %v4055
      %4065 = vmatprep.subr.bf16.mxu0 0
      %4066 = vmatpush1.bf16.msra.mxu0 0
      %4067 = vmatprep.subr.bf16.mxu0 0
      %4068 = vmatpush1.bf16.msra.mxu0 0
      %4069 = vmatprep.subr.bf16.mxu0 0
      %4070 = vmatpush1.bf16.msra.mxu0 0
      %4071 = vmatprep.subr.bf16.mxu0 0
      %4072 = vmatpush1.bf16.msra.mxu0 0
      %4073 = vmatprep.subr.bf16.mxu0 0
      %4074 = vmatpush1.bf16.msra.mxu0 0
      %4075 = vmatprep.subr.bf16.mxu0 0
      %4076 = vmatpush1.bf16.msra.mxu0 0
      %4077 = vmatprep.subr.bf16.mxu0 0
      %4078 = vmatpush1.bf16.msra.mxu0 0
      %4079 = vmatprep.subr.bf16.mxu0 0
      %4080 = vmatpush1.bf16.msra.mxu0 0
      %4081 = vmatprep.subr.bf16.mxu0 0
      %4082 = vmatpush1.bf16.msra.mxu0 0
      %4083 = vmatprep.subr.bf16.mxu0 0
      %4084 = vmatpush1.bf16.msra.mxu0 0
      %4085 = vmatprep.subr.bf16.mxu0 0
      %4086 = vmatpush1.bf16.msra.mxu0 0
      %4087 = vmatprep.subr.bf16.mxu0 0
      %4088 = vmatpush1.bf16.msra.mxu0 0
      %4089 = vmatprep.subr.bf16.mxu0 0
      %4090 = vmatpush1.bf16.msra.mxu0 0
      %4091 = vmatprep.subr.bf16.mxu0 0
      %4092 = vmatpush1.bf16.msra.mxu0 0
      %4093 = vmatprep.subr.bf16.mxu0 0
      %4094 = vmatpush1.bf16.msra.mxu0 0
      %4095 = vmatprep.mubr.bf16.mxu0 0
      %4096 = vmatmul.mubr.bf16.gmra.mrb[0].mxu0 %v4052
      %v4097 = vpop.f32.mrb[0].mxu0
      %v4098 = vadd.f32 0.0, %v4097
      %v4099 = vpop.f32.mrb[0].mxu0
      %v4100 = vadd.f32 0.0, %v4099
      %v4101 = vpop.f32.mrb[0].mxu0
      %v4102 = vpop.f32.mrb[0].mxu0
      %4103 = vdwg.mxu0
      %4104 = vmatprep.subr.bf16.mxu0 0
      %4105 = vmatpush1.bf16.msra.mxu0 %v4061
      %4106 = vmatprep.subr.bf16.mxu0 0
      %4107 = vmatpush1.bf16.msra.mxu0 0
      %4108 = vmatprep.subr.bf16.mxu0 0
      %4109 = vmatpush1.bf16.msra.mxu0 0
      %4110 = vmatprep.subr.bf16.mxu0 0
      %4111 = vmatpush1.bf16.msra.mxu0 0
      %4112 = vmatprep.subr.bf16.mxu0 0
      %4113 = vmatpush1.bf16.msra.mxu0 0
      %4114 = vmatprep.subr.bf16.mxu0 0
      %4115 = vmatpush1.bf16.msra.mxu0 0
      %4116 = vmatprep.subr.bf16.mxu0 0
      %4117 = vmatpush1.bf16.msra.mxu0 0
      %4118 = vmatprep.subr.bf16.mxu0 0
      %4119 = vmatpush1.bf16.msra.mxu0 0
      %4120 = vmatprep.subr.bf16.mxu0 0
      %4121 = vmatpush1.bf16.msra.mxu0 0
      %4122 = vmatprep.subr.bf16.mxu0 0
      %4123 = vmatpush1.bf16.msra.mxu0 0
      %4124 = vmatprep.subr.bf16.mxu0 0
      %4125 = vmatpush1.bf16.msra.mxu0 0
      %4126 = vmatprep.subr.bf16.mxu0 0
      %4127 = vmatpush1.bf16.msra.mxu0 0
      %4128 = vmatprep.subr.bf16.mxu0 0
      %4129 = vmatpush1.bf16.msra.mxu0 0
      %4130 = vmatprep.subr.bf16.mxu0 0
      %4131 = vmatpush1.bf16.msra.mxu0 0
      %4132 = vmatprep.subr.bf16.mxu0 0
      %4133 = vmatpush1.bf16.msra.mxu0 0
      %4134 = vmatprep.subr.bf16.mxu0 0
      %4135 = vmatpush1.bf16.msra.mxu0 0
      %4136 = vmatprep.mubr.bf16.mxu0 0
      %4137 = vmatmul.mubr.bf16.gmra.mrb[0].mxu0 %v4052
      %v4138 = vpop.f32.mrb[0].mxu0
      %v4139 = vadd.f32 0.0, %v4138
      %v4140 = vpop.f32.mrb[0].mxu0
      %v4141 = vpop.f32.mrb[0].mxu0
      %v4142 = vpop.f32.mrb[0].mxu0
      %4143 = vdwg.mxu0
      %v4144 = vadd.f32 %v4035, %v4098
      %v4145 = vadd.f32 %v4036, %v4100
      %v4146 = vadd.f32 %v4037, %v4139
      %s4147 = scalar_lea.vmem %s1, 136
      %v4148 = vld [vmem:[%s4147] sm:$0xf]
      %4149 = vrot.lane.b32.xlu0 %v3927, 110
      %v4150 = vpop.permute.xlu0 %4149
      %4151 = vrot.lane.b32.xlu0 %v3928, 110
      %v4152 = vpop.permute.xlu0 %4151
      %4153 = vrot.lane.b32.xlu0 %v3929, 110
      %v4154 = vpop.permute.xlu0 %4153
      %4155 = vrot.lane.b32.xlu0 %v3930, 110
      %v4156 = vpop.permute.xlu0 %4155
      %v4157 = vsel %vm1069, %v4150, %v4152
      %v4158 = vsel %vm1069, %v4152, %v4154
      %v4159 = vsel %vm1069, %v4154, %v4156
      %v4161 = vsel %vm299, %v4148, 0
      %v4164 = vsel %vm303, %v4157, 0
      %v4167 = vsel %vm303, %v4158, 0
      %v4170 = vsel %vm303, %v4159, 0
      %4172 = vmatprep.subr.bf16.mxu0 %v4167
      %4173 = vmatpush1.bf16.msra.mxu0 %v4164
      %4174 = vmatprep.subr.bf16.mxu0 0
      %4175 = vmatpush1.bf16.msra.mxu0 0
      %4176 = vmatprep.subr.bf16.mxu0 0
      %4177 = vmatpush1.bf16.msra.mxu0 0
      %4178 = vmatprep.subr.bf16.mxu0 0
      %4179 = vmatpush1.bf16.msra.mxu0 0
      %4180 = vmatprep.subr.bf16.mxu0 0
      %4181 = vmatpush1.bf16.msra.mxu0 0
      %4182 = vmatprep.subr.bf16.mxu0 0
      %4183 = vmatpush1.bf16.msra.mxu0 0
      %4184 = vmatprep.subr.bf16.mxu0 0
      %4185 = vmatpush1.bf16.msra.mxu0 0
      %4186 = vmatprep.subr.bf16.mxu0 0
      %4187 = vmatpush1.bf16.msra.mxu0 0
      %4188 = vmatprep.subr.bf16.mxu0 0
      %4189 = vmatpush1.bf16.msra.mxu0 0
      %4190 = vmatprep.subr.bf16.mxu0 0
      %4191 = vmatpush1.bf16.msra.mxu0 0
      %4192 = vmatprep.subr.bf16.mxu0 0
      %4193 = vmatpush1.bf16.msra.mxu0 0
      %4194 = vmatprep.subr.bf16.mxu0 0
      %4195 = vmatpush1.bf16.msra.mxu0 0
      %4196 = vmatprep.subr.bf16.mxu0 0
      %4197 = vmatpush1.bf16.msra.mxu0 0
      %4198 = vmatprep.subr.bf16.mxu0 0
      %4199 = vmatpush1.bf16.msra.mxu0 0
      %4200 = vmatprep.subr.bf16.mxu0 0
      %4201 = vmatpush1.bf16.msra.mxu0 0
      %4202 = vmatprep.subr.bf16.mxu0 0
      %4203 = vmatpush1.bf16.msra.mxu0 0
      %4204 = vmatprep.mubr.bf16.mxu0 0
      %4205 = vmatmul.mubr.bf16.gmra.mrb[0].mxu0 %v4161
      %v4206 = vpop.f32.mrb[0].mxu0
      %v4207 = vadd.f32 0.0, %v4206
      %v4208 = vpop.f32.mrb[0].mxu0
      %v4209 = vadd.f32 0.0, %v4208
      %v4210 = vpop.f32.mrb[0].mxu0
      %v4211 = vpop.f32.mrb[0].mxu0
      %4212 = vdwg.mxu0
      %4213 = vmatprep.subr.bf16.mxu0 0
      %4214 = vmatpush1.bf16.msra.mxu0 %v4170
      %4215 = vmatprep.subr.bf16.mxu0 0
      %4216 = vmatpush1.bf16.msra.mxu0 0
      %4217 = vmatprep.subr.bf16.mxu0 0
      %4218 = vmatpush1.bf16.msra.mxu0 0
      %4219 = vmatprep.subr.bf16.mxu0 0
      %4220 = vmatpush1.bf16.msra.mxu0 0
      %4221 = vmatprep.subr.bf16.mxu0 0
      %4222 = vmatpush1.bf16.msra.mxu0 0
      %4223 = vmatprep.subr.bf16.mxu0 0
      %4224 = vmatpush1.bf16.msra.mxu0 0
      %4225 = vmatprep.subr.bf16.mxu0 0
      %4226 = vmatpush1.bf16.msra.mxu0 0
      %4227 = vmatprep.subr.bf16.mxu0 0
      %4228 = vmatpush1.bf16.msra.mxu0 0
      %4229 = vmatprep.subr.bf16.mxu0 0
      %4230 = vmatpush1.bf16.msra.mxu0 0
      %4231 = vmatprep.subr.bf16.mxu0 0
      %4232 = vmatpush1.bf16.msra.mxu0 0
      %4233 = vmatprep.subr.bf16.mxu0 0
      %4234 = vmatpush1.bf16.msra.mxu0 0
      %4235 = vmatprep.subr.bf16.mxu0 0
      %4236 = vmatpush1.bf16.msra.mxu0 0
      %4237 = vmatprep.subr.bf16.mxu0 0
      %4238 = vmatpush1.bf16.msra.mxu0 0
      %4239 = vmatprep.subr.bf16.mxu0 0
      %4240 = vmatpush1.bf16.msra.mxu0 0
      %4241 = vmatprep.subr.bf16.mxu0 0
      %4242 = vmatpush1.bf16.msra.mxu0 0
      %4243 = vmatprep.subr.bf16.mxu0 0
      %4244 = vmatpush1.bf16.msra.mxu0 0
      %4245 = vmatprep.mubr.bf16.mxu0 0
      %4246 = vmatmul.mubr.bf16.gmra.mrb[0].mxu0 %v4161
      %v4247 = vpop.f32.mrb[0].mxu0
      %v4248 = vadd.f32 0.0, %v4247
      %v4249 = vpop.f32.mrb[0].mxu0
      %v4250 = vpop.f32.mrb[0].mxu0
      %v4251 = vpop.f32.mrb[0].mxu0
      %4252 = vdwg.mxu0
      %v4253 = vadd.f32 %v4144, %v4207
      %v4254 = vadd.f32 %v4145, %v4209
      %v4255 = vadd.f32 %v4146, %v4248
      %s4256 = scalar_lea.vmem %s1, 140
      %v4257 = vld [vmem:[%s4256] sm:$0xf]
      %4258 = vrot.lane.b32.xlu0 %v3927, 109
      %v4259 = vpop.permute.xlu0 %4258
      %4260 = vrot.lane.b32.xlu0 %v3928, 109
      %v4261 = vpop.permute.xlu0 %4260
      %4262 = vrot.lane.b32.xlu0 %v3929, 109
      %v4263 = vpop.permute.xlu0 %4262
      %4264 = vrot.lane.b32.xlu0 %v3930, 109
      %v4265 = vpop.permute.xlu0 %4264
      %v4266 = vsel %vm1179, %v4259, %v4261
      %v4267 = vsel %vm1179, %v4261, %v4263
      %v4268 = vsel %vm1179, %v4263, %v4265
      %v4270 = vsel %vm299, %v4257, 0
      %v4273 = vsel %vm303, %v4266, 0
      %v4276 = vsel %vm303, %v4267, 0
      %v4279 = vsel %vm303, %v4268, 0
      %4281 = vmatprep.subr.bf16.mxu0 %v4276
      %4282 = vmatpush1.bf16.msra.mxu0 %v4273
      %4283 = vmatprep.subr.bf16.mxu0 0
      %4284 = vmatpush1.bf16.msra.mxu0 0
      %4285 = vmatprep.subr.bf16.mxu0 0
      %4286 = vmatpush1.bf16.msra.mxu0 0
      %4287 = vmatprep.subr.bf16.mxu0 0
      %4288 = vmatpush1.bf16.msra.mxu0 0
      %4289 = vmatprep.subr.bf16.mxu0 0
      %4290 = vmatpush1.bf16.msra.mxu0 0
      %4291 = vmatprep.subr.bf16.mxu0 0
      %4292 = vmatpush1.bf16.msra.mxu0 0
      %4293 = vmatprep.subr.bf16.mxu0 0
      %4294 = vmatpush1.bf16.msra.mxu0 0
      %4295 = vmatprep.subr.bf16.mxu0 0
      %4296 = vmatpush1.bf16.msra.mxu0 0
      %4297 = vmatprep.subr.bf16.mxu0 0
      %4298 = vmatpush1.bf16.msra.mxu0 0
      %4299 = vmatprep.subr.bf16.mxu0 0
      %4300 = vmatpush1.bf16.msra.mxu0 0
      %4301 = vmatprep.subr.bf16.mxu0 0
      %4302 = vmatpush1.bf16.msra.mxu0 0
      %4303 = vmatprep.subr.bf16.mxu0 0
      %4304 = vmatpush1.bf16.msra.mxu0 0
      %4305 = vmatprep.subr.bf16.mxu0 0
      %4306 = vmatpush1.bf16.msra.mxu0 0
      %4307 = vmatprep.subr.bf16.mxu0 0
      %4308 = vmatpush1.bf16.msra.mxu0 0
      %4309 = vmatprep.subr.bf16.mxu0 0
      %4310 = vmatpush1.bf16.msra.mxu0 0
      %4311 = vmatprep.subr.bf16.mxu0 0
      %4312 = vmatpush1.bf16.msra.mxu0 0
      %4313 = vmatprep.mubr.bf16.mxu0 0
      %4314 = vmatmul.mubr.bf16.gmra.mrb[0].mxu0 %v4270
      %v4315 = vpop.f32.mrb[0].mxu0
      %v4316 = vadd.f32 0.0, %v4315
      %v4317 = vpop.f32.mrb[0].mxu0
      %v4318 = vadd.f32 0.0, %v4317
      %v4319 = vpop.f32.mrb[0].mxu0
      %v4320 = vpop.f32.mrb[0].mxu0
      %4321 = vdwg.mxu0
      %4322 = vmatprep.subr.bf16.mxu0 0
      %4323 = vmatpush1.bf16.msra.mxu0 %v4279
      %4324 = vmatprep.subr.bf16.mxu0 0
      %4325 = vmatpush1.bf16.msra.mxu0 0
      %4326 = vmatprep.subr.bf16.mxu0 0
      %4327 = vmatpush1.bf16.msra.mxu0 0
      %4328 = vmatprep.subr.bf16.mxu0 0
      %4329 = vmatpush1.bf16.msra.mxu0 0
      %4330 = vmatprep.subr.bf16.mxu0 0
      %4331 = vmatpush1.bf16.msra.mxu0 0
      %4332 = vmatprep.subr.bf16.mxu0 0
      %4333 = vmatpush1.bf16.msra.mxu0 0
      %4334 = vmatprep.subr.bf16.mxu0 0
      %4335 = vmatpush1.bf16.msra.mxu0 0
      %4336 = vmatprep.subr.bf16.mxu0 0
      %4337 = vmatpush1.bf16.msra.mxu0 0
      %4338 = vmatprep.subr.bf16.mxu0 0
      %4339 = vmatpush1.bf16.msra.mxu0 0
      %4340 = vmatprep.subr.bf16.mxu0 0
      %4341 = vmatpush1.bf16.msra.mxu0 0
      %4342 = vmatprep.subr.bf16.mxu0 0
      %4343 = vmatpush1.bf16.msra.mxu0 0
      %4344 = vmatprep.subr.bf16.mxu0 0
      %4345 = vmatpush1.bf16.msra.mxu0 0
      %4346 = vmatprep.subr.bf16.mxu0 0
      %4347 = vmatpush1.bf16.msra.mxu0 0
      %4348 = vmatprep.subr.bf16.mxu0 0
      %4349 = vmatpush1.bf16.msra.mxu0 0
      %4350 = vmatprep.subr.bf16.mxu0 0
      %4351 = vmatpush1.bf16.msra.mxu0 0
      %4352 = vmatprep.subr.bf16.mxu0 0
      %4353 = vmatpush1.bf16.msra.mxu0 0
      %4354 = vmatprep.mubr.bf16.mxu0 0
      %4355 = vmatmul.mubr.bf16.gmra.mrb[0].mxu0 %v4270
      %v4356 = vpop.f32.mrb[0].mxu0
      %v4357 = vadd.f32 0.0, %v4356
      %v4358 = vpop.f32.mrb[0].mxu0
      %v4359 = vpop.f32.mrb[0].mxu0
      %v4360 = vpop.f32.mrb[0].mxu0
      %4361 = vdwg.mxu0
      %v4362 = vadd.f32 %v4253, %v4316
      %v4363 = vadd.f32 %v4254, %v4318
      %v4364 = vadd.f32 %v4255, %v4357
      %s4365 = scalar_lea.vmem %s2, 24
      %v4366 = vld [vmem:[%s4365] sm:$0xff]
      %4368 = vset.pattern.permute.xlu0 0
      %4369 = vperm.xlu0 %4368, %v4366
      %v4370 = vpop.permute.xlu0 %4369
      %v4372 = vadd.f32 %v4362, %v4370
      %v4373 = vadd.f32 %v4363, %v4370
      %v4374 = vadd.f32 %v4364, %v4370
      %v4375 = vmax.f32 %v4372, 0.0
      %v4376 = vmax.f32 %v4373, 0.0
      %v4377 = vmax.f32 %v4374, 0.0
      %v4378 = vmul.f32 %v4375, %v260
      %v4379 = vmul.f32 %v4376, %v264
      %v4380 = vmul.f32 %v4377, %v268
      %v4381 = vpack.c.bf16 %v4378, %v4378
      %v4382 = vpack.c.bf16 %v4379, %v4379
      %v4383 = vpack.c.bf16 %v4380, %v4380
      %v4387 = vunpack.c.l.b16 %v4381
      %v4388 = vunpack.c.l.b16 %v4382
      %v4389 = vunpack.c.l.b16 %v4383
      %v4390 = vpack.c.b16 %v4388, %v4387
      %v4391 = vpack.c.b16 %v4389, %v4389
      %4394 = vst [vmem:[#allocation2 + $0x4] sm:$0xff] %v4390
      %4395 = vst [vmem:[#allocation2 + $0xc] sm:$0xf] %v4391
      %v4396 = vld [vmem:[#allocation2] sm:$0xff]
      %v4397 = vld [vmem:[#allocation2 + $0x8] sm:$0xff]
      %v4398 = vld [vmem:[%s3] sm:$0xf]
      %v4399 = vld [vmem:[%s3 + $0x4] sm:$0x3]
      %s4400 = scalar_lea.vmem %s3, 8
      %v4401 = vld [vmem:[%s4400] sm:$0xf]
      %v4402 = vld [vmem:[%s4400 + $0x4] sm:$0x3]
      %v4405 = vunpack.c.l.b16 %v4401
      %v4406 = vunpack.c.l.b16 %v4402
      %v4407 = vpack.c.b16 %v4406, %v4405
      %v4410 = vunpack.c.l.b16 %v4396
      %v4411 = vunpack.c.h.b16 %v4396
      %v4412 = vunpack.c.l.b16 %v4397
      %v4413 = vunpack.c.h.b16 %v4397
      %v4414 = vpack.c.b16 %v4410, %v4410
      %v4415 = vpack.c.b16 %v4411, %v4411
      %v4416 = vpack.c.b16 %v4412, %v4412
      %v4417 = vpack.c.b16 %v4413, %v4413
      %4418 = vrot.lane.b32.xlu0 %v4414, 18
      %v4419 = vpop.permute.xlu0 %4418
      %4420 = vrot.lane.b32.xlu0 %v4415, 18
      %v4421 = vpop.permute.xlu0 %4420
      %4422 = vrot.lane.b32.xlu0 %v4416, 18
      %v4423 = vpop.permute.xlu0 %4422
      %4424 = vrot.lane.b32.xlu0 %v4417, 18
      %v4425 = vpop.permute.xlu0 %4424
      %v4426 = vsel %vm295, %v4419, %v4421
      %v4427 = vsel %vm295, %v4421, %v4423
      %v4428 = vsel %vm295, %v4423, %v4425
      %v4430 = vsel %vm299, %v4407, 0
      %v4433 = vsel %vm303, %v4426, 0
      %v4436 = vsel %vm303, %v4427, 0
      %v4439 = vsel %vm303, %v4428, 0
      %4441 = vmatprep.subr.bf16.mxu0 %v4436
      %4442 = vmatpush1.bf16.msra.mxu0 %v4433
      %4443 = vmatprep.subr.bf16.mxu0 0
      %4444 = vmatpush1.bf16.msra.mxu0 0
      %4445 = vmatprep.subr.bf16.mxu0 0
      %4446 = vmatpush1.bf16.msra.mxu0 0
      %4447 = vmatprep.subr.bf16.mxu0 0
      %4448 = vmatpush1.bf16.msra.mxu0 0
      %4449 = vmatprep.subr.bf16.mxu0 0
      %4450 = vmatpush1.bf16.msra.mxu0 0
      %4451 = vmatprep.subr.bf16.mxu0 0
      %4452 = vmatpush1.bf16.msra.mxu0 0
      %4453 = vmatprep.subr.bf16.mxu0 0
      %4454 = vmatpush1.bf16.msra.mxu0 0
      %4455 = vmatprep.subr.bf16.mxu0 0
      %4456 = vmatpush1.bf16.msra.mxu0 0
      %4457 = vmatprep.subr.bf16.mxu0 0
      %4458 = vmatpush1.bf16.msra.mxu0 0
      %4459 = vmatprep.subr.bf16.mxu0 0
      %4460 = vmatpush1.bf16.msra.mxu0 0
      %4461 = vmatprep.subr.bf16.mxu0 0
      %4462 = vmatpush1.bf16.msra.mxu0 0
      %4463 = vmatprep.subr.bf16.mxu0 0
      %4464 = vmatpush1.bf16.msra.mxu0 0
      %4465 = vmatprep.subr.bf16.mxu0 0
      %4466 = vmatpush1.bf16.msra.mxu0 0
      %4467 = vmatprep.subr.bf16.mxu0 0
      %4468 = vmatpush1.bf16.msra.mxu0 0
      %4469 = vmatprep.subr.bf16.mxu0 0
      %4470 = vmatpush1.bf16.msra.mxu0 0
      %4471 = vmatprep.subr.bf16.mxu0 0
      %4472 = vmatpush1.bf16.msra.mxu0 0
      %4473 = vmatprep.mubr.bf16.mxu0 0
      %4474 = vmatmul.mubr.bf16.gmra.mrb[0].mxu0 %v4430
      %v4475 = vpop.f32.mrb[0].mxu0
      %v4476 = vadd.f32 0.0, %v4475
      %v4477 = vpop.f32.mrb[0].mxu0
      %v4478 = vadd.f32 0.0, %v4477
      %v4479 = vpop.f32.mrb[0].mxu0
      %v4480 = vadd.f32 0.0, %v4479
      %v4481 = vpop.f32.mrb[0].mxu0
      %v4482 = vadd.f32 0.0, %v4481
      %4483 = vdwg.mxu0
      %4484 = vmatprep.subr.bf16.mxu0 0
      %4485 = vmatpush1.bf16.msra.mxu0 %v4439
      %4486 = vmatprep.subr.bf16.mxu0 0
      %4487 = vmatpush1.bf16.msra.mxu0 0
      %4488 = vmatprep.subr.bf16.mxu0 0
      %4489 = vmatpush1.bf16.msra.mxu0 0
      %4490 = vmatprep.subr.bf16.mxu0 0
      %4491 = vmatpush1.bf16.msra.mxu0 0
      %4492 = vmatprep.subr.bf16.mxu0 0
      %4493 = vmatpush1.bf16.msra.mxu0 0
      %4494 = vmatprep.subr.bf16.mxu0 0
      %4495 = vmatpush1.bf16.msra.mxu0 0
      %4496 = vmatprep.subr.bf16.mxu0 0
      %4497 = vmatpush1.bf16.msra.mxu0 0
      %4498 = vmatprep.subr.bf16.mxu0 0
      %4499 = vmatpush1.bf16.msra.mxu0 0
      %4500 = vmatprep.subr.bf16.mxu0 0
      %4501 = vmatpush1.bf16.msra.mxu0 0
      %4502 = vmatprep.subr.bf16.mxu0 0
      %4503 = vmatpush1.bf16.msra.mxu0 0
      %4504 = vmatprep.subr.bf16.mxu0 0
      %4505 = vmatpush1.bf16.msra.mxu0 0
      %4506 = vmatprep.subr.bf16.mxu0 0
      %4507 = vmatpush1.bf16.msra.mxu0 0
      %4508 = vmatprep.subr.bf16.mxu0 0
      %4509 = vmatpush1.bf16.msra.mxu0 0
      %4510 = vmatprep.subr.bf16.mxu0 0
      %4511 = vmatpush1.bf16.msra.mxu0 0
      %4512 = vmatprep.subr.bf16.mxu0 0
      %4513 = vmatpush1.bf16.msra.mxu0 0
      %4514 = vmatprep.subr.bf16.mxu0 0
      %4515 = vmatpush1.bf16.msra.mxu0 0
      %4516 = vmatprep.mubr.bf16.mxu0 0
      %4517 = vmatmul.mubr.bf16.gmra.mrb[0].mxu0 %v4430
      %v4518 = vpop.f32.mrb[0].mxu0
      %v4519 = vadd.f32 0.0, %v4518
      %v4520 = vpop.f32.mrb[0].mxu0
      %v4521 = vpop.f32.mrb[0].mxu0
      %v4522 = vadd.f32 0.0, %v4521
      %v4523 = vpop.f32.mrb[0].mxu0
      %4524 = vdwg.mxu0
      %v4527 = vunpack.c.l.b16 %v4398
      %v4528 = vunpack.c.l.b16 %v4399
      %v4529 = vpack.c.b16 %v4528, %v4527
      %4530 = vrot.lane.b32.xlu0 %v4414, 19
      %v4531 = vpop.permute.xlu0 %4530
      %4532 = vrot.lane.b32.xlu0 %v4415, 19
      %v4533 = vpop.permute.xlu0 %4532
      %4534 = vrot.lane.b32.xlu0 %v4416, 19
      %v4535 = vpop.permute.xlu0 %4534
      %4536 = vrot.lane.b32.xlu0 %v4417, 19
      %v4537 = vpop.permute.xlu0 %4536
      %v4538 = vsel %vm402, %v4531, %v4533
      %v4539 = vsel %vm402, %v4533, %v4535
      %v4540 = vsel %vm402, %v4535, %v4537
      %v4542 = vsel %vm299, %v4529, 0
      %v4545 = vsel %vm303, %v4538, 0
      %v4548 = vsel %vm303, %v4539, 0
      %v4551 = vsel %vm303, %v4540, 0
      %4553 = vmatprep.subr.bf16.mxu0 %v4548
      %4554 = vmatpush1.bf16.msra.mxu0 %v4545
      %4555 = vmatprep.subr.bf16.mxu0 0
      %4556 = vmatpush1.bf16.msra.mxu0 0
      %4557 = vmatprep.subr.bf16.mxu0 0
      %4558 = vmatpush1.bf16.msra.mxu0 0
      %4559 = vmatprep.subr.bf16.mxu0 0
      %4560 = vmatpush1.bf16.msra.mxu0 0
      %4561 = vmatprep.subr.bf16.mxu0 0
      %4562 = vmatpush1.bf16.msra.mxu0 0
      %4563 = vmatprep.subr.bf16.mxu0 0
      %4564 = vmatpush1.bf16.msra.mxu0 0
      %4565 = vmatprep.subr.bf16.mxu0 0
      %4566 = vmatpush1.bf16.msra.mxu0 0
      %4567 = vmatprep.subr.bf16.mxu0 0
      %4568 = vmatpush1.bf16.msra.mxu0 0
      %4569 = vmatprep.subr.bf16.mxu0 0
      %4570 = vmatpush1.bf16.msra.mxu0 0
      %4571 = vmatprep.subr.bf16.mxu0 0
      %4572 = vmatpush1.bf16.msra.mxu0 0
      %4573 = vmatprep.subr.bf16.mxu0 0
      %4574 = vmatpush1.bf16.msra.mxu0 0
      %4575 = vmatprep.subr.bf16.mxu0 0
      %4576 = vmatpush1.bf16.msra.mxu0 0
      %4577 = vmatprep.subr.bf16.mxu0 0
      %4578 = vmatpush1.bf16.msra.mxu0 0
      %4579 = vmatprep.subr.bf16.mxu0 0
      %4580 = vmatpush1.bf16.msra.mxu0 0
      %4581 = vmatprep.subr.bf16.mxu0 0
      %4582 = vmatpush1.bf16.msra.mxu0 0
      %4583 = vmatprep.subr.bf16.mxu0 0
      %4584 = vmatpush1.bf16.msra.mxu0 0
      %4585 = vmatprep.mubr.bf16.mxu0 0
      %4586 = vmatmul.mubr.bf16.gmra.mrb[0].mxu0 %v4542
      %v4587 = vpop.f32.mrb[0].mxu0
      %v4588 = vadd.f32 %v4476, %v4587
      %v4589 = vpop.f32.mrb[0].mxu0
      %v4590 = vadd.f32 %v4478, %v4589
      %v4591 = vpop.f32.mrb[0].mxu0
      %v4592 = vadd.f32 %v4480, %v4591
      %v4593 = vpop.f32.mrb[0].mxu0
      %v4594 = vadd.f32 %v4482, %v4593
      %4595 = vdwg.mxu0
      %4596 = vmatprep.subr.bf16.mxu0 0
      %4597 = vmatpush1.bf16.msra.mxu0 %v4551
      %4598 = vmatprep.subr.bf16.mxu0 0
      %4599 = vmatpush1.bf16.msra.mxu0 0
      %4600 = vmatprep.subr.bf16.mxu0 0
      %4601 = vmatpush1.bf16.msra.mxu0 0
      %4602 = vmatprep.subr.bf16.mxu0 0
      %4603 = vmatpush1.bf16.msra.mxu0 0
      %4604 = vmatprep.subr.bf16.mxu0 0
      %4605 = vmatpush1.bf16.msra.mxu0 0
      %4606 = vmatprep.subr.bf16.mxu0 0
      %4607 = vmatpush1.bf16.msra.mxu0 0
      %4608 = vmatprep.subr.bf16.mxu0 0
      %4609 = vmatpush1.bf16.msra.mxu0 0
      %4610 = vmatprep.subr.bf16.mxu0 0
      %4611 = vmatpush1.bf16.msra.mxu0 0
      %4612 = vmatprep.subr.bf16.mxu0 0
      %4613 = vmatpush1.bf16.msra.mxu0 0
      %4614 = vmatprep.subr.bf16.mxu0 0
      %4615 = vmatpush1.bf16.msra.mxu0 0
      %4616 = vmatprep.subr.bf16.mxu0 0
      %4617 = vmatpush1.bf16.msra.mxu0 0
      %4618 = vmatprep.subr.bf16.mxu0 0
      %4619 = vmatpush1.bf16.msra.mxu0 0
      %4620 = vmatprep.subr.bf16.mxu0 0
      %4621 = vmatpush1.bf16.msra.mxu0 0
      %4622 = vmatprep.subr.bf16.mxu0 0
      %4623 = vmatpush1.bf16.msra.mxu0 0
      %4624 = vmatprep.subr.bf16.mxu0 0
      %4625 = vmatpush1.bf16.msra.mxu0 0
      %4626 = vmatprep.subr.bf16.mxu0 0
      %4627 = vmatpush1.bf16.msra.mxu0 0
      %4628 = vmatprep.mubr.bf16.mxu0 0
      %4629 = vmatmul.mubr.bf16.gmra.mrb[0].mxu0 %v4542
      %v4630 = vpop.f32.mrb[0].mxu0
      %v4631 = vadd.f32 %v4519, %v4630
      %v4632 = vpop.f32.mrb[0].mxu0
      %v4633 = vpop.f32.mrb[0].mxu0
      %v4634 = vadd.f32 %v4522, %v4633
      %v4635 = vpop.f32.mrb[0].mxu0
      %4636 = vdwg.mxu0
      %s4637 = scalar_lea.vmem %s3, 16
      %v4638 = vld [vmem:[%s4637] sm:$0xf]
      %v4639 = vld [vmem:[%s4637 + $0x4] sm:$0x3]
      %v4642 = vunpack.c.l.b16 %v4638
      %v4643 = vunpack.c.l.b16 %v4639
      %v4644 = vpack.c.b16 %v4643, %v4642
      %4645 = vrot.lane.b32.xlu0 %v4414, 17
      %v4646 = vpop.permute.xlu0 %4645
      %4647 = vrot.lane.b32.xlu0 %v4415, 17
      %v4648 = vpop.permute.xlu0 %4647
      %4649 = vrot.lane.b32.xlu0 %v4416, 17
      %v4650 = vpop.permute.xlu0 %4649
      %4651 = vrot.lane.b32.xlu0 %v4417, 17
      %v4652 = vpop.permute.xlu0 %4651
      %v4653 = vsel %vm509, %v4646, %v4648
      %v4654 = vsel %vm509, %v4648, %v4650
      %v4655 = vsel %vm509, %v4650, %v4652
      %v4657 = vsel %vm299, %v4644, 0
      %v4660 = vsel %vm303, %v4653, 0
      %v4663 = vsel %vm303, %v4654, 0
      %v4666 = vsel %vm303, %v4655, 0
      %4668 = vmatprep.subr.bf16.mxu0 %v4663
      %4669 = vmatpush1.bf16.msra.mxu0 %v4660
      %4670 = vmatprep.subr.bf16.mxu0 0
      %4671 = vmatpush1.bf16.msra.mxu0 0
      %4672 = vmatprep.subr.bf16.mxu0 0
      %4673 = vmatpush1.bf16.msra.mxu0 0
      %4674 = vmatprep.subr.bf16.mxu0 0
      %4675 = vmatpush1.bf16.msra.mxu0 0
      %4676 = vmatprep.subr.bf16.mxu0 0
      %4677 = vmatpush1.bf16.msra.mxu0 0
      %4678 = vmatprep.subr.bf16.mxu0 0
      %4679 = vmatpush1.bf16.msra.mxu0 0
      %4680 = vmatprep.subr.bf16.mxu0 0
      %4681 = vmatpush1.bf16.msra.mxu0 0
      %4682 = vmatprep.subr.bf16.mxu0 0
      %4683 = vmatpush1.bf16.msra.mxu0 0
      %4684 = vmatprep.subr.bf16.mxu0 0
      %4685 = vmatpush1.bf16.msra.mxu0 0
      %4686 = vmatprep.subr.bf16.mxu0 0
      %4687 = vmatpush1.bf16.msra.mxu0 0
      %4688 = vmatprep.subr.bf16.mxu0 0
      %4689 = vmatpush1.bf16.msra.mxu0 0
      %4690 = vmatprep.subr.bf16.mxu0 0
      %4691 = vmatpush1.bf16.msra.mxu0 0
      %4692 = vmatprep.subr.bf16.mxu0 0
      %4693 = vmatpush1.bf16.msra.mxu0 0
      %4694 = vmatprep.subr.bf16.mxu0 0
      %4695 = vmatpush1.bf16.msra.mxu0 0
      %4696 = vmatprep.subr.bf16.mxu0 0
      %4697 = vmatpush1.bf16.msra.mxu0 0
      %4698 = vmatprep.subr.bf16.mxu0 0
      %4699 = vmatpush1.bf16.msra.mxu0 0
      %4700 = vmatprep.mubr.bf16.mxu0 0
      %4701 = vmatmul.mubr.bf16.gmra.mrb[0].mxu0 %v4657
      %v4702 = vpop.f32.mrb[0].mxu0
      %v4703 = vadd.f32 0.0, %v4702
      %v4704 = vpop.f32.mrb[0].mxu0
      %v4705 = vadd.f32 0.0, %v4704
      %v4706 = vpop.f32.mrb[0].mxu0
      %v4707 = vadd.f32 0.0, %v4706
      %v4708 = vpop.f32.mrb[0].mxu0
      %v4709 = vadd.f32 0.0, %v4708
      %4710 = vdwg.mxu0
      %4711 = vmatprep.subr.bf16.mxu0 0
      %4712 = vmatpush1.bf16.msra.mxu0 %v4666
      %4713 = vmatprep.subr.bf16.mxu0 0
      %4714 = vmatpush1.bf16.msra.mxu0 0
      %4715 = vmatprep.subr.bf16.mxu0 0
      %4716 = vmatpush1.bf16.msra.mxu0 0
      %4717 = vmatprep.subr.bf16.mxu0 0
      %4718 = vmatpush1.bf16.msra.mxu0 0
      %4719 = vmatprep.subr.bf16.mxu0 0
      %4720 = vmatpush1.bf16.msra.mxu0 0
      %4721 = vmatprep.subr.bf16.mxu0 0
      %4722 = vmatpush1.bf16.msra.mxu0 0
      %4723 = vmatprep.subr.bf16.mxu0 0
      %4724 = vmatpush1.bf16.msra.mxu0 0
      %4725 = vmatprep.subr.bf16.mxu0 0
      %4726 = vmatpush1.bf16.msra.mxu0 0
      %4727 = vmatprep.subr.bf16.mxu0 0
      %4728 = vmatpush1.bf16.msra.mxu0 0
      %4729 = vmatprep.subr.bf16.mxu0 0
      %4730 = vmatpush1.bf16.msra.mxu0 0
      %4731 = vmatprep.subr.bf16.mxu0 0
      %4732 = vmatpush1.bf16.msra.mxu0 0
      %4733 = vmatprep.subr.bf16.mxu0 0
      %4734 = vmatpush1.bf16.msra.mxu0 0
      %4735 = vmatprep.subr.bf16.mxu0 0
      %4736 = vmatpush1.bf16.msra.mxu0 0
      %4737 = vmatprep.subr.bf16.mxu0 0
      %4738 = vmatpush1.bf16.msra.mxu0 0
      %4739 = vmatprep.subr.bf16.mxu0 0
      %4740 = vmatpush1.bf16.msra.mxu0 0
      %4741 = vmatprep.subr.bf16.mxu0 0
      %4742 = vmatpush1.bf16.msra.mxu0 0
      %4743 = vmatprep.mubr.bf16.mxu0 0
      %4744 = vmatmul.mubr.bf16.gmra.mrb[0].mxu0 %v4657
      %v4745 = vpop.f32.mrb[0].mxu0
      %v4746 = vadd.f32 0.0, %v4745
      %v4747 = vpop.f32.mrb[0].mxu0
      %v4748 = vpop.f32.mrb[0].mxu0
      %v4749 = vadd.f32 0.0, %v4748
      %v4750 = vpop.f32.mrb[0].mxu0
      %4751 = vdwg.mxu0
      %v4752 = vadd.f32 %v4588, %v4703
      %v4753 = vadd.f32 %v4590, %v4705
      %v4754 = vadd.f32 %v4631, %v4746
      %v4755 = vadd.f32 %v4592, %v4707
      %v4756 = vadd.f32 %v4594, %v4709
      %v4757 = vadd.f32 %v4634, %v4749
      %s4758 = scalar_lea.vmem %s3, 24
      %v4759 = vld [vmem:[%s4758] sm:$0xf]
      %v4760 = vld [vmem:[%s4758 + $0x4] sm:$0x3]
      %v4763 = vunpack.c.l.b16 %v4759
      %v4764 = vunpack.c.l.b16 %v4760
      %v4765 = vpack.c.b16 %v4764, %v4763
      %4766 = vrot.lane.b32.xlu0 %v4414, 1
      %v4767 = vpop.permute.xlu0 %4766
      %4768 = vrot.lane.b32.xlu0 %v4415, 1
      %v4769 = vpop.permute.xlu0 %4768
      %4770 = vrot.lane.b32.xlu0 %v4416, 1
      %v4771 = vpop.permute.xlu0 %4770
      %4772 = vrot.lane.b32.xlu0 %v4417, 1
      %v4773 = vpop.permute.xlu0 %4772
      %v4774 = vsel %vm619, %v4767, %v4769
      %v4775 = vsel %vm619, %v4769, %v4771
      %v4776 = vsel %vm619, %v4771, %v4773
      %v4778 = vsel %vm299, %v4765, 0
      %v4781 = vsel %vm303, %v4774, 0
      %v4784 = vsel %vm303, %v4775, 0
      %v4787 = vsel %vm303, %v4776, 0
      %4789 = vmatprep.subr.bf16.mxu0 %v4784
      %4790 = vmatpush1.bf16.msra.mxu0 %v4781
      %4791 = vmatprep.subr.bf16.mxu0 0
      %4792 = vmatpush1.bf16.msra.mxu0 0
      %4793 = vmatprep.subr.bf16.mxu0 0
      %4794 = vmatpush1.bf16.msra.mxu0 0
      %4795 = vmatprep.subr.bf16.mxu0 0
      %4796 = vmatpush1.bf16.msra.mxu0 0
      %4797 = vmatprep.subr.bf16.mxu0 0
      %4798 = vmatpush1.bf16.msra.mxu0 0
      %4799 = vmatprep.subr.bf16.mxu0 0
      %4800 = vmatpush1.bf16.msra.mxu0 0
      %4801 = vmatprep.subr.bf16.mxu0 0
      %4802 = vmatpush1.bf16.msra.mxu0 0
      %4803 = vmatprep.subr.bf16.mxu0 0
      %4804 = vmatpush1.bf16.msra.mxu0 0
      %4805 = vmatprep.subr.bf16.mxu0 0
      %4806 = vmatpush1.bf16.msra.mxu0 0
      %4807 = vmatprep.subr.bf16.mxu0 0
      %4808 = vmatpush1.bf16.msra.mxu0 0
      %4809 = vmatprep.subr.bf16.mxu0 0
      %4810 = vmatpush1.bf16.msra.mxu0 0
      %4811 = vmatprep.subr.bf16.mxu0 0
      %4812 = vmatpush1.bf16.msra.mxu0 0
      %4813 = vmatprep.subr.bf16.mxu0 0
      %4814 = vmatpush1.bf16.msra.mxu0 0
      %4815 = vmatprep.subr.bf16.mxu0 0
      %4816 = vmatpush1.bf16.msra.mxu0 0
      %4817 = vmatprep.subr.bf16.mxu0 0
      %4818 = vmatpush1.bf16.msra.mxu0 0
      %4819 = vmatprep.subr.bf16.mxu0 0
      %4820 = vmatpush1.bf16.msra.mxu0 0
      %4821 = vmatprep.mubr.bf16.mxu0 0
      %4822 = vmatmul.mubr.bf16.gmra.mrb[0].mxu0 %v4778
      %v4823 = vpop.f32.mrb[0].mxu0
      %v4824 = vadd.f32 0.0, %v4823
      %v4825 = vpop.f32.mrb[0].mxu0
      %v4826 = vadd.f32 0.0, %v4825
      %v4827 = vpop.f32.mrb[0].mxu0
      %v4828 = vadd.f32 0.0, %v4827
      %v4829 = vpop.f32.mrb[0].mxu0
      %v4830 = vadd.f32 0.0, %v4829
      %4831 = vdwg.mxu0
      %4832 = vmatprep.subr.bf16.mxu0 0
      %4833 = vmatpush1.bf16.msra.mxu0 %v4787
      %4834 = vmatprep.subr.bf16.mxu0 0
      %4835 = vmatpush1.bf16.msra.mxu0 0
      %4836 = vmatprep.subr.bf16.mxu0 0
      %4837 = vmatpush1.bf16.msra.mxu0 0
      %4838 = vmatprep.subr.bf16.mxu0 0
      %4839 = vmatpush1.bf16.msra.mxu0 0
      %4840 = vmatprep.subr.bf16.mxu0 0
      %4841 = vmatpush1.bf16.msra.mxu0 0
      %4842 = vmatprep.subr.bf16.mxu0 0
      %4843 = vmatpush1.bf16.msra.mxu0 0
      %4844 = vmatprep.subr.bf16.mxu0 0
      %4845 = vmatpush1.bf16.msra.mxu0 0
      %4846 = vmatprep.subr.bf16.mxu0 0
      %4847 = vmatpush1.bf16.msra.mxu0 0
      %4848 = vmatprep.subr.bf16.mxu0 0
      %4849 = vmatpush1.bf16.msra.mxu0 0
      %4850 = vmatprep.subr.bf16.mxu0 0
      %4851 = vmatpush1.bf16.msra.mxu0 0
      %4852 = vmatprep.subr.bf16.mxu0 0
      %4853 = vmatpush1.bf16.msra.mxu0 0
      %4854 = vmatprep.subr.bf16.mxu0 0
      %4855 = vmatpush1.bf16.msra.mxu0 0
      %4856 = vmatprep.subr.bf16.mxu0 0
      %4857 = vmatpush1.bf16.msra.mxu0 0
      %4858 = vmatprep.subr.bf16.mxu0 0
      %4859 = vmatpush1.bf16.msra.mxu0 0
      %4860 = vmatprep.subr.bf16.mxu0 0
      %4861 = vmatpush1.bf16.msra.mxu0 0
      %4862 = vmatprep.subr.bf16.mxu0 0
      %4863 = vmatpush1.bf16.msra.mxu0 0
      %4864 = vmatprep.mubr.bf16.mxu0 0
      %4865 = vmatmul.mubr.bf16.gmra.mrb[0].mxu0 %v4778
      %v4866 = vpop.f32.mrb[0].mxu0
      %v4867 = vadd.f32 0.0, %v4866
      %v4868 = vpop.f32.mrb[0].mxu0
      %v4869 = vpop.f32.mrb[0].mxu0
      %v4870 = vadd.f32 0.0, %v4869
      %v4871 = vpop.f32.mrb[0].mxu0
      %4872 = vdwg.mxu0
      %v4873 = vadd.f32 %v4752, %v4824
      %v4874 = vadd.f32 %v4753, %v4826
      %v4875 = vadd.f32 %v4754, %v4867
      %v4876 = vadd.f32 %v4755, %v4828
      %v4877 = vadd.f32 %v4756, %v4830
      %v4878 = vadd.f32 %v4757, %v4870
      %v4879 = vld [vmem:[#allocation2 + $0x4] sm:$0xff]
      %v4880 = vld [vmem:[#allocation2 + $0xc] sm:$0xf]
      %s4881 = scalar_lea.vmem %s3, 32
      %v4882 = vld [vmem:[%s4881] sm:$0xf]
      %v4883 = vld [vmem:[%s4881 + $0x4] sm:$0x3]
      %v4886 = vunpack.c.l.b16 %v4882
      %v4887 = vunpack.c.l.b16 %v4883
      %v4888 = vpack.c.b16 %v4887, %v4886
      %v4891 = vunpack.c.l.b16 %v4879
      %v4892 = vunpack.c.h.b16 %v4879
      %v4893 = vunpack.c.l.b16 %v4880
      %v4894 = vpack.c.b16 %v4891, %v4891
      %v4895 = vpack.c.b16 %v4892, %v4892
      %v4896 = vpack.c.b16 %v4893, %v4893
      %v4898 = vsel %vm299, %v4888, 0
      %v4901 = vsel %vm303, %v4894, 0
      %v4904 = vsel %vm303, %v4895, 0
      %v4907 = vsel %vm303, %v4896, 0
      %4909 = vmatprep.subr.bf16.mxu0 %v4904
      %4910 = vmatpush1.bf16.msra.mxu0 %v4901
      %4911 = vmatprep.subr.bf16.mxu0 0
      %4912 = vmatpush1.bf16.msra.mxu0 0
      %4913 = vmatprep.subr.bf16.mxu0 0
      %4914 = vmatpush1.bf16.msra.mxu0 0
      %4915 = vmatprep.subr.bf16.mxu0 0
      %4916 = vmatpush1.bf16.msra.mxu0 0
      %4917 = vmatprep.subr.bf16.mxu0 0
      %4918 = vmatpush1.bf16.msra.mxu0 0
      %4919 = vmatprep.subr.bf16.mxu0 0
      %4920 = vmatpush1.bf16.msra.mxu0 0
      %4921 = vmatprep.subr.bf16.mxu0 0
      %4922 = vmatpush1.bf16.msra.mxu0 0
      %4923 = vmatprep.subr.bf16.mxu0 0
      %4924 = vmatpush1.bf16.msra.mxu0 0
      %4925 = vmatprep.subr.bf16.mxu0 0
      %4926 = vmatpush1.bf16.msra.mxu0 0
      %4927 = vmatprep.subr.bf16.mxu0 0
      %4928 = vmatpush1.bf16.msra.mxu0 0
      %4929 = vmatprep.subr.bf16.mxu0 0
      %4930 = vmatpush1.bf16.msra.mxu0 0
      %4931 = vmatprep.subr.bf16.mxu0 0
      %4932 = vmatpush1.bf16.msra.mxu0 0
      %4933 = vmatprep.subr.bf16.mxu0 0
      %4934 = vmatpush1.bf16.msra.mxu0 0
      %4935 = vmatprep.subr.bf16.mxu0 0
      %4936 = vmatpush1.bf16.msra.mxu0 0
      %4937 = vmatprep.subr.bf16.mxu0 0
      %4938 = vmatpush1.bf16.msra.mxu0 0
      %4939 = vmatprep.subr.bf16.mxu0 0
      %4940 = vmatpush1.bf16.msra.mxu0 0
      %4941 = vmatprep.mubr.bf16.mxu0 0
      %4942 = vmatmul.mubr.bf16.gmra.mrb[0].mxu0 %v4898
      %v4943 = vpop.f32.mrb[0].mxu0
      %v4944 = vadd.f32 0.0, %v4943
      %v4945 = vpop.f32.mrb[0].mxu0
      %v4946 = vadd.f32 0.0, %v4945
      %v4947 = vpop.f32.mrb[0].mxu0
      %v4948 = vadd.f32 0.0, %v4947
      %v4949 = vpop.f32.mrb[0].mxu0
      %v4950 = vadd.f32 0.0, %v4949
      %4951 = vdwg.mxu0
      %4952 = vmatprep.subr.bf16.mxu0 0
      %4953 = vmatpush1.bf16.msra.mxu0 %v4907
      %4954 = vmatprep.subr.bf16.mxu0 0
      %4955 = vmatpush1.bf16.msra.mxu0 0
      %4956 = vmatprep.subr.bf16.mxu0 0
      %4957 = vmatpush1.bf16.msra.mxu0 0
      %4958 = vmatprep.subr.bf16.mxu0 0
      %4959 = vmatpush1.bf16.msra.mxu0 0
      %4960 = vmatprep.subr.bf16.mxu0 0
      %4961 = vmatpush1.bf16.msra.mxu0 0
      %4962 = vmatprep.subr.bf16.mxu0 0
      %4963 = vmatpush1.bf16.msra.mxu0 0
      %4964 = vmatprep.subr.bf16.mxu0 0
      %4965 = vmatpush1.bf16.msra.mxu0 0
      %4966 = vmatprep.subr.bf16.mxu0 0
      %4967 = vmatpush1.bf16.msra.mxu0 0
      %4968 = vmatprep.subr.bf16.mxu0 0
      %4969 = vmatpush1.bf16.msra.mxu0 0
      %4970 = vmatprep.subr.bf16.mxu0 0
      %4971 = vmatpush1.bf16.msra.mxu0 0
      %4972 = vmatprep.subr.bf16.mxu0 0
      %4973 = vmatpush1.bf16.msra.mxu0 0
      %4974 = vmatprep.subr.bf16.mxu0 0
      %4975 = vmatpush1.bf16.msra.mxu0 0
      %4976 = vmatprep.subr.bf16.mxu0 0
      %4977 = vmatpush1.bf16.msra.mxu0 0
      %4978 = vmatprep.subr.bf16.mxu0 0
      %4979 = vmatpush1.bf16.msra.mxu0 0
      %4980 = vmatprep.subr.bf16.mxu0 0
      %4981 = vmatpush1.bf16.msra.mxu0 0
      %4982 = vmatprep.subr.bf16.mxu0 0
      %4983 = vmatpush1.bf16.msra.mxu0 0
      %4984 = vmatprep.mubr.bf16.mxu0 0
      %4985 = vmatmul.mubr.bf16.gmra.mrb[0].mxu0 %v4898
      %v4986 = vpop.f32.mrb[0].mxu0
      %v4987 = vadd.f32 0.0, %v4986
      %v4988 = vpop.f32.mrb[0].mxu0
      %v4989 = vpop.f32.mrb[0].mxu0
      %v4990 = vadd.f32 0.0, %v4989
      %v4991 = vpop.f32.mrb[0].mxu0
      %4992 = vdwg.mxu0
      %v4993 = vadd.f32 %v4873, %v4944
      %v4994 = vadd.f32 %v4874, %v4946
      %v4995 = vadd.f32 %v4875, %v4987
      %v4996 = vadd.f32 %v4876, %v4948
      %v4997 = vadd.f32 %v4877, %v4950
      %v4998 = vadd.f32 %v4878, %v4990
      %v4999 = vld [vmem:[#allocation2 + $0x4] sm:$0xff]
      %v5000 = vld [vmem:[#allocation2 + $0xc] sm:$0xff]
      %s5001 = scalar_lea.vmem %s3, 40
      %v5002 = vld [vmem:[%s5001] sm:$0xf]
      %v5003 = vld [vmem:[%s5001 + $0x4] sm:$0x3]
      %v5006 = vunpack.c.l.b16 %v5002
      %v5007 = vunpack.c.l.b16 %v5003
      %v5008 = vpack.c.b16 %v5007, %v5006
      %v5011 = vunpack.c.l.b16 %v4999
      %v5012 = vunpack.c.h.b16 %v4999
      %v5013 = vunpack.c.l.b16 %v5000
      %v5014 = vunpack.c.h.b16 %v5000
      %v5015 = vpack.c.b16 %v5011, %v5011
      %v5016 = vpack.c.b16 %v5012, %v5012
      %v5017 = vpack.c.b16 %v5013, %v5013
      %v5018 = vpack.c.b16 %v5014, %v5014
      %5019 = vrot.lane.b32.xlu0 %v5015, 127
      %v5020 = vpop.permute.xlu0 %5019
      %5021 = vrot.lane.b32.xlu0 %v5016, 127
      %v5022 = vpop.permute.xlu0 %5021
      %5023 = vrot.lane.b32.xlu0 %v5017, 127
      %v5024 = vpop.permute.xlu0 %5023
      %5025 = vrot.lane.b32.xlu0 %v5018, 127
      %v5026 = vpop.permute.xlu0 %5025
      %v5027 = vsel %vm849, %v5020, %v5022
      %v5028 = vsel %vm849, %v5022, %v5024
      %v5029 = vsel %vm849, %v5024, %v5026
      %v5031 = vsel %vm299, %v5008, 0
      %v5034 = vsel %vm303, %v5027, 0
      %v5037 = vsel %vm303, %v5028, 0
      %v5040 = vsel %vm303, %v5029, 0
      %5042 = vmatprep.subr.bf16.mxu0 %v5037
      %5043 = vmatpush1.bf16.msra.mxu0 %v5034
      %5044 = vmatprep.subr.bf16.mxu0 0
      %5045 = vmatpush1.bf16.msra.mxu0 0
      %5046 = vmatprep.subr.bf16.mxu0 0
      %5047 = vmatpush1.bf16.msra.mxu0 0
      %5048 = vmatprep.subr.bf16.mxu0 0
      %5049 = vmatpush1.bf16.msra.mxu0 0
      %5050 = vmatprep.subr.bf16.mxu0 0
      %5051 = vmatpush1.bf16.msra.mxu0 0
      %5052 = vmatprep.subr.bf16.mxu0 0
      %5053 = vmatpush1.bf16.msra.mxu0 0
      %5054 = vmatprep.subr.bf16.mxu0 0
      %5055 = vmatpush1.bf16.msra.mxu0 0
      %5056 = vmatprep.subr.bf16.mxu0 0
      %5057 = vmatpush1.bf16.msra.mxu0 0
      %5058 = vmatprep.subr.bf16.mxu0 0
      %5059 = vmatpush1.bf16.msra.mxu0 0
      %5060 = vmatprep.subr.bf16.mxu0 0
      %5061 = vmatpush1.bf16.msra.mxu0 0
      %5062 = vmatprep.subr.bf16.mxu0 0
      %5063 = vmatpush1.bf16.msra.mxu0 0
      %5064 = vmatprep.subr.bf16.mxu0 0
      %5065 = vmatpush1.bf16.msra.mxu0 0
      %5066 = vmatprep.subr.bf16.mxu0 0
      %5067 = vmatpush1.bf16.msra.mxu0 0
      %5068 = vmatprep.subr.bf16.mxu0 0
      %5069 = vmatpush1.bf16.msra.mxu0 0
      %5070 = vmatprep.subr.bf16.mxu0 0
      %5071 = vmatpush1.bf16.msra.mxu0 0
      %5072 = vmatprep.subr.bf16.mxu0 0
      %5073 = vmatpush1.bf16.msra.mxu0 0
      %5074 = vmatprep.mubr.bf16.mxu0 0
      %5075 = vmatmul.mubr.bf16.gmra.mrb[0].mxu0 %v5031
      %v5076 = vpop.f32.mrb[0].mxu0
      %v5077 = vadd.f32 0.0, %v5076
      %v5078 = vpop.f32.mrb[0].mxu0
      %v5079 = vadd.f32 0.0, %v5078
      %v5080 = vpop.f32.mrb[0].mxu0
      %v5081 = vadd.f32 0.0, %v5080
      %v5082 = vpop.f32.mrb[0].mxu0
      %v5083 = vadd.f32 0.0, %v5082
      %5084 = vdwg.mxu0
      %5085 = vmatprep.subr.bf16.mxu0 0
      %5086 = vmatpush1.bf16.msra.mxu0 %v5040
      %5087 = vmatprep.subr.bf16.mxu0 0
      %5088 = vmatpush1.bf16.msra.mxu0 0
      %5089 = vmatprep.subr.bf16.mxu0 0
      %5090 = vmatpush1.bf16.msra.mxu0 0
      %5091 = vmatprep.subr.bf16.mxu0 0
      %5092 = vmatpush1.bf16.msra.mxu0 0
      %5093 = vmatprep.subr.bf16.mxu0 0
      %5094 = vmatpush1.bf16.msra.mxu0 0
      %5095 = vmatprep.subr.bf16.mxu0 0
      %5096 = vmatpush1.bf16.msra.mxu0 0
      %5097 = vmatprep.subr.bf16.mxu0 0
      %5098 = vmatpush1.bf16.msra.mxu0 0
      %5099 = vmatprep.subr.bf16.mxu0 0
      %5100 = vmatpush1.bf16.msra.mxu0 0
      %5101 = vmatprep.subr.bf16.mxu0 0
      %5102 = vmatpush1.bf16.msra.mxu0 0
      %5103 = vmatprep.subr.bf16.mxu0 0
      %5104 = vmatpush1.bf16.msra.mxu0 0
      %5105 = vmatprep.subr.bf16.mxu0 0
      %5106 = vmatpush1.bf16.msra.mxu0 0
      %5107 = vmatprep.subr.bf16.mxu0 0
      %5108 = vmatpush1.bf16.msra.mxu0 0
      %5109 = vmatprep.subr.bf16.mxu0 0
      %5110 = vmatpush1.bf16.msra.mxu0 0
      %5111 = vmatprep.subr.bf16.mxu0 0
      %5112 = vmatpush1.bf16.msra.mxu0 0
      %5113 = vmatprep.subr.bf16.mxu0 0
      %5114 = vmatpush1.bf16.msra.mxu0 0
      %5115 = vmatprep.subr.bf16.mxu0 0
      %5116 = vmatpush1.bf16.msra.mxu0 0
      %5117 = vmatprep.mubr.bf16.mxu0 0
      %5118 = vmatmul.mubr.bf16.gmra.mrb[0].mxu0 %v5031
      %v5119 = vpop.f32.mrb[0].mxu0
      %v5120 = vadd.f32 0.0, %v5119
      %v5121 = vpop.f32.mrb[0].mxu0
      %v5122 = vpop.f32.mrb[0].mxu0
      %v5123 = vadd.f32 0.0, %v5122
      %v5124 = vpop.f32.mrb[0].mxu0
      %5125 = vdwg.mxu0
      %v5126 = vadd.f32 %v4993, %v5077
      %v5127 = vadd.f32 %v4994, %v5079
      %v5128 = vadd.f32 %v4995, %v5120
      %v5129 = vadd.f32 %v4996, %v5081
      %v5130 = vadd.f32 %v4997, %v5083
      %v5131 = vadd.f32 %v4998, %v5123
      %s5132 = scalar_lea.vmem %s3, 48
      %v5133 = vld [vmem:[%s5132] sm:$0xf]
      %v5134 = vld [vmem:[%s5132 + $0x4] sm:$0x3]
      %v5137 = vunpack.c.l.b16 %v5133
      %v5138 = vunpack.c.l.b16 %v5134
      %v5139 = vpack.c.b16 %v5138, %v5137
      %5140 = vrot.lane.b32.xlu0 %v5015, 111
      %v5141 = vpop.permute.xlu0 %5140
      %5142 = vrot.lane.b32.xlu0 %v5016, 111
      %v5143 = vpop.permute.xlu0 %5142
      %5144 = vrot.lane.b32.xlu0 %v5017, 111
      %v5145 = vpop.permute.xlu0 %5144
      %5146 = vrot.lane.b32.xlu0 %v5018, 111
      %v5147 = vpop.permute.xlu0 %5146
      %v5148 = vsel %vm959, %v5141, %v5143
      %v5149 = vsel %vm959, %v5143, %v5145
      %v5150 = vsel %vm959, %v5145, %v5147
      %v5152 = vsel %vm299, %v5139, 0
      %v5155 = vsel %vm303, %v5148, 0
      %v5158 = vsel %vm303, %v5149, 0
      %v5161 = vsel %vm303, %v5150, 0
      %5163 = vmatprep.subr.bf16.mxu0 %v5158
      %5164 = vmatpush1.bf16.msra.mxu0 %v5155
      %5165 = vmatprep.subr.bf16.mxu0 0
      %5166 = vmatpush1.bf16.msra.mxu0 0
      %5167 = vmatprep.subr.bf16.mxu0 0
      %5168 = vmatpush1.bf16.msra.mxu0 0
      %5169 = vmatprep.subr.bf16.mxu0 0
      %5170 = vmatpush1.bf16.msra.mxu0 0
      %5171 = vmatprep.subr.bf16.mxu0 0
      %5172 = vmatpush1.bf16.msra.mxu0 0
      %5173 = vmatprep.subr.bf16.mxu0 0
      %5174 = vmatpush1.bf16.msra.mxu0 0
      %5175 = vmatprep.subr.bf16.mxu0 0
      %5176 = vmatpush1.bf16.msra.mxu0 0
      %5177 = vmatprep.subr.bf16.mxu0 0
      %5178 = vmatpush1.bf16.msra.mxu0 0
      %5179 = vmatprep.subr.bf16.mxu0 0
      %5180 = vmatpush1.bf16.msra.mxu0 0
      %5181 = vmatprep.subr.bf16.mxu0 0
      %5182 = vmatpush1.bf16.msra.mxu0 0
      %5183 = vmatprep.subr.bf16.mxu0 0
      %5184 = vmatpush1.bf16.msra.mxu0 0
      %5185 = vmatprep.subr.bf16.mxu0 0
      %5186 = vmatpush1.bf16.msra.mxu0 0
      %5187 = vmatprep.subr.bf16.mxu0 0
      %5188 = vmatpush1.bf16.msra.mxu0 0
      %5189 = vmatprep.subr.bf16.mxu0 0
      %5190 = vmatpush1.bf16.msra.mxu0 0
      %5191 = vmatprep.subr.bf16.mxu0 0
      %5192 = vmatpush1.bf16.msra.mxu0 0
      %5193 = vmatprep.subr.bf16.mxu0 0
      %5194 = vmatpush1.bf16.msra.mxu0 0
      %5195 = vmatprep.mubr.bf16.mxu0 0
      %5196 = vmatmul.mubr.bf16.gmra.mrb[0].mxu0 %v5152
      %v5197 = vpop.f32.mrb[0].mxu0
      %v5198 = vadd.f32 0.0, %v5197
      %v5199 = vpop.f32.mrb[0].mxu0
      %v5200 = vadd.f32 0.0, %v5199
      %v5201 = vpop.f32.mrb[0].mxu0
      %v5202 = vadd.f32 0.0, %v5201
      %v5203 = vpop.f32.mrb[0].mxu0
      %v5204 = vadd.f32 0.0, %v5203
      %5205 = vdwg.mxu0
      %5206 = vmatprep.subr.bf16.mxu0 0
      %5207 = vmatpush1.bf16.msra.mxu0 %v5161
      %5208 = vmatprep.subr.bf16.mxu0 0
      %5209 = vmatpush1.bf16.msra.mxu0 0
      %5210 = vmatprep.subr.bf16.mxu0 0
      %5211 = vmatpush1.bf16.msra.mxu0 0
      %5212 = vmatprep.subr.bf16.mxu0 0
      %5213 = vmatpush1.bf16.msra.mxu0 0
      %5214 = vmatprep.subr.bf16.mxu0 0
      %5215 = vmatpush1.bf16.msra.mxu0 0
      %5216 = vmatprep.subr.bf16.mxu0 0
      %5217 = vmatpush1.bf16.msra.mxu0 0
      %5218 = vmatprep.subr.bf16.mxu0 0
      %5219 = vmatpush1.bf16.msra.mxu0 0
      %5220 = vmatprep.subr.bf16.mxu0 0
      %5221 = vmatpush1.bf16.msra.mxu0 0
      %5222 = vmatprep.subr.bf16.mxu0 0
      %5223 = vmatpush1.bf16.msra.mxu0 0
      %5224 = vmatprep.subr.bf16.mxu0 0
      %5225 = vmatpush1.bf16.msra.mxu0 0
      %5226 = vmatprep.subr.bf16.mxu0 0
      %5227 = vmatpush1.bf16.msra.mxu0 0
      %5228 = vmatprep.subr.bf16.mxu0 0
      %5229 = vmatpush1.bf16.msra.mxu0 0
      %5230 = vmatprep.subr.bf16.mxu0 0
      %5231 = vmatpush1.bf16.msra.mxu0 0
      %5232 = vmatprep.subr.bf16.mxu0 0
      %5233 = vmatpush1.bf16.msra.mxu0 0
      %5234 = vmatprep.subr.bf16.mxu0 0
      %5235 = vmatpush1.bf16.msra.mxu0 0
      %5236 = vmatprep.subr.bf16.mxu0 0
      %5237 = vmatpush1.bf16.msra.mxu0 0
      %5238 = vmatprep.mubr.bf16.mxu0 0
      %5239 = vmatmul.mubr.bf16.gmra.mrb[0].mxu0 %v5152
      %v5240 = vpop.f32.mrb[0].mxu0
      %v5241 = vadd.f32 0.0, %v5240
      %v5242 = vpop.f32.mrb[0].mxu0
      %v5243 = vpop.f32.mrb[0].mxu0
      %v5244 = vadd.f32 0.0, %v5243
      %v5245 = vpop.f32.mrb[0].mxu0
      %5246 = vdwg.mxu0
      %v5247 = vadd.f32 %v5126, %v5198
      %v5248 = vadd.f32 %v5127, %v5200
      %v5249 = vadd.f32 %v5128, %v5241
      %v5250 = vadd.f32 %v5129, %v5202
      %v5251 = vadd.f32 %v5130, %v5204
      %v5252 = vadd.f32 %v5131, %v5244
      %s5253 = scalar_lea.vmem %s3, 56
      %v5254 = vld [vmem:[%s5253] sm:$0xf]
      %v5255 = vld [vmem:[%s5253 + $0x4] sm:$0x3]
      %v5258 = vunpack.c.l.b16 %v5254
      %v5259 = vunpack.c.l.b16 %v5255
      %v5260 = vpack.c.b16 %v5259, %v5258
      %5261 = vrot.lane.b32.xlu0 %v5015, 110
      %v5262 = vpop.permute.xlu0 %5261
      %5263 = vrot.lane.b32.xlu0 %v5016, 110
      %v5264 = vpop.permute.xlu0 %5263
      %5265 = vrot.lane.b32.xlu0 %v5017, 110
      %v5266 = vpop.permute.xlu0 %5265
      %5267 = vrot.lane.b32.xlu0 %v5018, 110
      %v5268 = vpop.permute.xlu0 %5267
      %v5269 = vsel %vm1069, %v5262, %v5264
      %v5270 = vsel %vm1069, %v5264, %v5266
      %v5271 = vsel %vm1069, %v5266, %v5268
      %v5273 = vsel %vm299, %v5260, 0
      %v5276 = vsel %vm303, %v5269, 0
      %v5279 = vsel %vm303, %v5270, 0
      %v5282 = vsel %vm303, %v5271, 0
      %5284 = vmatprep.subr.bf16.mxu0 %v5279
      %5285 = vmatpush1.bf16.msra.mxu0 %v5276
      %5286 = vmatprep.subr.bf16.mxu0 0
      %5287 = vmatpush1.bf16.msra.mxu0 0
      %5288 = vmatprep.subr.bf16.mxu0 0
      %5289 = vmatpush1.bf16.msra.mxu0 0
      %5290 = vmatprep.subr.bf16.mxu0 0
      %5291 = vmatpush1.bf16.msra.mxu0 0
      %5292 = vmatprep.subr.bf16.mxu0 0
      %5293 = vmatpush1.bf16.msra.mxu0 0
      %5294 = vmatprep.subr.bf16.mxu0 0
      %5295 = vmatpush1.bf16.msra.mxu0 0
      %5296 = vmatprep.subr.bf16.mxu0 0
      %5297 = vmatpush1.bf16.msra.mxu0 0
      %5298 = vmatprep.subr.bf16.mxu0 0
      %5299 = vmatpush1.bf16.msra.mxu0 0
      %5300 = vmatprep.subr.bf16.mxu0 0
      %5301 = vmatpush1.bf16.msra.mxu0 0
      %5302 = vmatprep.subr.bf16.mxu0 0
      %5303 = vmatpush1.bf16.msra.mxu0 0
      %5304 = vmatprep.subr.bf16.mxu0 0
      %5305 = vmatpush1.bf16.msra.mxu0 0
      %5306 = vmatprep.subr.bf16.mxu0 0
      %5307 = vmatpush1.bf16.msra.mxu0 0
      %5308 = vmatprep.subr.bf16.mxu0 0
      %5309 = vmatpush1.bf16.msra.mxu0 0
      %5310 = vmatprep.subr.bf16.mxu0 0
      %5311 = vmatpush1.bf16.msra.mxu0 0
      %5312 = vmatprep.subr.bf16.mxu0 0
      %5313 = vmatpush1.bf16.msra.mxu0 0
      %5314 = vmatprep.subr.bf16.mxu0 0
      %5315 = vmatpush1.bf16.msra.mxu0 0
      %5316 = vmatprep.mubr.bf16.mxu0 0
      %5317 = vmatmul.mubr.bf16.gmra.mrb[0].mxu0 %v5273
      %v5318 = vpop.f32.mrb[0].mxu0
      %v5319 = vadd.f32 0.0, %v5318
      %v5320 = vpop.f32.mrb[0].mxu0
      %v5321 = vadd.f32 0.0, %v5320
      %v5322 = vpop.f32.mrb[0].mxu0
      %v5323 = vadd.f32 0.0, %v5322
      %v5324 = vpop.f32.mrb[0].mxu0
      %v5325 = vadd.f32 0.0, %v5324
      %5326 = vdwg.mxu0
      %5327 = vmatprep.subr.bf16.mxu0 0
      %5328 = vmatpush1.bf16.msra.mxu0 %v5282
      %5329 = vmatprep.subr.bf16.mxu0 0
      %5330 = vmatpush1.bf16.msra.mxu0 0
      %5331 = vmatprep.subr.bf16.mxu0 0
      %5332 = vmatpush1.bf16.msra.mxu0 0
      %5333 = vmatprep.subr.bf16.mxu0 0
      %5334 = vmatpush1.bf16.msra.mxu0 0
      %5335 = vmatprep.subr.bf16.mxu0 0
      %5336 = vmatpush1.bf16.msra.mxu0 0
      %5337 = vmatprep.subr.bf16.mxu0 0
      %5338 = vmatpush1.bf16.msra.mxu0 0
      %5339 = vmatprep.subr.bf16.mxu0 0
      %5340 = vmatpush1.bf16.msra.mxu0 0
      %5341 = vmatprep.subr.bf16.mxu0 0
      %5342 = vmatpush1.bf16.msra.mxu0 0
      %5343 = vmatprep.subr.bf16.mxu0 0
      %5344 = vmatpush1.bf16.msra.mxu0 0
      %5345 = vmatprep.subr.bf16.mxu0 0
      %5346 = vmatpush1.bf16.msra.mxu0 0
      %5347 = vmatprep.subr.bf16.mxu0 0
      %5348 = vmatpush1.bf16.msra.mxu0 0
      %5349 = vmatprep.subr.bf16.mxu0 0
      %5350 = vmatpush1.bf16.msra.mxu0 0
      %5351 = vmatprep.subr.bf16.mxu0 0
      %5352 = vmatpush1.bf16.msra.mxu0 0
      %5353 = vmatprep.subr.bf16.mxu0 0
      %5354 = vmatpush1.bf16.msra.mxu0 0
      %5355 = vmatprep.subr.bf16.mxu0 0
      %5356 = vmatpush1.bf16.msra.mxu0 0
      %5357 = vmatprep.subr.bf16.mxu0 0
      %5358 = vmatpush1.bf16.msra.mxu0 0
      %5359 = vmatprep.mubr.bf16.mxu0 0
      %5360 = vmatmul.mubr.bf16.gmra.mrb[0].mxu0 %v5273
      %v5361 = vpop.f32.mrb[0].mxu0
      %v5362 = vadd.f32 0.0, %v5361
      %v5363 = vpop.f32.mrb[0].mxu0
      %v5364 = vpop.f32.mrb[0].mxu0
      %v5365 = vadd.f32 0.0, %v5364
      %v5366 = vpop.f32.mrb[0].mxu0
      %5367 = vdwg.mxu0
      %v5368 = vadd.f32 %v5247, %v5319
      %v5369 = vadd.f32 %v5248, %v5321
      %v5370 = vadd.f32 %v5249, %v5362
      %v5371 = vadd.f32 %v5250, %v5323
      %v5372 = vadd.f32 %v5251, %v5325
      %v5373 = vadd.f32 %v5252, %v5365
      %s5374 = scalar_lea.vmem %s3, 64
      %v5375 = vld [vmem:[%s5374] sm:$0xf]
      %v5376 = vld [vmem:[%s5374 + $0x4] sm:$0x3]
      %v5379 = vunpack.c.l.b16 %v5375
      %v5380 = vunpack.c.l.b16 %v5376
      %v5381 = vpack.c.b16 %v5380, %v5379
      %5382 = vrot.lane.b32.xlu0 %v5015, 109
      %v5383 = vpop.permute.xlu0 %5382
      %5384 = vrot.lane.b32.xlu0 %v5016, 109
      %v5385 = vpop.permute.xlu0 %5384
      %5386 = vrot.lane.b32.xlu0 %v5017, 109
      %v5387 = vpop.permute.xlu0 %5386
      %5388 = vrot.lane.b32.xlu0 %v5018, 109
      %v5389 = vpop.permute.xlu0 %5388
      %v5390 = vsel %vm1179, %v5383, %v5385
      %v5391 = vsel %vm1179, %v5385, %v5387
      %v5392 = vsel %vm1179, %v5387, %v5389
      %v5394 = vsel %vm299, %v5381, 0
      %v5397 = vsel %vm303, %v5390, 0
      %v5400 = vsel %vm303, %v5391, 0
      %v5403 = vsel %vm303, %v5392, 0
      %5405 = vmatprep.subr.bf16.mxu0 %v5400
      %5406 = vmatpush1.bf16.msra.mxu0 %v5397
      %5407 = vmatprep.subr.bf16.mxu0 0
      %5408 = vmatpush1.bf16.msra.mxu0 0
      %5409 = vmatprep.subr.bf16.mxu0 0
      %5410 = vmatpush1.bf16.msra.mxu0 0
      %5411 = vmatprep.subr.bf16.mxu0 0
      %5412 = vmatpush1.bf16.msra.mxu0 0
      %5413 = vmatprep.subr.bf16.mxu0 0
      %5414 = vmatpush1.bf16.msra.mxu0 0
      %5415 = vmatprep.subr.bf16.mxu0 0
      %5416 = vmatpush1.bf16.msra.mxu0 0
      %5417 = vmatprep.subr.bf16.mxu0 0
      %5418 = vmatpush1.bf16.msra.mxu0 0
      %5419 = vmatprep.subr.bf16.mxu0 0
      %5420 = vmatpush1.bf16.msra.mxu0 0
      %5421 = vmatprep.subr.bf16.mxu0 0
      %5422 = vmatpush1.bf16.msra.mxu0 0
      %5423 = vmatprep.subr.bf16.mxu0 0
      %5424 = vmatpush1.bf16.msra.mxu0 0
      %5425 = vmatprep.subr.bf16.mxu0 0
      %5426 = vmatpush1.bf16.msra.mxu0 0
      %5427 = vmatprep.subr.bf16.mxu0 0
      %5428 = vmatpush1.bf16.msra.mxu0 0
      %5429 = vmatprep.subr.bf16.mxu0 0
      %5430 = vmatpush1.bf16.msra.mxu0 0
      %5431 = vmatprep.subr.bf16.mxu0 0
      %5432 = vmatpush1.bf16.msra.mxu0 0
      %5433 = vmatprep.subr.bf16.mxu0 0
      %5434 = vmatpush1.bf16.msra.mxu0 0
      %5435 = vmatprep.subr.bf16.mxu0 0
      %5436 = vmatpush1.bf16.msra.mxu0 0
      %5437 = vmatprep.mubr.bf16.mxu0 0
      %5438 = vmatmul.mubr.bf16.gmra.mrb[0].mxu0 %v5394
      %v5439 = vpop.f32.mrb[0].mxu0
      %v5440 = vadd.f32 0.0, %v5439
      %v5441 = vpop.f32.mrb[0].mxu0
      %v5442 = vadd.f32 0.0, %v5441
      %v5443 = vpop.f32.mrb[0].mxu0
      %v5444 = vadd.f32 0.0, %v5443
      %v5445 = vpop.f32.mrb[0].mxu0
      %v5446 = vadd.f32 0.0, %v5445
      %5447 = vdwg.mxu0
      %5448 = vmatprep.subr.bf16.mxu0 0
      %5449 = vmatpush1.bf16.msra.mxu0 %v5403
      %5450 = vmatprep.subr.bf16.mxu0 0
      %5451 = vmatpush1.bf16.msra.mxu0 0
      %5452 = vmatprep.subr.bf16.mxu0 0
      %5453 = vmatpush1.bf16.msra.mxu0 0
      %5454 = vmatprep.subr.bf16.mxu0 0
      %5455 = vmatpush1.bf16.msra.mxu0 0
      %5456 = vmatprep.subr.bf16.mxu0 0
      %5457 = vmatpush1.bf16.msra.mxu0 0
      %5458 = vmatprep.subr.bf16.mxu0 0
      %5459 = vmatpush1.bf16.msra.mxu0 0
      %5460 = vmatprep.subr.bf16.mxu0 0
      %5461 = vmatpush1.bf16.msra.mxu0 0
      %5462 = vmatprep.subr.bf16.mxu0 0
      %5463 = vmatpush1.bf16.msra.mxu0 0
      %5464 = vmatprep.subr.bf16.mxu0 0
      %5465 = vmatpush1.bf16.msra.mxu0 0
      %5466 = vmatprep.subr.bf16.mxu0 0
      %5467 = vmatpush1.bf16.msra.mxu0 0
      %5468 = vmatprep.subr.bf16.mxu0 0
      %5469 = vmatpush1.bf16.msra.mxu0 0
      %5470 = vmatprep.subr.bf16.mxu0 0
      %5471 = vmatpush1.bf16.msra.mxu0 0
      %5472 = vmatprep.subr.bf16.mxu0 0
      %5473 = vmatpush1.bf16.msra.mxu0 0
      %5474 = vmatprep.subr.bf16.mxu0 0
      %5475 = vmatpush1.bf16.msra.mxu0 0
      %5476 = vmatprep.subr.bf16.mxu0 0
      %5477 = vmatpush1.bf16.msra.mxu0 0
      %5478 = vmatprep.subr.bf16.mxu0 0
      %5479 = vmatpush1.bf16.msra.mxu0 0
      %5480 = vmatprep.mubr.bf16.mxu0 0
      %5481 = vmatmul.mubr.bf16.gmra.mrb[0].mxu0 %v5394
      %v5482 = vpop.f32.mrb[0].mxu0
      %v5483 = vadd.f32 0.0, %v5482
      %v5484 = vpop.f32.mrb[0].mxu0
      %v5485 = vpop.f32.mrb[0].mxu0
      %v5486 = vadd.f32 0.0, %v5485
      %v5487 = vpop.f32.mrb[0].mxu0
      %5488 = vdwg.mxu0
      %v5489 = vadd.f32 %v5368, %v5440
      %v5490 = vadd.f32 %v5369, %v5442
      %v5491 = vadd.f32 %v5370, %v5483
      %v5492 = vadd.f32 %v5371, %v5444
      %v5493 = vadd.f32 %v5372, %v5446
      %v5494 = vadd.f32 %v5373, %v5486
      %v5495 = vld [vmem:[%s4] sm:$0xff]
      %v5496 = vld [vmem:[%s4 + $0x8] sm:$0xf]
      %5498 = vset.pattern.permute.xlu0 0
      %5499 = vperm.xlu0 %5498, %v5495
      %v5500 = vpop.permute.xlu0 %5499
      %5503 = vset.pattern.permute.xlu0 0
      %5504 = vperm.xlu0 %5503, %v5496
      %v5505 = vpop.permute.xlu0 %5504
      %v5507 = vadd.f32 %v5489, %v5500
      %v5508 = vadd.f32 %v5490, %v5500
      %v5509 = vadd.f32 %v5491, %v5500
      %v5510 = vadd.f32 %v5492, %v5505
      %v5511 = vadd.f32 %v5493, %v5505
      %v5512 = vadd.f32 %v5494, %v5505
      %5513 = vst [vmem:[%s251] sm:$0xff] %v5507
      %5514 = vst [vmem:[%s251 + $0x8] sm:$0xff] %v5508
      %5515 = vst [vmem:[%s251 + $0x10] sm:$0xff] %v5509
      %5516 = vst [vmem:[%s251 + $0x18] sm:$0xf] %v5510
      %5517 = vst [vmem:[%s251 + $0x20] sm:$0xf] %v5511
      %5518 = vst [vmem:[%s251 + $0x28] sm:$0xf] %v5512
      %p5519 = scmp.lt.s32.totalorder %s17, 1
      %s5520 = scalar_select %p5519, %s17, 1
      %s5521 = smul.addr %s5520, 6
      %s5522 = smul.addr %s5521, 8
      %s5523 = scalar_lea.vmem %s6, %s5522
      // Predicated region
      $region45: #{classification_head.1} parent=43 // pred_check
        %p5524 = pneg %p166
      $region46: #{classification_head.1} parent=43 // pred_check_branch
        %5526 = sbr.rel (%p5524) target = $region48
      $region47: #{classification_head.1} parent=43 // pred_region
        _
      $region48: #{classification_head.1} parent=43 // pred_fallthru
        _
    $region44: #{classification_head.1} parent=5 // pred_fallthru
      _
    %p5527 = scmp.le.s32.totalorder 2, %s12
    // Predicated region
    $region49: #{classification_head.1} parent=5 // pred_check
      %p5528 = pneg %p5527
    $region50: #{classification_head.1} parent=5 // pred_check_branch
      %5530 = sbr.rel (%p5528) target = $region52
    $region51: #{classification_head.1} parent=5 // pred_region
      %s5531 = ssub.s32 %s12, 2
      // Predicated region
      $region53: #{classification_head.1} parent=51 // pred_check
        %p5532 = pneg %p172
      $region54: #{classification_head.1} parent=51 // pred_check_branch
        %5534 = sbr.rel (%p5532) target = $region56
      $region55: #{classification_head.1} parent=51 // pred_region
        %p5535 = scmp.lt.s32.totalorder %s18, 1
        %s5536 = scalar_select %p5535, %s18, 1
        %s5537 = smul.addr %s5536, 6
        %s5538 = smul.addr %s5537, 8
        %s5539 = scalar_lea.vmem %s6, %s5538
      $region56: #{classification_head.1} parent=51 // pred_fallthru
        _
    $region52: #{classification_head.1} parent=5 // pred_fallthru
      _
  $region6: #{classification_head.1} parent=0 // loop_footer
    %s16 = sadd.s32 1, %s12
  $region7: #{classification_head.1} parent=0 // loop_footer_branch
    %11 = sbr.rel target = $region3
  $region8: #{classification_head.1} parent=0 // loop_exit
    _

</llo_original>
